<compile_context>
chip_gen: v5e
topology: v5e:2x2
jax: 0.10.0
libtpu: 0.0.40
codegen_flags: <defaults>
</compile_context>

<pallas_src>
import jax
import jax.numpy as jnp
from jax import lax
from jax.experimental import pallas as pl
from jax.experimental.pallas import tpu as pltpu

D_MODEL = 150
NHEAD = 10
HEAD_DIM = D_MODEL // NHEAD          # 15
DIM_FF = 1000
DIM_FF_PAD = 1024                    # lane-dense FFN width (zero padded)
NUM_LAYERS = 6
LN_EPS = 1e-5                        # PyTorch LayerNorm default
INV_SQRT2 = 0.7071067811865476
NEG_INF = -1e30                      # additive mask for cross-batch attention


def _erf(x):
    # erf from Pallas-supported elementwise ops only (|err| < 1.2e-7 ~ f32).
    a = jnp.abs(x)
    t = 1.0 / (1.0 + 0.5 * a)
    poly = -1.26551223 + t * (1.00002368 + t * (0.37409196 + t * (0.09678418 +
           t * (-0.18628806 + t * (0.27886807 + t * (-1.13520398 +
           t * (1.48851587 + t * (-0.82215223 + t * 0.17087277))))))))
    erfc_a = t * jnp.exp(-a * a + poly)
    erf_a = 1.0 - erfc_a
    return jnp.where(x >= 0.0, erf_a, -erf_a)


def _gelu(x):
    # exact (erf-based) GELU, matching torch activation='gelu'.
    return 0.5 * x * (1.0 + _erf(x * INV_SQRT2))


def _layer_norm(x, gamma, beta):
    mu = jnp.mean(x, axis=-1, keepdims=True)
    xc = x - mu
    var = jnp.mean(xc * xc, axis=-1, keepdims=True)
    return xc * lax.rsqrt(var + LN_EPS) * gamma + beta


def encoder_kernel(x_ref, hmask_ref, bbias_ref,
                   wq_ref, wk_ref, wv_ref, wo_ref, w1_ref, w2_ref, b1_ref,
                   smalls_ref, out_ref):
    layer = pl.program_id(0)

    # Seed the resident output (layer carry) with the input at the first layer.
    @pl.when(layer == 0)
    def _():
        out_ref[...] = x_ref[...]

    x = out_ref[...]                                            # (BS, D)

    # ---- packed small per-layer params: one DMA instead of nine ----
    sm = smalls_ref[0]                                          # (9, D)
    bq, bk, bv, bo = sm[0:1], sm[1:2], sm[2:3], sm[3:4]
    b2 = sm[4:5]
    g1, be1, g2, be2 = sm[5:6], sm[6:7], sm[7:8], sm[8:9]
    b1 = b1_ref[0]                                              # (1, Fp)

    # ---- QKV projections: full-D matmuls on the (B*S, D) slab ----
    q = jnp.dot(x, wq_ref[0], preferred_element_type=jnp.float32) + bq
    k = jnp.dot(x, wk_ref[0], preferred_element_type=jnp.float32) + bk
    v = jnp.dot(x, wv_ref[0], preferred_element_type=jnp.float32) + bv

    # ---- batched multi-head attention (no per-head loop, no slicing) ----
    # hm[h, d] = 1 iff column d belongs to head h; masking q/k/v per head and
    # contracting over the full D gives exactly the per-head dot products.
    hm = hmask_ref[...][:, None, :]                             # (H, 1, D)
    scale = 1.0 / (HEAD_DIM ** 0.5)
    qh = q[None, :, :] * hm * scale                             # (H, BS, D)
    kh = k[None, :, :] * hm                                     # (H, BS, D)
    vh = v[None, :, :] * hm                                     # (H, BS, D)

    s = jnp.einsum('hqd,hkd->hqk', qh, kh,
                   preferred_element_type=jnp.float32)          # (H, BS, BS)
    s = s + bbias_ref[...][None, :, :]       # block-diag: no cross-batch attn
    s = s - jnp.max(s, axis=-1, keepdims=True)
    p = jnp.exp(s)
    p = p * pl.reciprocal(jnp.sum(p, axis=-1, keepdims=True), approx=True)

    ctx = jnp.einsum('hqk,hkd->hqd', p, vh,
                     preferred_element_type=jnp.float32)        # (H, BS, D)
    ctx = jnp.sum(ctx, axis=0)               # recombine heads in vregs (BS, D)

    # ---- single out-projection over all heads ----
    attn = jnp.dot(ctx, wo_ref[0], preferred_element_type=jnp.float32) + bo

    # ---- residual + norm1 (post-norm) ----
    y = _layer_norm(x + attn, g1, be1)

    # ---- feed-forward: linear1 -> gelu -> linear2 (F padded to 1024) ----
    h1 = _gelu(jnp.dot(y, w1_ref[0], preferred_element_type=jnp.float32) + b1)
    ff = jnp.dot(h1, w2_ref[0], preferred_element_type=jnp.float32) + b2

    # ---- residual + norm2 ----
    out_ref[...] = _layer_norm(y + ff, g2, be2)


def transformer_encoder(x, params):
    B, S, D = x.shape
    assert D == D_MODEL
    BS = B * S
    x2 = x.reshape(BS, D)
    wq, wk, wv, wo, w1, w2, b1, smalls = params

    # Constant head-column selector: hm[h, d] = 1 iff d in [h*HD, (h+1)*HD).
    d_ids = jnp.arange(D, dtype=jnp.int32)[None, :]
    h_ids = jnp.arange(NHEAD, dtype=jnp.int32)[:, None]
    head_mask = ((d_ids // HEAD_DIM) == h_ids).astype(jnp.float32)   # (H, D)

    # Constant block-diagonal additive bias over the merged (B*S) row slab.
    r = jnp.arange(BS, dtype=jnp.int32)
    same_batch = (r[:, None] // S) == (r[None, :] // S)
    batch_bias = jnp.where(same_batch, 0.0, NEG_INF).astype(jnp.float32)

    def const_spec(a):          # fetched once; block index never changes
        return pl.BlockSpec(tuple(a.shape), lambda l, _n=a.ndim: (0,) * _n)

    def layer_spec(a):          # streamed (double-buffered) per layer
        return pl.BlockSpec((1,) + tuple(a.shape[1:]), lambda l: (l, 0, 0))

    in_specs = [const_spec(x2), const_spec(head_mask), const_spec(batch_bias),
                layer_spec(wq), layer_spec(wk), layer_spec(wv), layer_spec(wo),
                layer_spec(w1), layer_spec(w2), layer_spec(b1),
                layer_spec(smalls)]
    out_spec = pl.BlockSpec((BS, D), lambda l: (0, 0))

    out2 = pl.pallas_call(
        encoder_kernel,
        out_shape=jax.ShapeDtypeStruct((BS, D), jnp.float32),
        grid_spec=pltpu.PrefetchScalarGridSpec(
            num_scalar_prefetch=0,
            grid=(NUM_LAYERS,),
            in_specs=in_specs,
            out_specs=out_spec,
        ),
        compiler_params=pltpu.CompilerParams(
            dimension_semantics=("arbitrary",),
            vmem_limit_bytes=32 * 1024 * 1024,
        ),
    )(x2, head_mask, batch_bias, wq, wk, wv, wo, w1, w2, b1, smalls)
    return out2.reshape(B, S, D)


def init_params(key):
    """Deterministic synthetic params in PyTorch layout, repacked for the
    kernel (transpose for y = x @ W.T, FFN zero-padded 1000 -> 1024, small
    per-layer vectors packed into one (L, 9, D) array)."""
    L, D, F, Fp = NUM_LAYERS, D_MODEL, DIM_FF, DIM_FF_PAD
    ks = jax.random.split(key, 8)
    # PyTorch-layout parameters
    in_proj_w = jax.random.normal(ks[0], (L, 3 * D, D), jnp.float32) * 0.02
    in_proj_b = jax.random.normal(ks[1], (L, 3 * D), jnp.float32) * 0.02
    out_proj_w = jax.random.normal(ks[2], (L, D, D), jnp.float32) * 0.02
    out_proj_b = jax.random.normal(ks[3], (L, D), jnp.float32) * 0.02
    lin1_w = jax.random.normal(ks[4], (L, F, D), jnp.float32) * 0.02
    lin1_b = jax.random.normal(ks[5], (L, F), jnp.float32) * 0.02
    lin2_w = jax.random.normal(ks[6], (L, D, F), jnp.float32) * 0.02
    lin2_b = jax.random.normal(ks[7], (L, D), jnp.float32) * 0.02
    ln1_g = jnp.ones((L, D), jnp.float32)
    ln1_b = jnp.zeros((L, D), jnp.float32)
    ln2_g = jnp.ones((L, D), jnp.float32)
    ln2_b = jnp.zeros((L, D), jnp.float32)

    # Full-D Q/K/V/out weights (q = x @ Wq.T  ->  transpose for x @ W)
    wq = in_proj_w[:, 0 * D:1 * D].transpose(0, 2, 1)     # (L, D, D)
    wk = in_proj_w[:, 1 * D:2 * D].transpose(0, 2, 1)
    wv = in_proj_w[:, 2 * D:3 * D].transpose(0, 2, 1)
    wo = out_proj_w.transpose(0, 2, 1)                    # (L, D, D)

    # FFN, zero-padded to 1024 (gelu(0)=0, zero w2 rows => identical output)
    w1 = jnp.zeros((L, D, Fp), jnp.float32).at[:, :, :F].set(
        lin1_w.transpose(0, 2, 1))
    w2 = jnp.zeros((L, Fp, D), jnp.float32).at[:, :F, :].set(
        lin2_w.transpose(0, 2, 1))
    b1 = jnp.zeros((L, 1, Fp), jnp.float32).at[:, 0, :F].set(lin1_b)

    # Packed small per-layer params: [bq, bk, bv, bo, b2, g1, be1, g2, be2]
    smalls = jnp.stack([
        in_proj_b[:, 0 * D:1 * D],
        in_proj_b[:, 1 * D:2 * D],
        in_proj_b[:, 2 * D:3 * D],
        out_proj_b,
        lin2_b,
        ln1_g, ln1_b, ln2_g, ln2_b,
    ], axis=1)                                            # (L, 9, D)

    return (wq, wk, wv, wo, w1, w2, b1, smalls)


if __name__ == "__main__":
    key = jax.random.PRNGKey(0)
    kx, kp = jax.random.split(key)
    B, S = 2, 8
    # src_key_padding_mask is None in this synthetic run (module default path).
    x = jax.random.normal(kx, (B, S, D_MODEL), jnp.float32)
    params = init_params(kp)

    out = transformer_encoder(x, params)
    out = jax.block_until_ready(out)
    assert out.shape == (B, S, D_MODEL) and out.dtype == jnp.float32
    assert bool(jnp.all(jnp.isfinite(out)))
    print("KERNEL_OK")
</pallas_src>

<mosaic_0001>
module attributes {stable_mosaic.version = 11 : i64} {
  func.func @encoder_kernel(%arg0: i32, %arg1: memref<16x150xf32, #tpu.memory_space<vmem>>, %arg2: memref<10x150xf32, #tpu.memory_space<vmem>>, %arg3: memref<16x16xf32, #tpu.memory_space<vmem>>, %arg4: memref<1x150x150xf32, #tpu.memory_space<vmem>>, %arg5: memref<1x150x150xf32, #tpu.memory_space<vmem>>, %arg6: memref<1x150x150xf32, #tpu.memory_space<vmem>>, %arg7: memref<1x150x150xf32, #tpu.memory_space<vmem>>, %arg8: memref<1x150x1024xf32, #tpu.memory_space<vmem>>, %arg9: memref<1x1024x150xf32, #tpu.memory_space<vmem>>, %arg10: memref<1x1x1024xf32, #tpu.memory_space<vmem>>, %arg11: memref<1x9x150xf32, #tpu.memory_space<vmem>>, %arg12: memref<16x150xf32, #tpu.memory_space<vmem>>) attributes {dimension_semantics = [#tpu.dimension_semantics<arbitrary>], iteration_bounds = array<i64: 6>, scalar_prefetch = 0 : i64, scratch_operands = 0 : i64, tpu.core_type = #tpu.core_type<tc>, window_params = [{pipeline_mode = #tpu.pipeline_mode<synchronous>, transform_indices = @transform_0, window_bounds = array<i64: 16, 150>}, {pipeline_mode = #tpu.pipeline_mode<synchronous>, transform_indices = @transform_1, window_bounds = array<i64: 10, 150>}, {pipeline_mode = #tpu.pipeline_mode<synchronous>, transform_indices = @transform_2, window_bounds = array<i64: 16, 16>}, {transform_indices = @transform_3, window_bounds = array<i64: 1, 150, 150>}, {transform_indices = @transform_4, window_bounds = array<i64: 1, 150, 150>}, {transform_indices = @transform_5, window_bounds = array<i64: 1, 150, 150>}, {transform_indices = @transform_6, window_bounds = array<i64: 1, 150, 150>}, {transform_indices = @transform_7, window_bounds = array<i64: 1, 150, 1024>}, {transform_indices = @transform_8, window_bounds = array<i64: 1, 1024, 150>}, {transform_indices = @transform_9, window_bounds = array<i64: 1, 1, 1024>}, {transform_indices = @transform_10, window_bounds = array<i64: 1, 9, 150>}, {pipeline_mode = #tpu.pipeline_mode<synchronous>, transform_indices = @transform_11, window_bounds = array<i64: 16, 150>}]} {
    %c0_i32 = arith.constant 0 : i32
    %0 = arith.cmpi eq, %arg0, %c0_i32 : i32
    %1 = arith.extui %0 : i1 to i32
    %c0_i32_0 = arith.constant 0 : i32
    %2 = arith.cmpi ne, %1, %c0_i32_0 : i32
    scf.if %2 {
      %c0_73 = arith.constant 0 : index
      %c0_74 = arith.constant 0 : index
      %178 = vector.load %arg1[%c0_73, %c0_74] : memref<16x150xf32, #tpu.memory_space<vmem>>, vector<16x150xf32>
      %c0_75 = arith.constant 0 : index
      %c0_76 = arith.constant 0 : index
      %179 = vector.load %arg12[%c0_75, %c0_76] : memref<16x150xf32, #tpu.memory_space<vmem>>, vector<16x150xf32>
      tpu.vector_store %arg12[%c0_75, %c0_76], %178 {strides = array<i32>} : memref<16x150xf32, #tpu.memory_space<vmem>>, vector<16x150xf32>,
    } else {
    }
    %c0 = arith.constant 0 : index
    %c0_1 = arith.constant 0 : index
    %3 = vector.load %arg12[%c0, %c0_1] : memref<16x150xf32, #tpu.memory_space<vmem>>, vector<16x150xf32>
    %c0_2 = arith.constant 0 : index
    %c0_3 = arith.constant 0 : index
    %c0_4 = arith.constant 0 : index
    %4 = vector.load %arg11[%c0_2, %c0_3, %c0_4] : memref<1x9x150xf32, #tpu.memory_space<vmem>>, vector<1x9x150xf32>
    %5 = vector.shape_cast %4 : vector<1x9x150xf32> to vector<9x150xf32>
    %6 = vector.extract_strided_slice %5 {offsets = [0, 0], sizes = [1, 150], strides = [1, 1]} : vector<9x150xf32> to vector<1x150xf32>
    %7 = vector.extract_strided_slice %5 {offsets = [1, 0], sizes = [1, 150], strides = [1, 1]} : vector<9x150xf32> to vector<1x150xf32>
    %8 = vector.extract_strided_slice %5 {offsets = [2, 0], sizes = [1, 150], strides = [1, 1]} : vector<9x150xf32> to vector<1x150xf32>
    %9 = vector.extract_strided_slice %5 {offsets = [3, 0], sizes = [1, 150], strides = [1, 1]} : vector<9x150xf32> to vector<1x150xf32>
    %10 = vector.extract_strided_slice %5 {offsets = [4, 0], sizes = [1, 150], strides = [1, 1]} : vector<9x150xf32> to vector<1x150xf32>
    %11 = vector.extract_strided_slice %5 {offsets = [5, 0], sizes = [1, 150], strides = [1, 1]} : vector<9x150xf32> to vector<1x150xf32>
    %12 = vector.extract_strided_slice %5 {offsets = [6, 0], sizes = [1, 150], strides = [1, 1]} : vector<9x150xf32> to vector<1x150xf32>
    %13 = vector.extract_strided_slice %5 {offsets = [7, 0], sizes = [1, 150], strides = [1, 1]} : vector<9x150xf32> to vector<1x150xf32>
    %14 = vector.extract_strided_slice %5 {offsets = [8, 0], sizes = [1, 150], strides = [1, 1]} : vector<9x150xf32> to vector<1x150xf32>
    %c0_5 = arith.constant 0 : index
    %c0_6 = arith.constant 0 : index
    %c0_7 = arith.constant 0 : index
    %15 = vector.load %arg10[%c0_5, %c0_6, %c0_7] : memref<1x1x1024xf32, #tpu.memory_space<vmem>>, vector<1x1x1024xf32>
    %16 = vector.shape_cast %15 : vector<1x1x1024xf32> to vector<1x1024xf32>
    %c0_8 = arith.constant 0 : index
    %c0_9 = arith.constant 0 : index
    %c0_10 = arith.constant 0 : index
    %17 = vector.load %arg4[%c0_8, %c0_9, %c0_10] : memref<1x150x150xf32, #tpu.memory_space<vmem>>, vector<1x150x150xf32>
    %18 = vector.shape_cast %17 : vector<1x150x150xf32> to vector<150x150xf32>
    %cst = arith.constant dense<0.000000e+00> : vector<16x150xf32>
    %19 = tpu.matmul %3, %18, %cst {dimension_numbers = #tpu.dot_dimension_numbers<[1], [0], [0], [1], [0, 0, 1, 1], [], []>} : vector<16x150xf32>, vector<150x150xf32>, vector<16x150xf32> -> vector<16x150xf32>
    %20 = vector.broadcast %6 : vector<1x150xf32> to vector<16x150xf32>
    %21 = arith.addf %19, %20 : vector<16x150xf32>
    %c0_11 = arith.constant 0 : index
    %c0_12 = arith.constant 0 : index
    %c0_13 = arith.constant 0 : index
    %22 = vector.load %arg5[%c0_11, %c0_12, %c0_13] : memref<1x150x150xf32, #tpu.memory_space<vmem>>, vector<1x150x150xf32>
    %23 = vector.shape_cast %22 : vector<1x150x150xf32> to vector<150x150xf32>
    %cst_14 = arith.constant dense<0.000000e+00> : vector<16x150xf32>
    %24 = tpu.matmul %3, %23, %cst_14 {dimension_numbers = #tpu.dot_dimension_numbers<[1], [0], [0], [1], [0, 0, 1, 1], [], []>} : vector<16x150xf32>, vector<150x150xf32>, vector<16x150xf32> -> vector<16x150xf32>
    %25 = vector.broadcast %7 : vector<1x150xf32> to vector<16x150xf32>
    %26 = arith.addf %24, %25 : vector<16x150xf32>
    %c0_15 = arith.constant 0 : index
    %c0_16 = arith.constant 0 : index
    %c0_17 = arith.constant 0 : index
    %27 = vector.load %arg6[%c0_15, %c0_16, %c0_17] : memref<1x150x150xf32, #tpu.memory_space<vmem>>, vector<1x150x150xf32>
    %28 = vector.shape_cast %27 : vector<1x150x150xf32> to vector<150x150xf32>
    %cst_18 = arith.constant dense<0.000000e+00> : vector<16x150xf32>
    %29 = tpu.matmul %3, %28, %cst_18 {dimension_numbers = #tpu.dot_dimension_numbers<[1], [0], [0], [1], [0, 0, 1, 1], [], []>} : vector<16x150xf32>, vector<150x150xf32>, vector<16x150xf32> -> vector<16x150xf32>
    %30 = vector.broadcast %8 : vector<1x150xf32> to vector<16x150xf32>
    %31 = arith.addf %29, %30 : vector<16x150xf32>
    %c0_19 = arith.constant 0 : index
    %c0_20 = arith.constant 0 : index
    %32 = vector.load %arg2[%c0_19, %c0_20] : memref<10x150xf32, #tpu.memory_space<vmem>>, vector<10x150xf32>
    %33 = vector.shape_cast %32 : vector<10x150xf32> to vector<10x1x150xf32>
    %34 = vector.shape_cast %21 : vector<16x150xf32> to vector<1x16x150xf32>
    %35 = vector.broadcast %34 : vector<1x16x150xf32> to vector<10x16x150xf32>
    %36 = vector.broadcast %33 : vector<10x1x150xf32> to vector<10x16x150xf32>
    %37 = arith.mulf %35, %36 : vector<10x16x150xf32>
    %cst_21 = arith.constant 0.258198887 : f32
    %38 = vector.broadcast %cst_21 : f32 to vector<10x16x150xf32>
    %39 = arith.mulf %37, %38 : vector<10x16x150xf32>
    %40 = vector.shape_cast %26 : vector<16x150xf32> to vector<1x16x150xf32>
    %41 = vector.broadcast %40 : vector<1x16x150xf32> to vector<10x16x150xf32>
    %42 = vector.broadcast %33 : vector<10x1x150xf32> to vector<10x16x150xf32>
    %43 = arith.mulf %41, %42 : vector<10x16x150xf32>
    %44 = vector.shape_cast %31 : vector<16x150xf32> to vector<1x16x150xf32>
    %45 = vector.broadcast %44 : vector<1x16x150xf32> to vector<10x16x150xf32>
    %46 = vector.broadcast %33 : vector<10x1x150xf32> to vector<10x16x150xf32>
    %47 = arith.mulf %45, %46 : vector<10x16x150xf32>
    "tpu.trace_start"() <{level = 10 : i32, message = "hqd,hkd->hqk"}> : () -> ()
    %cst_22 = arith.constant dense<0.000000e+00> : vector<10x16x16xf32>
    %48 = tpu.matmul %39, %43, %cst_22 {dimension_numbers = #tpu.dot_dimension_numbers<[2], [2], [1], [1], [0, 0, 0, 1, 1, 1], [0], [0]>} : vector<10x16x150xf32>, vector<10x16x150xf32>, vector<10x16x16xf32> -> vector<10x16x16xf32>
    "tpu.trace_stop"() : () -> ()
    %c0_23 = arith.constant 0 : index
    %c0_24 = arith.constant 0 : index
    %49 = vector.load %arg3[%c0_23, %c0_24] : memref<16x16xf32, #tpu.memory_space<vmem>>, vector<16x16xf32>
    %50 = vector.shape_cast %49 : vector<16x16xf32> to vector<1x16x16xf32>
    %51 = vector.broadcast %50 : vector<1x16x16xf32> to vector<10x16x16xf32>
    %52 = arith.addf %48, %51 : vector<10x16x16xf32>
    %cst_25 = arith.constant dense<0xFF800000> : vector<10x16xf32>
    %53 = vector.multi_reduction <maximumf>, %52, %cst_25 [2] : vector<10x16x16xf32> to vector<10x16xf32>
    %54 = vector.shape_cast %53 : vector<10x16xf32> to vector<10x16x1xf32>
    %55 = vector.broadcast %54 : vector<10x16x1xf32> to vector<10x16x16xf32>
    %56 = arith.subf %52, %55 : vector<10x16x16xf32>
    %57 = math.exp %56 : vector<10x16x16xf32>
    %cst_26 = arith.constant dense<0.000000e+00> : vector<10x16xf32>
    %58 = vector.multi_reduction <add>, %57, %cst_26 [2] : vector<10x16x16xf32> to vector<10x16xf32>
    %59 = vector.shape_cast %58 : vector<10x16xf32> to vector<10x16x1xf32>
    %60 = tpu.reciprocal %59 {approx = true} : vector<10x16x1xf32> -> vector<10x16x1xf32>
    %61 = vector.broadcast %60 : vector<10x16x1xf32> to vector<10x16x16xf32>
    %62 = arith.mulf %57, %61 : vector<10x16x16xf32>
    "tpu.trace_start"() <{level = 10 : i32, message = "hqk,hkd->hqd"}> : () -> ()
    %cst_27 = arith.constant dense<0.000000e+00> : vector<10x16x150xf32>
    %63 = tpu.matmul %62, %47, %cst_27 {dimension_numbers = #tpu.dot_dimension_numbers<[2], [1], [1], [2], [0, 0, 0, 1, 1, 2], [0], [0]>} : vector<10x16x16xf32>, vector<10x16x150xf32>, vector<10x16x150xf32> -> vector<10x16x150xf32>
    "tpu.trace_stop"() : () -> ()
    %cst_28 = arith.constant dense<0.000000e+00> : vector<16x150xf32>
    %64 = vector.multi_reduction <add>, %63, %cst_28 [0] : vector<10x16x150xf32> to vector<16x150xf32>
    %c0_29 = arith.constant 0 : index
    %c0_30 = arith.constant 0 : index
    %c0_31 = arith.constant 0 : index
    %65 = vector.load %arg7[%c0_29, %c0_30, %c0_31] : memref<1x150x150xf32, #tpu.memory_space<vmem>>, vector<1x150x150xf32>
    %66 = vector.shape_cast %65 : vector<1x150x150xf32> to vector<150x150xf32>
    %cst_32 = arith.constant dense<0.000000e+00> : vector<16x150xf32>
    %67 = tpu.matmul %64, %66, %cst_32 {dimension_numbers = #tpu.dot_dimension_numbers<[1], [0], [0], [1], [0, 0, 1, 1], [], []>} : vector<16x150xf32>, vector<150x150xf32>, vector<16x150xf32> -> vector<16x150xf32>
    %68 = vector.broadcast %9 : vector<1x150xf32> to vector<16x150xf32>
    %69 = arith.addf %67, %68 : vector<16x150xf32>
    %70 = arith.addf %3, %69 : vector<16x150xf32>
    %cst_33 = arith.constant dense<0.000000e+00> : vector<16xf32>
    %71 = vector.multi_reduction <add>, %70, %cst_33 [1] : vector<16x150xf32> to vector<16xf32>
    %72 = vector.shape_cast %71 : vector<16xf32> to vector<16x1xf32>
    %cst_34 = arith.constant 1.500000e+02 : f32
    %73 = vector.broadcast %cst_34 : f32 to vector<16x1xf32>
    %74 = arith.divf %72, %73 : vector<16x1xf32>
    %75 = vector.broadcast %74 : vector<16x1xf32> to vector<16x150xf32>
    %76 = arith.subf %70, %75 : vector<16x150xf32>
    %77 = arith.mulf %76, %76 : vector<16x150xf32>
    %cst_35 = arith.constant dense<0.000000e+00> : vector<16xf32>
    %78 = vector.multi_reduction <add>, %77, %cst_35 [1] : vector<16x150xf32> to vector<16xf32>
    %79 = vector.shape_cast %78 : vector<16xf32> to vector<16x1xf32>
    %cst_36 = arith.constant 1.500000e+02 : f32
    %80 = vector.broadcast %cst_36 : f32 to vector<16x1xf32>
    %81 = arith.divf %79, %80 : vector<16x1xf32>
    %cst_37 = arith.constant 9.99999974E-6 : f32
    %82 = vector.broadcast %cst_37 : f32 to vector<16x1xf32>
    %83 = arith.addf %81, %82 : vector<16x1xf32>
    %84 = math.rsqrt %83 : vector<16x1xf32>
    %85 = vector.broadcast %84 : vector<16x1xf32> to vector<16x150xf32>
    %86 = arith.mulf %76, %85 : vector<16x150xf32>
    %87 = vector.broadcast %11 : vector<1x150xf32> to vector<16x150xf32>
    %88 = arith.mulf %86, %87 : vector<16x150xf32>
    %89 = vector.broadcast %12 : vector<1x150xf32> to vector<16x150xf32>
    %90 = arith.addf %88, %89 : vector<16x150xf32>
    %c0_38 = arith.constant 0 : index
    %c0_39 = arith.constant 0 : index
    %c0_40 = arith.constant 0 : index
    %91 = vector.load %arg8[%c0_38, %c0_39, %c0_40] : memref<1x150x1024xf32, #tpu.memory_space<vmem>>, vector<1x150x1024xf32>
    %92 = vector.shape_cast %91 : vector<1x150x1024xf32> to vector<150x1024xf32>
    %cst_41 = arith.constant dense<0.000000e+00> : vector<16x1024xf32>
    %93 = tpu.matmul %90, %92, %cst_41 {dimension_numbers = #tpu.dot_dimension_numbers<[1], [0], [0], [1], [0, 0, 1, 1], [], []>} : vector<16x150xf32>, vector<150x1024xf32>, vector<16x1024xf32> -> vector<16x1024xf32>
    %94 = vector.broadcast %16 : vector<1x1024xf32> to vector<16x1024xf32>
    %95 = arith.addf %93, %94 : vector<16x1024xf32>
    %cst_42 = arith.constant 5.000000e-01 : f32
    %96 = vector.broadcast %cst_42 : f32 to vector<16x1024xf32>
    %97 = arith.mulf %96, %95 : vector<16x1024xf32>
    %cst_43 = arith.constant 0.707106769 : f32
    %98 = vector.broadcast %cst_43 : f32 to vector<16x1024xf32>
    %99 = arith.mulf %95, %98 : vector<16x1024xf32>
    %100 = math.absf %99 : vector<16x1024xf32>
    %cst_44 = arith.constant 5.000000e-01 : f32
    %101 = vector.broadcast %cst_44 : f32 to vector<16x1024xf32>
    %102 = arith.mulf %101, %100 : vector<16x1024xf32>
    %cst_45 = arith.constant 1.000000e+00 : f32
    %103 = vector.broadcast %cst_45 : f32 to vector<16x1024xf32>
    %104 = arith.addf %103, %102 : vector<16x1024xf32>
    %cst_46 = arith.constant 1.000000e+00 : f32
    %105 = vector.broadcast %cst_46 : f32 to vector<16x1024xf32>
    %106 = arith.divf %105, %104 : vector<16x1024xf32>
    %cst_47 = arith.constant 0.170872763 : f32
    %107 = vector.broadcast %cst_47 : f32 to vector<16x1024xf32>
    %108 = arith.mulf %106, %107 : vector<16x1024xf32>
    %cst_48 = arith.constant -0.822152256 : f32
    %109 = vector.broadcast %cst_48 : f32 to vector<16x1024xf32>
    %110 = arith.addf %109, %108 : vector<16x1024xf32>
    %111 = arith.mulf %106, %110 : vector<16x1024xf32>
    %cst_49 = arith.constant 1.48851585 : f32
    %112 = vector.broadcast %cst_49 : f32 to vector<16x1024xf32>
    %113 = arith.addf %112, %111 : vector<16x1024xf32>
    %114 = arith.mulf %106, %113 : vector<16x1024xf32>
    %cst_50 = arith.constant -1.13520396 : f32
    %115 = vector.broadcast %cst_50 : f32 to vector<16x1024xf32>
    %116 = arith.addf %115, %114 : vector<16x1024xf32>
    %117 = arith.mulf %106, %116 : vector<16x1024xf32>
    %cst_51 = arith.constant 0.278868079 : f32
    %118 = vector.broadcast %cst_51 : f32 to vector<16x1024xf32>
    %119 = arith.addf %118, %117 : vector<16x1024xf32>
    %120 = arith.mulf %106, %119 : vector<16x1024xf32>
    %cst_52 = arith.constant -0.186288059 : f32
    %121 = vector.broadcast %cst_52 : f32 to vector<16x1024xf32>
    %122 = arith.addf %121, %120 : vector<16x1024xf32>
    %123 = arith.mulf %106, %122 : vector<16x1024xf32>
    %cst_53 = arith.constant 0.0967841818 : f32
    %124 = vector.broadcast %cst_53 : f32 to vector<16x1024xf32>
    %125 = arith.addf %124, %123 : vector<16x1024xf32>
    %126 = arith.mulf %106, %125 : vector<16x1024xf32>
    %cst_54 = arith.constant 0.374091953 : f32
    %127 = vector.broadcast %cst_54 : f32 to vector<16x1024xf32>
    %128 = arith.addf %127, %126 : vector<16x1024xf32>
    %129 = arith.mulf %106, %128 : vector<16x1024xf32>
    %cst_55 = arith.constant 1.00002372 : f32
    %130 = vector.broadcast %cst_55 : f32 to vector<16x1024xf32>
    %131 = arith.addf %130, %129 : vector<16x1024xf32>
    %132 = arith.mulf %106, %131 : vector<16x1024xf32>
    %cst_56 = arith.constant -1.26551223 : f32
    %133 = vector.broadcast %cst_56 : f32 to vector<16x1024xf32>
    %134 = arith.addf %133, %132 : vector<16x1024xf32>
    %cst_57 = arith.constant 0.000000e+00 : f32
    %135 = vector.broadcast %cst_57 : f32 to vector<16x1024xf32>
    %136 = arith.subf %135, %100 : vector<16x1024xf32>
    %137 = arith.mulf %136, %100 : vector<16x1024xf32>
    %138 = arith.addf %137, %134 : vector<16x1024xf32>
    %139 = math.exp %138 : vector<16x1024xf32>
    %140 = arith.mulf %106, %139 : vector<16x1024xf32>
    %cst_58 = arith.constant 1.000000e+00 : f32
    %141 = vector.broadcast %cst_58 : f32 to vector<16x1024xf32>
    %142 = arith.subf %141, %140 : vector<16x1024xf32>
    %cst_59 = arith.constant 0.000000e+00 : f32
    %143 = vector.broadcast %cst_59 : f32 to vector<16x1024xf32>
    %144 = arith.cmpf oge, %99, %143 : vector<16x1024xf32>
    %cst_60 = arith.constant 0.000000e+00 : f32
    %145 = vector.broadcast %cst_60 : f32 to vector<16x1024xf32>
    %146 = arith.subf %145, %142 : vector<16x1024xf32>
    %147 = arith.select %144, %142, %146 : vector<16x1024xi1>, vector<16x1024xf32>
    %cst_61 = arith.constant 1.000000e+00 : f32
    %148 = vector.broadcast %cst_61 : f32 to vector<16x1024xf32>
    %149 = arith.addf %148, %147 : vector<16x1024xf32>
    %150 = arith.mulf %97, %149 : vector<16x1024xf32>
    %c0_62 = arith.constant 0 : index
    %c0_63 = arith.constant 0 : index
    %c0_64 = arith.constant 0 : index
    %151 = vector.load %arg9[%c0_62, %c0_63, %c0_64] : memref<1x1024x150xf32, #tpu.memory_space<vmem>>, vector<1x1024x150xf32>
    %152 = vector.shape_cast %151 : vector<1x1024x150xf32> to vector<1024x150xf32>
    %cst_65 = arith.constant dense<0.000000e+00> : vector<16x150xf32>
    %153 = tpu.matmul %150, %152, %cst_65 {dimension_numbers = #tpu.dot_dimension_numbers<[1], [0], [0], [1], [0, 0, 1, 1], [], []>} : vector<16x1024xf32>, vector<1024x150xf32>, vector<16x150xf32> -> vector<16x150xf32>
    %154 = vector.broadcast %10 : vector<1x150xf32> to vector<16x150xf32>
    %155 = arith.addf %153, %154 : vector<16x150xf32>
    %156 = arith.addf %90, %155 : vector<16x150xf32>
    %cst_66 = arith.constant dense<0.000000e+00> : vector<16xf32>
    %157 = vector.multi_reduction <add>, %156, %cst_66 [1] : vector<16x150xf32> to vector<16xf32>
    %158 = vector.shape_cast %157 : vector<16xf32> to vector<16x1xf32>
    %cst_67 = arith.constant 1.500000e+02 : f32
    %159 = vector.broadcast %cst_67 : f32 to vector<16x1xf32>
    %160 = arith.divf %158, %159 : vector<16x1xf32>
    %161 = vector.broadcast %160 : vector<16x1xf32> to vector<16x150xf32>
    %162 = arith.subf %156, %161 : vector<16x150xf32>
    %163 = arith.mulf %162, %162 : vector<16x150xf32>
    %cst_68 = arith.constant dense<0.000000e+00> : vector<16xf32>
    %164 = vector.multi_reduction <add>, %163, %cst_68 [1] : vector<16x150xf32> to vector<16xf32>
    %165 = vector.shape_cast %164 : vector<16xf32> to vector<16x1xf32>
    %cst_69 = arith.constant 1.500000e+02 : f32
    %166 = vector.broadcast %cst_69 : f32 to vector<16x1xf32>
    %167 = arith.divf %165, %166 : vector<16x1xf32>
    %cst_70 = arith.constant 9.99999974E-6 : f32
    %168 = vector.broadcast %cst_70 : f32 to vector<16x1xf32>
    %169 = arith.addf %167, %168 : vector<16x1xf32>
    %170 = math.rsqrt %169 : vector<16x1xf32>
    %171 = vector.broadcast %170 : vector<16x1xf32> to vector<16x150xf32>
    %172 = arith.mulf %162, %171 : vector<16x150xf32>
    %173 = vector.broadcast %13 : vector<1x150xf32> to vector<16x150xf32>
    %174 = arith.mulf %172, %173 : vector<16x150xf32>
    %175 = vector.broadcast %14 : vector<1x150xf32> to vector<16x150xf32>
    %176 = arith.addf %174, %175 : vector<16x150xf32>
    %c0_71 = arith.constant 0 : index
    %c0_72 = arith.constant 0 : index
    %177 = vector.load %arg12[%c0_71, %c0_72] : memref<16x150xf32, #tpu.memory_space<vmem>>, vector<16x150xf32>
    tpu.vector_store %arg12[%c0_71, %c0_72], %176 {strides = array<i32>} : memref<16x150xf32, #tpu.memory_space<vmem>>, vector<16x150xf32>,
    return
  }
  func.func @transform_0(%arg0: i32) -> (i32, i32) {
    %c0_i32 = arith.constant 0 : i32
    %c0_i32_0 = arith.constant 0 : i32
    %c0_i32_1 = arith.constant 0 : i32
    return %c0_i32, %c0_i32_0 : i32, i32
  }
  func.func @transform_1(%arg0: i32) -> (i32, i32) {
    %c0_i32 = arith.constant 0 : i32
    %c0_i32_0 = arith.constant 0 : i32
    %c0_i32_1 = arith.constant 0 : i32
    return %c0_i32, %c0_i32_0 : i32, i32
  }
  func.func @transform_2(%arg0: i32) -> (i32, i32) {
    %c0_i32 = arith.constant 0 : i32
    %c0_i32_0 = arith.constant 0 : i32
    %c0_i32_1 = arith.constant 0 : i32
    return %c0_i32, %c0_i32_0 : i32, i32
  }
  func.func @transform_3(%arg0: i32) -> (i32, i32, i32) {
    %c0_i32 = arith.constant 0 : i32
    %c0_i32_0 = arith.constant 0 : i32
    %c0_i32_1 = arith.constant 0 : i32
    return %arg0, %c0_i32, %c0_i32_0 : i32, i32, i32
  }
  func.func @transform_4(%arg0: i32) -> (i32, i32, i32) {
    %c0_i32 = arith.constant 0 : i32
    %c0_i32_0 = arith.constant 0 : i32
    %c0_i32_1 = arith.constant 0 : i32
    return %arg0, %c0_i32, %c0_i32_0 : i32, i32, i32
  }
  func.func @transform_5(%arg0: i32) -> (i32, i32, i32) {
    %c0_i32 = arith.constant 0 : i32
    %c0_i32_0 = arith.constant 0 : i32
    %c0_i32_1 = arith.constant 0 : i32
    return %arg0, %c0_i32, %c0_i32_0 : i32, i32, i32
  }
  func.func @transform_6(%arg0: i32) -> (i32, i32, i32) {
    %c0_i32 = arith.constant 0 : i32
    %c0_i32_0 = arith.constant 0 : i32
    %c0_i32_1 = arith.constant 0 : i32
    return %arg0, %c0_i32, %c0_i32_0 : i32, i32, i32
  }
  func.func @transform_7(%arg0: i32) -> (i32, i32, i32) {
    %c0_i32 = arith.constant 0 : i32
    %c0_i32_0 = arith.constant 0 : i32
    %c0_i32_1 = arith.constant 0 : i32
    return %arg0, %c0_i32, %c0_i32_0 : i32, i32, i32
  }
  func.func @transform_8(%arg0: i32) -> (i32, i32, i32) {
    %c0_i32 = arith.constant 0 : i32
    %c0_i32_0 = arith.constant 0 : i32
    %c0_i32_1 = arith.constant 0 : i32
    return %arg0, %c0_i32, %c0_i32_0 : i32, i32, i32
  }
  func.func @transform_9(%arg0: i32) -> (i32, i32, i32) {
    %c0_i32 = arith.constant 0 : i32
    %c0_i32_0 = arith.constant 0 : i32
    %c0_i32_1 = arith.constant 0 : i32
    return %arg0, %c0_i32, %c0_i32_0 : i32, i32, i32
  }
  func.func @transform_10(%arg0: i32) -> (i32, i32, i32) {
    %c0_i32 = arith.constant 0 : i32
    %c0_i32_0 = arith.constant 0 : i32
    %c0_i32_1 = arith.constant 0 : i32
    return %arg0, %c0_i32, %c0_i32_0 : i32, i32, i32
  }
  func.func @transform_11(%arg0: i32) -> (i32, i32) {
    %c0_i32 = arith.constant 0 : i32
    %c0_i32_0 = arith.constant 0 : i32
    %c0_i32_1 = arith.constant 0 : i32
    return %c0_i32, %c0_i32_0 : i32, i32
  }
}

</mosaic_0001>

<llo_original>
// kernel: tpu_custom_call.1
$region0: #{tpu_custom_call.1}
  #allocation0 [shape = 'u32[]', space=smem, size = 0x4, offset = 0x4, fixed_abs, tag = 'smem constant byte address 0x4 - core index']
  #allocation1 [shape = 'u32[72,128]{1,0:T(1,128)}', space=vmem, size = 0x9000, scoped, tag = 'internal scratch']
  %s0 = inlined_call_operand.vmem [shape: f32[16,150], index: 0, kind: input, shape index: {}]
  %s1 = inlined_call_operand.vmem [shape: f32[10,150], index: 1, kind: input, shape index: {}]
  %s2 = inlined_call_operand.vmem [shape: f32[16,16], index: 2, kind: input, shape index: {}]
  %s3 = inlined_call_operand.vmem [shape: f32[6,150,150], index: 3, kind: input, shape index: {}]
  %s4 = inlined_call_operand.vmem [shape: f32[6,150,150], index: 4, kind: input, shape index: {}]
  %s5 = inlined_call_operand.vmem [shape: f32[6,150,150], index: 5, kind: input, shape index: {}]
  %s6 = inlined_call_operand.vmem [shape: f32[6,150,150], index: 6, kind: input, shape index: {}]
  %s7 = inlined_call_operand.vmem [shape: f32[6,150,1024], index: 7, kind: input, shape index: {}]
  %s8 = inlined_call_operand.vmem [shape: f32[6,1024,150], index: 8, kind: input, shape index: {}]
  %s9 = inlined_call_operand.vmem [shape: f32[6,1,1024], index: 9, kind: input, shape index: {}]
  %s10 = inlined_call_operand.vmem [shape: f32[6,9,150], index: 10, kind: input, shape index: {}]
  %s11 = inlined_call_operand.hbm [shape: f32[16,150], index: 11, kind: output, shape index: {}]
  %s12 = sld [smem:[#allocation0]]
  $region81: #{tpu_custom_call.1} parent=0
    _
  %s14 = ssub.s32 1, %s12
  %s15 = scalar_select 0, %s14, %s12
  $region1: #{tpu_custom_call.1} parent=0
    #allocation2 [shape = 'u8[16384]{0}', space=vmem, size = 0x4000, scoped, tag = 'output window, operand 0, single buffered']
    #allocation3 [shape = 's32[2]{0}', space=sflag, size = 0x8, scoped, tag = 'scoped memory for tpu_custom_call.1']
    %16 = vsyncpa [#allocation3], 0
    loop: start=0, step=1, limit=8
    $region2: #{tpu_custom_call.1} parent=1 // loop_pre_header
      _
    $region3: #{tpu_custom_call.1} parent=1 // loop_header
      %s18 = sphi 0, %s22
      %p19 = scmp.ge.s32.totalorder %s18, 8
      %s26 = sphi 0, %s26
      %s28 = sphi 0, %s26
      %s29 = sphi 0, %s28
      %s43 = sphi 0, %s29
      %s47 = sphi 0, %s47
      %s49 = sphi 0, %s47
      %s50 = sphi 0, %s49
      %s64 = sphi 0, %s50
      %s68 = sphi 0, %s68
      %s70 = sphi 0, %s68
      %s71 = sphi 0, %s70
      %s85 = sphi 0, %s71
      %s91 = sphi 0, %s93
      %s94 = sphi 0, %s91
      %s95 = sphi 0, %s94
      %s111 = sphi 0, %s95
      %s117 = sphi 0, %s119
      %s120 = sphi 0, %s117
      %s121 = sphi 0, %s120
      %s137 = sphi 0, %s121
      %s143 = sphi 0, %s145
      %s146 = sphi 0, %s143
      %s147 = sphi 0, %s146
      %s163 = sphi 0, %s147
      %s169 = sphi 0, %s171
      %s172 = sphi 0, %s169
      %s173 = sphi 0, %s172
      %s189 = sphi 0, %s173
      %s195 = sphi 0, %s197
      %s198 = sphi 0, %s195
      %s199 = sphi 0, %s198
      %s215 = sphi 0, %s199
      %s221 = sphi 0, %s223
      %s224 = sphi 0, %s221
      %s225 = sphi 0, %s224
      %s241 = sphi 0, %s225
      %s247 = sphi 0, %s249
      %s250 = sphi 0, %s247
      %s251 = sphi 0, %s250
      %s267 = sphi 0, %s251
      %s273 = sphi 0, %s275
      %s276 = sphi 0, %s273
      %s277 = sphi 0, %s276
      %s293 = sphi 0, %s277
      %s297 = sphi 0, %s297
      %s299 = sphi 0, %s297
      %s300 = sphi 0, %s299
      %s314 = sphi 0, %s300
    $region4: #{tpu_custom_call.1} parent=1 // loop_header_branch
      %21 = sbr.rel (%p19) target = $region8
    $region5: #{tpu_custom_call.1} parent=1 // loop_body
      %s23 = ssub.s32 %s18, 1
      %s24 = ssub.s32 %s18, 2
      %s25 = sadd.s32 %s18, 1
      %s27 = sadd.s32 %s26, 1
      %p30 = scmp.eq.s32.totalorder %s18, 5
      %p31 = scmp.ne.s32.totalorder %s26, %s28
      %p32 = scmp.eq.s32.totalorder %s18, 0
      %p33 = por %p31, %p32
      %p34 = scmp.ne.s32.totalorder %s26, %s28
      %p35 = scmp.eq.s32.totalorder %s23, 5
      %p36 = por %p34, %p35
      %p37 = scmp.ne.s32.totalorder %s28, %s29
      %p38 = scmp.eq.s32.totalorder %s23, 0
      %p39 = por %p37, %p38
      %p40 = scmp.ne.s32.totalorder %s28, %s29
      %p41 = scmp.eq.s32.totalorder %s24, 5
      %p42 = por %p40, %p41
      %p44 = scmp.ne.s32.totalorder %s29, %s43
      %p45 = scmp.eq.s32.totalorder %s24, 0
      %p46 = por %p44, %p45
      %s48 = sadd.s32 %s47, 1
      %p51 = scmp.eq.s32.totalorder %s18, 5
      %p52 = scmp.ne.s32.totalorder %s47, %s49
      %p53 = scmp.eq.s32.totalorder %s18, 0
      %p54 = por %p52, %p53
      %p55 = scmp.ne.s32.totalorder %s47, %s49
      %p56 = scmp.eq.s32.totalorder %s23, 5
      %p57 = por %p55, %p56
      %p58 = scmp.ne.s32.totalorder %s49, %s50
      %p59 = scmp.eq.s32.totalorder %s23, 0
      %p60 = por %p58, %p59
      %p61 = scmp.ne.s32.totalorder %s49, %s50
      %p62 = scmp.eq.s32.totalorder %s24, 5
      %p63 = por %p61, %p62
      %p65 = scmp.ne.s32.totalorder %s50, %s64
      %p66 = scmp.eq.s32.totalorder %s24, 0
      %p67 = por %p65, %p66
      %s69 = sadd.s32 %s68, 1
      %p72 = scmp.eq.s32.totalorder %s18, 5
      %p73 = scmp.ne.s32.totalorder %s68, %s70
      %p74 = scmp.eq.s32.totalorder %s18, 0
      %p75 = por %p73, %p74
      %p76 = scmp.ne.s32.totalorder %s68, %s70
      %p77 = scmp.eq.s32.totalorder %s23, 5
      %p78 = por %p76, %p77
      %p79 = scmp.ne.s32.totalorder %s70, %s71
      %p80 = scmp.eq.s32.totalorder %s23, 0
      %p81 = por %p79, %p80
      %p82 = scmp.ne.s32.totalorder %s70, %s71
      %p83 = scmp.eq.s32.totalorder %s24, 5
      %p84 = por %p82, %p83
      %p86 = scmp.ne.s32.totalorder %s71, %s85
      %p87 = scmp.eq.s32.totalorder %s24, 0
      %p88 = por %p86, %p87
      %s89 = ssub.s32 %s18, %s25
      %p90 = scmp.eq.s32.totalorder %s89, 0
      %s92 = sadd.s32 %s91, 1
      %s93 = scalar_select %p90, %s91, %s92
      %p96 = pneg %p90
      %p97 = scmp.eq.s32.totalorder %s18, 5
      %p98 = por %p96, %p97
      %p99 = scmp.ne.s32.totalorder %s91, %s94
      %p100 = scmp.eq.s32.totalorder %s18, 0
      %p101 = por %p99, %p100
      %p102 = scmp.ne.s32.totalorder %s91, %s94
      %p103 = scmp.eq.s32.totalorder %s23, 5
      %p104 = por %p102, %p103
      %p105 = scmp.ne.s32.totalorder %s94, %s95
      %p106 = scmp.eq.s32.totalorder %s23, 0
      %p107 = por %p105, %p106
      %p108 = scmp.ne.s32.totalorder %s94, %s95
      %p109 = scmp.eq.s32.totalorder %s24, 5
      %p110 = por %p108, %p109
      %p112 = scmp.ne.s32.totalorder %s95, %s111
      %p113 = scmp.eq.s32.totalorder %s24, 0
      %p114 = por %p112, %p113
      %s115 = ssub.s32 %s18, %s25
      %p116 = scmp.eq.s32.totalorder %s115, 0
      %s118 = sadd.s32 %s117, 1
      %s119 = scalar_select %p116, %s117, %s118
      %p122 = pneg %p116
      %p123 = scmp.eq.s32.totalorder %s18, 5
      %p124 = por %p122, %p123
      %p125 = scmp.ne.s32.totalorder %s117, %s120
      %p126 = scmp.eq.s32.totalorder %s18, 0
      %p127 = por %p125, %p126
      %p128 = scmp.ne.s32.totalorder %s117, %s120
      %p129 = scmp.eq.s32.totalorder %s23, 5
      %p130 = por %p128, %p129
      %p131 = scmp.ne.s32.totalorder %s120, %s121
      %p132 = scmp.eq.s32.totalorder %s23, 0
      %p133 = por %p131, %p132
      %p134 = scmp.ne.s32.totalorder %s120, %s121
      %p135 = scmp.eq.s32.totalorder %s24, 5
      %p136 = por %p134, %p135
      %p138 = scmp.ne.s32.totalorder %s121, %s137
      %p139 = scmp.eq.s32.totalorder %s24, 0
      %p140 = por %p138, %p139
      %s141 = ssub.s32 %s18, %s25
      %p142 = scmp.eq.s32.totalorder %s141, 0
      %s144 = sadd.s32 %s143, 1
      %s145 = scalar_select %p142, %s143, %s144
      %p148 = pneg %p142
      %p149 = scmp.eq.s32.totalorder %s18, 5
      %p150 = por %p148, %p149
      %p151 = scmp.ne.s32.totalorder %s143, %s146
      %p152 = scmp.eq.s32.totalorder %s18, 0
      %p153 = por %p151, %p152
      %p154 = scmp.ne.s32.totalorder %s143, %s146
      %p155 = scmp.eq.s32.totalorder %s23, 5
      %p156 = por %p154, %p155
      %p157 = scmp.ne.s32.totalorder %s146, %s147
      %p158 = scmp.eq.s32.totalorder %s23, 0
      %p159 = por %p157, %p158
      %p160 = scmp.ne.s32.totalorder %s146, %s147
      %p161 = scmp.eq.s32.totalorder %s24, 5
      %p162 = por %p160, %p161
      %p164 = scmp.ne.s32.totalorder %s147, %s163
      %p165 = scmp.eq.s32.totalorder %s24, 0
      %p166 = por %p164, %p165
      %s167 = ssub.s32 %s18, %s25
      %p168 = scmp.eq.s32.totalorder %s167, 0
      %s170 = sadd.s32 %s169, 1
      %s171 = scalar_select %p168, %s169, %s170
      %p174 = pneg %p168
      %p175 = scmp.eq.s32.totalorder %s18, 5
      %p176 = por %p174, %p175
      %p177 = scmp.ne.s32.totalorder %s169, %s172
      %p178 = scmp.eq.s32.totalorder %s18, 0
      %p179 = por %p177, %p178
      %p180 = scmp.ne.s32.totalorder %s169, %s172
      %p181 = scmp.eq.s32.totalorder %s23, 5
      %p182 = por %p180, %p181
      %p183 = scmp.ne.s32.totalorder %s172, %s173
      %p184 = scmp.eq.s32.totalorder %s23, 0
      %p185 = por %p183, %p184
      %p186 = scmp.ne.s32.totalorder %s172, %s173
      %p187 = scmp.eq.s32.totalorder %s24, 5
      %p188 = por %p186, %p187
      %p190 = scmp.ne.s32.totalorder %s173, %s189
      %p191 = scmp.eq.s32.totalorder %s24, 0
      %p192 = por %p190, %p191
      %s193 = ssub.s32 %s18, %s25
      %p194 = scmp.eq.s32.totalorder %s193, 0
      %s196 = sadd.s32 %s195, 1
      %s197 = scalar_select %p194, %s195, %s196
      %p200 = pneg %p194
      %p201 = scmp.eq.s32.totalorder %s18, 5
      %p202 = por %p200, %p201
      %p203 = scmp.ne.s32.totalorder %s195, %s198
      %p204 = scmp.eq.s32.totalorder %s18, 0
      %p205 = por %p203, %p204
      %p206 = scmp.ne.s32.totalorder %s195, %s198
      %p207 = scmp.eq.s32.totalorder %s23, 5
      %p208 = por %p206, %p207
      %p209 = scmp.ne.s32.totalorder %s198, %s199
      %p210 = scmp.eq.s32.totalorder %s23, 0
      %p211 = por %p209, %p210
      %p212 = scmp.ne.s32.totalorder %s198, %s199
      %p213 = scmp.eq.s32.totalorder %s24, 5
      %p214 = por %p212, %p213
      %p216 = scmp.ne.s32.totalorder %s199, %s215
      %p217 = scmp.eq.s32.totalorder %s24, 0
      %p218 = por %p216, %p217
      %s219 = ssub.s32 %s18, %s25
      %p220 = scmp.eq.s32.totalorder %s219, 0
      %s222 = sadd.s32 %s221, 1
      %s223 = scalar_select %p220, %s221, %s222
      %p226 = pneg %p220
      %p227 = scmp.eq.s32.totalorder %s18, 5
      %p228 = por %p226, %p227
      %p229 = scmp.ne.s32.totalorder %s221, %s224
      %p230 = scmp.eq.s32.totalorder %s18, 0
      %p231 = por %p229, %p230
      %p232 = scmp.ne.s32.totalorder %s221, %s224
      %p233 = scmp.eq.s32.totalorder %s23, 5
      %p234 = por %p232, %p233
      %p235 = scmp.ne.s32.totalorder %s224, %s225
      %p236 = scmp.eq.s32.totalorder %s23, 0
      %p237 = por %p235, %p236
      %p238 = scmp.ne.s32.totalorder %s224, %s225
      %p239 = scmp.eq.s32.totalorder %s24, 5
      %p240 = por %p238, %p239
      %p242 = scmp.ne.s32.totalorder %s225, %s241
      %p243 = scmp.eq.s32.totalorder %s24, 0
      %p244 = por %p242, %p243
      %s245 = ssub.s32 %s18, %s25
      %p246 = scmp.eq.s32.totalorder %s245, 0
      %s248 = sadd.s32 %s247, 1
      %s249 = scalar_select %p246, %s247, %s248
      %p252 = pneg %p246
      %p253 = scmp.eq.s32.totalorder %s18, 5
      %p254 = por %p252, %p253
      %p255 = scmp.ne.s32.totalorder %s247, %s250
      %p256 = scmp.eq.s32.totalorder %s18, 0
      %p257 = por %p255, %p256
      %p258 = scmp.ne.s32.totalorder %s247, %s250
      %p259 = scmp.eq.s32.totalorder %s23, 5
      %p260 = por %p258, %p259
      %p261 = scmp.ne.s32.totalorder %s250, %s251
      %p262 = scmp.eq.s32.totalorder %s23, 0
      %p263 = por %p261, %p262
      %p264 = scmp.ne.s32.totalorder %s250, %s251
      %p265 = scmp.eq.s32.totalorder %s24, 5
      %p266 = por %p264, %p265
      %p268 = scmp.ne.s32.totalorder %s251, %s267
      %p269 = scmp.eq.s32.totalorder %s24, 0
      %p270 = por %p268, %p269
      %s271 = ssub.s32 %s18, %s25
      %p272 = scmp.eq.s32.totalorder %s271, 0
      %s274 = sadd.s32 %s273, 1
      %s275 = scalar_select %p272, %s273, %s274
      %p278 = pneg %p272
      %p279 = scmp.eq.s32.totalorder %s18, 5
      %p280 = por %p278, %p279
      %p281 = scmp.ne.s32.totalorder %s273, %s276
      %p282 = scmp.eq.s32.totalorder %s18, 0
      %p283 = por %p281, %p282
      %p284 = scmp.ne.s32.totalorder %s273, %s276
      %p285 = scmp.eq.s32.totalorder %s23, 5
      %p286 = por %p284, %p285
      %p287 = scmp.ne.s32.totalorder %s276, %s277
      %p288 = scmp.eq.s32.totalorder %s23, 0
      %p289 = por %p287, %p288
      %p290 = scmp.ne.s32.totalorder %s276, %s277
      %p291 = scmp.eq.s32.totalorder %s24, 5
      %p292 = por %p290, %p291
      %p294 = scmp.ne.s32.totalorder %s277, %s293
      %p295 = scmp.eq.s32.totalorder %s24, 0
      %p296 = por %p294, %p295
      %s298 = sadd.s32 %s297, 1
      %p301 = scmp.eq.s32.totalorder %s18, 5
      %p302 = scmp.ne.s32.totalorder %s297, %s299
      %p303 = scmp.eq.s32.totalorder %s18, 0
      %p304 = por %p302, %p303
      %p305 = scmp.ne.s32.totalorder %s297, %s299
      %p306 = scmp.eq.s32.totalorder %s23, 5
      %p307 = por %p305, %p306
      %p308 = scmp.ne.s32.totalorder %s299, %s300
      %p309 = scmp.eq.s32.totalorder %s23, 0
      %p310 = por %p308, %p309
      %p311 = scmp.ne.s32.totalorder %s299, %s300
      %p312 = scmp.eq.s32.totalorder %s24, 5
      %p313 = por %p311, %p312
      %p315 = scmp.ne.s32.totalorder %s300, %s314
      %p316 = scmp.eq.s32.totalorder %s24, 0
      %p317 = por %p315, %p316
      %p318 = scmp.le.s32.totalorder 1, %s18
      %p319 = scmp.lt.s32.totalorder %s18, 7
      %p320 = pnand %p318, %p319
      %p321 = pneg %p320
      // Predicated region
      $region9: #{tpu_custom_call.1} parent=5 // pred_check
        _
      $region10: #{tpu_custom_call.1} parent=5 // pred_check_branch
        %323 = sbr.rel (%p320) target = $region12
      $region11: #{tpu_custom_call.1} parent=5 // pred_region
        %s324 = ssub.s32 %s18, 1
        // Predicated region
        $region13: #{tpu_custom_call.1} parent=11 // pred_check
          %p325 = pneg %p39
        $region14: #{tpu_custom_call.1} parent=11 // pred_check_branch
          %327 = sbr.rel (%p325) target = $region16
        $region15: #{tpu_custom_call.1} parent=11 // pred_region
          _
        $region16: #{tpu_custom_call.1} parent=11 // pred_fallthru
          _
        // Predicated region
        $region17: #{tpu_custom_call.1} parent=11 // pred_check
          %p328 = pneg %p60
        $region18: #{tpu_custom_call.1} parent=11 // pred_check_branch
          %330 = sbr.rel (%p328) target = $region20
        $region19: #{tpu_custom_call.1} parent=11 // pred_region
          _
        $region20: #{tpu_custom_call.1} parent=11 // pred_fallthru
          _
        // Predicated region
        $region21: #{tpu_custom_call.1} parent=11 // pred_check
          %p331 = pneg %p81
        $region22: #{tpu_custom_call.1} parent=11 // pred_check_branch
          %333 = sbr.rel (%p331) target = $region24
        $region23: #{tpu_custom_call.1} parent=11 // pred_region
          _
        $region24: #{tpu_custom_call.1} parent=11 // pred_fallthru
          _
      $region12: #{tpu_custom_call.1} parent=5 // pred_fallthru
        _
      %p334 = scmp.lt.s32.totalorder %s18, 6
      // Predicated region
      $region25: #{tpu_custom_call.1} parent=5 // pred_check
        %p335 = pneg %p334
      $region26: #{tpu_custom_call.1} parent=5 // pred_check_branch
        %337 = sbr.rel (%p335) target = $region28
      $region27: #{tpu_custom_call.1} parent=5 // pred_region
        // Predicated region
        $region29: #{tpu_custom_call.1} parent=27 // pred_check
          %p338 = pneg %p101
        $region30: #{tpu_custom_call.1} parent=27 // pred_check_branch
          %340 = sbr.rel (%p338) target = $region32
        $region31: #{tpu_custom_call.1} parent=27 // pred_region
          %p341 = scmp.lt.s32.totalorder %s18, 5
          %s342 = scalar_select %p341, %s18, 5
          %s343 = smul.addr %s342, 38
          %s344 = smul.addr %s343, 8
          %s345 = scalar_lea.vmem %s3, %s344
        $region32: #{tpu_custom_call.1} parent=27 // pred_fallthru
          _
        // Predicated region
        $region33: #{tpu_custom_call.1} parent=27 // pred_check
          %p346 = pneg %p127
        $region34: #{tpu_custom_call.1} parent=27 // pred_check_branch
          %348 = sbr.rel (%p346) target = $region36
        $region35: #{tpu_custom_call.1} parent=27 // pred_region
          %p349 = scmp.lt.s32.totalorder %s18, 5
          %s350 = scalar_select %p349, %s18, 5
          %s351 = smul.addr %s350, 38
          %s352 = smul.addr %s351, 8
          %s353 = scalar_lea.vmem %s4, %s352
        $region36: #{tpu_custom_call.1} parent=27 // pred_fallthru
          _
        // Predicated region
        $region37: #{tpu_custom_call.1} parent=27 // pred_check
          %p354 = pneg %p153
        $region38: #{tpu_custom_call.1} parent=27 // pred_check_branch
          %356 = sbr.rel (%p354) target = $region40
        $region39: #{tpu_custom_call.1} parent=27 // pred_region
          %p357 = scmp.lt.s32.totalorder %s18, 5
          %s358 = scalar_select %p357, %s18, 5
          %s359 = smul.addr %s358, 38
          %s360 = smul.addr %s359, 8
          %s361 = scalar_lea.vmem %s5, %s360
        $region40: #{tpu_custom_call.1} parent=27 // pred_fallthru
          _
        // Predicated region
        $region41: #{tpu_custom_call.1} parent=27 // pred_check
          %p362 = pneg %p179
        $region42: #{tpu_custom_call.1} parent=27 // pred_check_branch
          %364 = sbr.rel (%p362) target = $region44
        $region43: #{tpu_custom_call.1} parent=27 // pred_region
          %p365 = scmp.lt.s32.totalorder %s18, 5
          %s366 = scalar_select %p365, %s18, 5
          %s367 = smul.addr %s366, 38
          %s368 = smul.addr %s367, 8
          %s369 = scalar_lea.vmem %s6, %s368
        $region44: #{tpu_custom_call.1} parent=27 // pred_fallthru
          _
        // Predicated region
        $region45: #{tpu_custom_call.1} parent=27 // pred_check
          %p370 = pneg %p205
        $region46: #{tpu_custom_call.1} parent=27 // pred_check_branch
          %372 = sbr.rel (%p370) target = $region48
        $region47: #{tpu_custom_call.1} parent=27 // pred_region
          %p373 = scmp.lt.s32.totalorder %s18, 5
          %s374 = scalar_select %p373, %s18, 5
          %s375 = smul.addr %s374, 152
          %s376 = smul.addr %s375, 8
          %s377 = scalar_lea.vmem %s7, %s376
        $region48: #{tpu_custom_call.1} parent=27 // pred_fallthru
          _
        // Predicated region
        $region49: #{tpu_custom_call.1} parent=27 // pred_check
          %p378 = pneg %p231
        $region50: #{tpu_custom_call.1} parent=27 // pred_check_branch
          %380 = sbr.rel (%p378) target = $region52
        $region51: #{tpu_custom_call.1} parent=27 // pred_region
          %p381 = scmp.lt.s32.totalorder %s18, 5
          %s382 = scalar_select %p381, %s18, 5
          %s383 = smul.addr %s382, 256
          %s384 = smul.addr %s383, 8
          %s385 = scalar_lea.vmem %s8, %s384
        $region52: #{tpu_custom_call.1} parent=27 // pred_fallthru
          _
        // Predicated region
        $region53: #{tpu_custom_call.1} parent=27 // pred_check
          %p386 = pneg %p257
        $region54: #{tpu_custom_call.1} parent=27 // pred_check_branch
          %388 = sbr.rel (%p386) target = $region56
        $region55: #{tpu_custom_call.1} parent=27 // pred_region
          %p389 = scmp.lt.s32.totalorder %s18, 5
          %s390 = scalar_select %p389, %s18, 5
          %s391 = smul.addr %s390, 8
          %s392 = scalar_lea.vmem %s9, %s391
        $region56: #{tpu_custom_call.1} parent=27 // pred_fallthru
          _
        // Predicated region
        $region57: #{tpu_custom_call.1} parent=27 // pred_check
          %p393 = pneg %p283
        $region58: #{tpu_custom_call.1} parent=27 // pred_check_branch
          %395 = sbr.rel (%p393) target = $region60
        $region59: #{tpu_custom_call.1} parent=27 // pred_region
          %p396 = scmp.lt.s32.totalorder %s18, 5
          %s397 = scalar_select %p396, %s18, 5
          %s398 = smul.addr %s397, 4
          %s399 = smul.addr %s398, 8
          %s400 = scalar_lea.vmem %s10, %s399
        $region60: #{tpu_custom_call.1} parent=27 // pred_fallthru
          _
      $region28: #{tpu_custom_call.1} parent=5 // pred_fallthru
        _
      %p401 = scmp.le.s32.totalorder 1, %s18
      %p402 = scmp.lt.s32.totalorder %s18, 7
      %p403 = pnand %p401, %p402
      %p404 = pneg %p403
      // Predicated region
      $region61: #{tpu_custom_call.1} parent=5 // pred_check
        _
      $region62: #{tpu_custom_call.1} parent=5 // pred_check_branch
        %406 = sbr.rel (%p403) target = $region64
      $region63: #{tpu_custom_call.1} parent=5 // pred_region
        %s407 = ssub.s32 %s18, 1
        %p408 = pneg %p39
        %p409 = pneg %p36
        %p410 = pneg %p60
        %p411 = pneg %p57
        %p412 = pneg %p81
        %p413 = pneg %p78
        %p414 = scmp.lt.s32.totalorder %s23, 5
        %s415 = scalar_select %p414, %s23, 5
        %s416 = smul.addr %s415, 38
        %s417 = smul.addr %s416, 8
        %s418 = scalar_lea.vmem %s3, %s417
        %p419 = pneg %p107
        %p420 = pneg %p104
        %p421 = scmp.lt.s32.totalorder %s23, 5
        %s422 = scalar_select %p421, %s23, 5
        %s423 = smul.addr %s422, 38
        %s424 = smul.addr %s423, 8
        %s425 = scalar_lea.vmem %s4, %s424
        %p426 = pneg %p133
        %p427 = pneg %p130
        %p428 = scmp.lt.s32.totalorder %s23, 5
        %s429 = scalar_select %p428, %s23, 5
        %s430 = smul.addr %s429, 38
        %s431 = smul.addr %s430, 8
        %s432 = scalar_lea.vmem %s5, %s431
        %p433 = pneg %p159
        %p434 = pneg %p156
        %p435 = scmp.lt.s32.totalorder %s23, 5
        %s436 = scalar_select %p435, %s23, 5
        %s437 = smul.addr %s436, 38
        %s438 = smul.addr %s437, 8
        %s439 = scalar_lea.vmem %s6, %s438
        %p440 = pneg %p185
        %p441 = pneg %p182
        %p442 = scmp.lt.s32.totalorder %s23, 5
        %s443 = scalar_select %p442, %s23, 5
        %s444 = smul.addr %s443, 152
        %s445 = smul.addr %s444, 8
        %s446 = scalar_lea.vmem %s7, %s445
        %p447 = pneg %p211
        %p448 = pneg %p208
        %p449 = scmp.lt.s32.totalorder %s23, 5
        %s450 = scalar_select %p449, %s23, 5
        %s451 = smul.addr %s450, 256
        %s452 = smul.addr %s451, 8
        %s453 = scalar_lea.vmem %s8, %s452
        %p454 = pneg %p237
        %p455 = pneg %p234
        %p456 = scmp.lt.s32.totalorder %s23, 5
        %s457 = scalar_select %p456, %s23, 5
        %s458 = smul.addr %s457, 8
        %s459 = scalar_lea.vmem %s9, %s458
        %p460 = pneg %p263
        %p461 = pneg %p260
        %p462 = scmp.lt.s32.totalorder %s23, 5
        %s463 = scalar_select %p462, %s23, 5
        %s464 = smul.addr %s463, 4
        %s465 = smul.addr %s464, 8
        %s466 = scalar_lea.vmem %s10, %s465
        %p467 = pneg %p289
        %p468 = pneg %p286
        %p469 = pneg %p310
        %p470 = pneg %p307
        %p471 = scmp.lt.s32.totalorder %s23, 5
        %s472 = scalar_select %p471, %s23, 5
        %s473 = smul.addr %s472, 38
        %s474 = smul.addr %s473, 8
        %s475 = scalar_lea.vmem %s3, %s474
        %p476 = scmp.lt.s32.totalorder %s23, 5
        %s477 = scalar_select %p476, %s23, 5
        %s478 = smul.addr %s477, 38
        %s479 = smul.addr %s478, 8
        %s480 = scalar_lea.vmem %s4, %s479
        %p481 = scmp.lt.s32.totalorder %s23, 5
        %s482 = scalar_select %p481, %s23, 5
        %s483 = smul.addr %s482, 38
        %s484 = smul.addr %s483, 8
        %s485 = scalar_lea.vmem %s5, %s484
        %p486 = scmp.lt.s32.totalorder %s23, 5
        %s487 = scalar_select %p486, %s23, 5
        %s488 = smul.addr %s487, 38
        %s489 = smul.addr %s488, 8
        %s490 = scalar_lea.vmem %s6, %s489
        %p491 = scmp.lt.s32.totalorder %s23, 5
        %s492 = scalar_select %p491, %s23, 5
        %s493 = smul.addr %s492, 152
        %s494 = smul.addr %s493, 8
        %s495 = scalar_lea.vmem %s7, %s494
        %p496 = scmp.lt.s32.totalorder %s23, 5
        %s497 = scalar_select %p496, %s23, 5
        %s498 = smul.addr %s497, 256
        %s499 = smul.addr %s498, 8
        %s500 = scalar_lea.vmem %s8, %s499
        %p501 = scmp.lt.s32.totalorder %s23, 5
        %s502 = scalar_select %p501, %s23, 5
        %s503 = smul.addr %s502, 8
        %s504 = scalar_lea.vmem %s9, %s503
        %p505 = scmp.lt.s32.totalorder %s23, 5
        %s506 = scalar_select %p505, %s23, 5
        %s507 = smul.addr %s506, 4
        %s508 = smul.addr %s507, 8
        %s509 = scalar_lea.vmem %s10, %s508
        %p510 = scmp.eq.s32.totalorder %s23, 0
        // Predicated region
        $region65: #{tpu_custom_call.1} parent=63 // pred_check
          %p511 = pneg %p510
        $region66: #{tpu_custom_call.1} parent=63 // pred_check_branch
          %513 = sbr.rel (%p511) target = $region68
        $region67: #{tpu_custom_call.1} parent=63 // pred_region
          %v514 = vld [vmem:[%s0] sm:$0xff]
          %v515 = vld [vmem:[%s0 + $0x8] sm:$0xff]
          %v516 = vld [vmem:[%s0 + $0x10] sm:$0xff]
          %v517 = vld [vmem:[%s0 + $0x18] sm:$0xff]
          %518 = vst [vmem:[#allocation2] sm:$0xff] %v514
          %vm519 = vcmask 179200
          %520 = vst.msk [vmem:[#allocation2 + $0x8] sm:$0xff] %vm519, %v515
          %521 = vst [vmem:[#allocation2 + $0x10] sm:$0xff] %v516
          %522 = vst.msk [vmem:[#allocation2 + $0x18] sm:$0xff] %vm519, %v517
        $region68: #{tpu_custom_call.1} parent=63 // pred_fallthru
          _
        %v523 = vld [vmem:[#allocation2] sm:$0xff]
        %v524 = vld [vmem:[#allocation2 + $0x8] sm:$0xff]
        %v525 = vld [vmem:[#allocation2 + $0x10] sm:$0xff]
        %v526 = vld [vmem:[#allocation2 + $0x18] sm:$0xff]
        %v527 = vld [vmem:[%s509] sm:$0xff]
        %v528 = vld [vmem:[%s509 + $0x8] sm:$0xff]
        %v529 = vld [vmem:[%s509 + $0x10] sm:$0x1]
        %v530 = vld [vmem:[%s509 + $0x18] sm:$0x1]
        %v531 = vld [vmem:[%s504] sm:$0xff]
        %v532 = vld [vmem:[%s475] sm:$0xff]
        %v533 = vld [vmem:[%s475 + $0x8] sm:$0xff]
        %v534 = vld [vmem:[%s475 + $0x10] sm:$0xff]
        %v535 = vld [vmem:[%s475 + $0x18] sm:$0xff]
        %v536 = vld [vmem:[%s475 + $0x20] sm:$0xff]
        %v537 = vld [vmem:[%s475 + $0x28] sm:$0xff]
        %v538 = vld [vmem:[%s475 + $0x30] sm:$0xff]
        %v539 = vld [vmem:[%s475 + $0x38] sm:$0xff]
        %v540 = vld [vmem:[%s475 + $0x40] sm:$0xff]
        %v541 = vld [vmem:[%s475 + $0x48] sm:$0xff]
        %v542 = vld [vmem:[%s475 + $0x50] sm:$0xff]
        %v543 = vld [vmem:[%s475 + $0x58] sm:$0xff]
        %v544 = vld [vmem:[%s475 + $0x60] sm:$0xff]
        %v545 = vld [vmem:[%s475 + $0x68] sm:$0xff]
        %v546 = vld [vmem:[%s475 + $0x70] sm:$0xff]
        %v547 = vld [vmem:[%s475 + $0x78] sm:$0xff]
        %v548 = vld [vmem:[%s475 + $0x80] sm:$0xff]
        %v549 = vld [vmem:[%s475 + $0x88] sm:$0xff]
        %v550 = vld [vmem:[%s475 + $0x90] sm:$0xff]
        %v551 = vld [vmem:[%s475 + $0x98] sm:$0xff]
        %v552 = vld [vmem:[%s475 + $0xa0] sm:$0xff]
        %v553 = vld [vmem:[%s475 + $0xa8] sm:$0xff]
        %v554 = vld [vmem:[%s475 + $0xb0] sm:$0xff]
        %v555 = vld [vmem:[%s475 + $0xb8] sm:$0xff]
        %v556 = vld [vmem:[%s475 + $0xc0] sm:$0xff]
        %v557 = vld [vmem:[%s475 + $0xc8] sm:$0xff]
        %v558 = vld [vmem:[%s475 + $0xd0] sm:$0xff]
        %v559 = vld [vmem:[%s475 + $0xd8] sm:$0xff]
        %v560 = vld [vmem:[%s475 + $0xe0] sm:$0xff]
        %v561 = vld [vmem:[%s475 + $0xe8] sm:$0xff]
        %v562 = vld [vmem:[%s475 + $0xf0] sm:$0xff]
        %v563 = vld [vmem:[%s475 + $0xf8] sm:$0xff]
        %v564 = vld [vmem:[%s475 + $0x100] sm:$0xff]
        %v565 = vld [vmem:[%s475 + $0x108] sm:$0xff]
        %v566 = vld [vmem:[%s475 + $0x110] sm:$0xff]
        %v567 = vld [vmem:[%s475 + $0x118] sm:$0xff]
        %v568 = vld [vmem:[%s475 + $0x120] sm:$0x3f]
        %v569 = vld [vmem:[%s475 + $0x128] sm:$0x3f]
        %v570 = vperm.slane %v527, 0
        %v571 = vperm.slane %v528, 0
        %vm572 = vcmask 179200
        %v574 = vsel %vm572, %v524, 0
        %v577 = vsel %vm572, %v526, 0
        %vm579 = vcmask 1045504
        %v581 = vsel %vm579, %v568, 0
        %v584 = vsel %vm579, %v569, 0
        %586 = vmatpush.msra.mxu0 %v562
        %587 = vmatpush.msra.mxu0 %v560
        %588 = vmatpush.msra.mxu0 %v558
        %589 = vmatpush.msra.mxu0 %v556
        %590 = vmatpush.msra.mxu0 %v554
        %591 = vmatpush.msra.mxu0 %v552
        %592 = vmatpush.msra.mxu0 %v550
        %593 = vmatpush.msra.mxu0 %v548
        %594 = vmatpush.msra.mxu0 %v546
        %595 = vmatpush.msra.mxu0 %v544
        %596 = vmatpush.msra.mxu0 %v542
        %597 = vmatpush.msra.mxu0 %v540
        %598 = vmatpush.msra.mxu0 %v538
        %599 = vmatpush.msra.mxu0 %v536
        %600 = vmatpush.msra.mxu0 %v534
        %601 = vmatpush.msra.mxu0 %v532
        %602 = vmatmul.f32.gmra.mxu0 %v523
        %v603 = vpop.f32.mrf.mxu0
        %v604 = vadd.f32 %v570, %v603
        %605 = vmatmul.f32.gmra.mxu0 %v525
        %v606 = vpop.f32.mrf.mxu0
        %v607 = vadd.f32 %v570, %v606
        %608 = vdwg.mxu0
        %609 = vmatpush.msra.mxu0 0.0
        %610 = vmatpush.msra.mxu0 0.0
        %611 = vmatpush.msra.mxu0 0.0
        %612 = vmatpush.msra.mxu0 0.0
        %613 = vmatpush.msra.mxu0 0.0
        %614 = vmatpush.msra.mxu0 0.0
        %615 = vmatpush.msra.mxu0 0.0
        %616 = vmatpush.msra.mxu0 0.0
        %617 = vmatpush.msra.mxu0 0.0
        %618 = vmatpush.msra.mxu0 0.0
        %619 = vmatpush.msra.mxu0 0.0
        %620 = vmatpush.msra.mxu0 0.0
        %621 = vmatpush.msra.mxu0 0.0
        %622 = vmatpush.msra.mxu0 %v581
        %623 = vmatpush.msra.mxu0 %v566
        %624 = vmatpush.msra.mxu0 %v564
        %625 = vmatmul.f32.gmra.mxu0 %v574
        %v626 = vpop.f32.mrf.mxu0
        %v627 = vadd.f32 %v604, %v626
        %628 = vmatmul.f32.gmra.mxu0 %v577
        %v629 = vpop.f32.mrf.mxu0
        %v630 = vadd.f32 %v607, %v629
        %631 = vdwg.mxu0
        %632 = vmatpush.msra.mxu0 %v563
        %633 = vmatpush.msra.mxu0 %v561
        %634 = vmatpush.msra.mxu0 %v559
        %635 = vmatpush.msra.mxu0 %v557
        %636 = vmatpush.msra.mxu0 %v555
        %637 = vmatpush.msra.mxu0 %v553
        %638 = vmatpush.msra.mxu0 %v551
        %639 = vmatpush.msra.mxu0 %v549
        %640 = vmatpush.msra.mxu0 %v547
        %641 = vmatpush.msra.mxu0 %v545
        %642 = vmatpush.msra.mxu0 %v543
        %643 = vmatpush.msra.mxu0 %v541
        %644 = vmatpush.msra.mxu0 %v539
        %645 = vmatpush.msra.mxu0 %v537
        %646 = vmatpush.msra.mxu0 %v535
        %647 = vmatpush.msra.mxu0 %v533
        %648 = vmatmul.f32.gmra.mxu0 %v523
        %v649 = vpop.f32.mrf.mxu0
        %v650 = vadd.f32 %v571, %v649
        %651 = vmatmul.f32.gmra.mxu0 %v525
        %v652 = vpop.f32.mrf.mxu0
        %v653 = vadd.f32 %v571, %v652
        %654 = vdwg.mxu0
        %655 = vmatpush.msra.mxu0 0.0
        %656 = vmatpush.msra.mxu0 0.0
        %657 = vmatpush.msra.mxu0 0.0
        %658 = vmatpush.msra.mxu0 0.0
        %659 = vmatpush.msra.mxu0 0.0
        %660 = vmatpush.msra.mxu0 0.0
        %661 = vmatpush.msra.mxu0 0.0
        %662 = vmatpush.msra.mxu0 0.0
        %663 = vmatpush.msra.mxu0 0.0
        %664 = vmatpush.msra.mxu0 0.0
        %665 = vmatpush.msra.mxu0 0.0
        %666 = vmatpush.msra.mxu0 0.0
        %667 = vmatpush.msra.mxu0 0.0
        %668 = vmatpush.msra.mxu0 %v584
        %669 = vmatpush.msra.mxu0 %v567
        %670 = vmatpush.msra.mxu0 %v565
        %671 = vmatmul.f32.gmra.mxu0 %v574
        %v672 = vpop.f32.mrf.mxu0
        %v673 = vadd.f32 %v650, %v672
        %674 = vmatmul.f32.gmra.mxu0 %v577
        %v675 = vpop.f32.mrf.mxu0
        %v676 = vadd.f32 %v653, %v675
        %677 = vdwg.mxu0
        %v678 = vld [vmem:[%s480] sm:$0xff]
        %v679 = vld [vmem:[%s480 + $0x8] sm:$0xff]
        %v680 = vld [vmem:[%s480 + $0x10] sm:$0xff]
        %v681 = vld [vmem:[%s480 + $0x18] sm:$0xff]
        %v682 = vld [vmem:[%s480 + $0x20] sm:$0xff]
        %v683 = vld [vmem:[%s480 + $0x28] sm:$0xff]
        %v684 = vld [vmem:[%s480 + $0x30] sm:$0xff]
        %v685 = vld [vmem:[%s480 + $0x38] sm:$0xff]
        %v686 = vld [vmem:[%s480 + $0x40] sm:$0xff]
        %v687 = vld [vmem:[%s480 + $0x48] sm:$0xff]
        %v688 = vld [vmem:[%s480 + $0x50] sm:$0xff]
        %v689 = vld [vmem:[%s480 + $0x58] sm:$0xff]
        %v690 = vld [vmem:[%s480 + $0x60] sm:$0xff]
        %v691 = vld [vmem:[%s480 + $0x68] sm:$0xff]
        %v692 = vld [vmem:[%s480 + $0x70] sm:$0xff]
        %v693 = vld [vmem:[%s480 + $0x78] sm:$0xff]
        %v694 = vld [vmem:[%s480 + $0x80] sm:$0xff]
        %v695 = vld [vmem:[%s480 + $0x88] sm:$0xff]
        %v696 = vld [vmem:[%s480 + $0x90] sm:$0xff]
        %v697 = vld [vmem:[%s480 + $0x98] sm:$0xff]
        %v698 = vld [vmem:[%s480 + $0xa0] sm:$0xff]
        %v699 = vld [vmem:[%s480 + $0xa8] sm:$0xff]
        %v700 = vld [vmem:[%s480 + $0xb0] sm:$0xff]
        %v701 = vld [vmem:[%s480 + $0xb8] sm:$0xff]
        %v702 = vld [vmem:[%s480 + $0xc0] sm:$0xff]
        %v703 = vld [vmem:[%s480 + $0xc8] sm:$0xff]
        %v704 = vld [vmem:[%s480 + $0xd0] sm:$0xff]
        %v705 = vld [vmem:[%s480 + $0xd8] sm:$0xff]
        %v706 = vld [vmem:[%s480 + $0xe0] sm:$0xff]
        %v707 = vld [vmem:[%s480 + $0xe8] sm:$0xff]
        %v708 = vld [vmem:[%s480 + $0xf0] sm:$0xff]
        %v709 = vld [vmem:[%s480 + $0xf8] sm:$0xff]
        %v710 = vld [vmem:[%s480 + $0x100] sm:$0xff]
        %v711 = vld [vmem:[%s480 + $0x108] sm:$0xff]
        %v712 = vld [vmem:[%s480 + $0x110] sm:$0xff]
        %v713 = vld [vmem:[%s480 + $0x118] sm:$0xff]
        %v714 = vld [vmem:[%s480 + $0x120] sm:$0x3f]
        %v715 = vld [vmem:[%s480 + $0x128] sm:$0x3f]
        %v716 = vperm.slane %v527, 1
        %v717 = vperm.slane %v528, 1
        %v719 = vsel %vm579, %v714, 0
        %v722 = vsel %vm579, %v715, 0
        %724 = vmatpush.msra.mxu0 %v708
        %725 = vmatpush.msra.mxu0 %v706
        %726 = vmatpush.msra.mxu0 %v704
        %727 = vmatpush.msra.mxu0 %v702
        %728 = vmatpush.msra.mxu0 %v700
        %729 = vmatpush.msra.mxu0 %v698
        %730 = vmatpush.msra.mxu0 %v696
        %731 = vmatpush.msra.mxu0 %v694
        %732 = vmatpush.msra.mxu0 %v692
        %733 = vmatpush.msra.mxu0 %v690
        %734 = vmatpush.msra.mxu0 %v688
        %735 = vmatpush.msra.mxu0 %v686
        %736 = vmatpush.msra.mxu0 %v684
        %737 = vmatpush.msra.mxu0 %v682
        %738 = vmatpush.msra.mxu0 %v680
        %739 = vmatpush.msra.mxu0 %v678
        %740 = vmatmul.f32.gmra.mxu0 %v523
        %v741 = vpop.f32.mrf.mxu0
        %v742 = vadd.f32 %v716, %v741
        %743 = vmatmul.f32.gmra.mxu0 %v525
        %v744 = vpop.f32.mrf.mxu0
        %v745 = vadd.f32 %v716, %v744
        %746 = vdwg.mxu0
        %747 = vmatpush.msra.mxu0 0.0
        %748 = vmatpush.msra.mxu0 0.0
        %749 = vmatpush.msra.mxu0 0.0
        %750 = vmatpush.msra.mxu0 0.0
        %751 = vmatpush.msra.mxu0 0.0
        %752 = vmatpush.msra.mxu0 0.0
        %753 = vmatpush.msra.mxu0 0.0
        %754 = vmatpush.msra.mxu0 0.0
        %755 = vmatpush.msra.mxu0 0.0
        %756 = vmatpush.msra.mxu0 0.0
        %757 = vmatpush.msra.mxu0 0.0
        %758 = vmatpush.msra.mxu0 0.0
        %759 = vmatpush.msra.mxu0 0.0
        %760 = vmatpush.msra.mxu0 %v719
        %761 = vmatpush.msra.mxu0 %v712
        %762 = vmatpush.msra.mxu0 %v710
        %763 = vmatmul.f32.gmra.mxu0 %v574
        %v764 = vpop.f32.mrf.mxu0
        %v765 = vadd.f32 %v742, %v764
        %766 = vmatmul.f32.gmra.mxu0 %v577
        %v767 = vpop.f32.mrf.mxu0
        %v768 = vadd.f32 %v745, %v767
        %769 = vdwg.mxu0
        %770 = vmatpush.msra.mxu0 %v709
        %771 = vmatpush.msra.mxu0 %v707
        %772 = vmatpush.msra.mxu0 %v705
        %773 = vmatpush.msra.mxu0 %v703
        %774 = vmatpush.msra.mxu0 %v701
        %775 = vmatpush.msra.mxu0 %v699
        %776 = vmatpush.msra.mxu0 %v697
        %777 = vmatpush.msra.mxu0 %v695
        %778 = vmatpush.msra.mxu0 %v693
        %779 = vmatpush.msra.mxu0 %v691
        %780 = vmatpush.msra.mxu0 %v689
        %781 = vmatpush.msra.mxu0 %v687
        %782 = vmatpush.msra.mxu0 %v685
        %783 = vmatpush.msra.mxu0 %v683
        %784 = vmatpush.msra.mxu0 %v681
        %785 = vmatpush.msra.mxu0 %v679
        %786 = vmatmul.f32.gmra.mxu0 %v523
        %v787 = vpop.f32.mrf.mxu0
        %v788 = vadd.f32 %v717, %v787
        %789 = vmatmul.f32.gmra.mxu0 %v525
        %v790 = vpop.f32.mrf.mxu0
        %v791 = vadd.f32 %v717, %v790
        %792 = vdwg.mxu0
        %793 = vmatpush.msra.mxu0 0.0
        %794 = vmatpush.msra.mxu0 0.0
        %795 = vmatpush.msra.mxu0 0.0
        %796 = vmatpush.msra.mxu0 0.0
        %797 = vmatpush.msra.mxu0 0.0
        %798 = vmatpush.msra.mxu0 0.0
        %799 = vmatpush.msra.mxu0 0.0
        %800 = vmatpush.msra.mxu0 0.0
        %801 = vmatpush.msra.mxu0 0.0
        %802 = vmatpush.msra.mxu0 0.0
        %803 = vmatpush.msra.mxu0 0.0
        %804 = vmatpush.msra.mxu0 0.0
        %805 = vmatpush.msra.mxu0 0.0
        %806 = vmatpush.msra.mxu0 %v722
        %807 = vmatpush.msra.mxu0 %v713
        %808 = vmatpush.msra.mxu0 %v711
        %809 = vmatmul.f32.gmra.mxu0 %v574
        %v810 = vpop.f32.mrf.mxu0
        %v811 = vadd.f32 %v788, %v810
        %812 = vmatmul.f32.gmra.mxu0 %v577
        %v813 = vpop.f32.mrf.mxu0
        %v814 = vadd.f32 %v791, %v813
        %815 = vdwg.mxu0
        %v816 = vld [vmem:[%s485] sm:$0xff]
        %v817 = vld [vmem:[%s485 + $0x8] sm:$0xff]
        %v818 = vld [vmem:[%s485 + $0x10] sm:$0xff]
        %v819 = vld [vmem:[%s485 + $0x18] sm:$0xff]
        %v820 = vld [vmem:[%s485 + $0x20] sm:$0xff]
        %v821 = vld [vmem:[%s485 + $0x28] sm:$0xff]
        %v822 = vld [vmem:[%s485 + $0x30] sm:$0xff]
        %v823 = vld [vmem:[%s485 + $0x38] sm:$0xff]
        %v824 = vld [vmem:[%s485 + $0x40] sm:$0xff]
        %v825 = vld [vmem:[%s485 + $0x48] sm:$0xff]
        %v826 = vld [vmem:[%s485 + $0x50] sm:$0xff]
        %v827 = vld [vmem:[%s485 + $0x58] sm:$0xff]
        %v828 = vld [vmem:[%s485 + $0x60] sm:$0xff]
        %v829 = vld [vmem:[%s485 + $0x68] sm:$0xff]
        %v830 = vld [vmem:[%s485 + $0x70] sm:$0xff]
        %v831 = vld [vmem:[%s485 + $0x78] sm:$0xff]
        %v832 = vld [vmem:[%s485 + $0x80] sm:$0xff]
        %v833 = vld [vmem:[%s485 + $0x88] sm:$0xff]
        %v834 = vld [vmem:[%s485 + $0x90] sm:$0xff]
        %v835 = vld [vmem:[%s485 + $0x98] sm:$0xff]
        %v836 = vld [vmem:[%s485 + $0xa0] sm:$0xff]
        %v837 = vld [vmem:[%s485 + $0xa8] sm:$0xff]
        %v838 = vld [vmem:[%s485 + $0xb0] sm:$0xff]
        %v839 = vld [vmem:[%s485 + $0xb8] sm:$0xff]
        %v840 = vld [vmem:[%s485 + $0xc0] sm:$0xff]
        %v841 = vld [vmem:[%s485 + $0xc8] sm:$0xff]
        %v842 = vld [vmem:[%s485 + $0xd0] sm:$0xff]
        %v843 = vld [vmem:[%s485 + $0xd8] sm:$0xff]
        %v844 = vld [vmem:[%s485 + $0xe0] sm:$0xff]
        %v845 = vld [vmem:[%s485 + $0xe8] sm:$0xff]
        %v846 = vld [vmem:[%s485 + $0xf0] sm:$0xff]
        %v847 = vld [vmem:[%s485 + $0xf8] sm:$0xff]
        %v848 = vld [vmem:[%s485 + $0x100] sm:$0xff]
        %v849 = vld [vmem:[%s485 + $0x108] sm:$0xff]
        %v850 = vld [vmem:[%s485 + $0x110] sm:$0xff]
        %v851 = vld [vmem:[%s485 + $0x118] sm:$0xff]
        %v852 = vld [vmem:[%s485 + $0x120] sm:$0x3f]
        %v853 = vld [vmem:[%s485 + $0x128] sm:$0x3f]
        %v854 = vperm.slane %v527, 2
        %v855 = vperm.slane %v528, 2
        %v857 = vsel %vm579, %v852, 0
        %v860 = vsel %vm579, %v853, 0
        %862 = vmatpush.msra.mxu0 %v846
        %863 = vmatpush.msra.mxu0 %v844
        %864 = vmatpush.msra.mxu0 %v842
        %865 = vmatpush.msra.mxu0 %v840
        %866 = vmatpush.msra.mxu0 %v838
        %867 = vmatpush.msra.mxu0 %v836
        %868 = vmatpush.msra.mxu0 %v834
        %869 = vmatpush.msra.mxu0 %v832
        %870 = vmatpush.msra.mxu0 %v830
        %871 = vmatpush.msra.mxu0 %v828
        %872 = vmatpush.msra.mxu0 %v826
        %873 = vmatpush.msra.mxu0 %v824
        %874 = vmatpush.msra.mxu0 %v822
        %875 = vmatpush.msra.mxu0 %v820
        %876 = vmatpush.msra.mxu0 %v818
        %877 = vmatpush.msra.mxu0 %v816
        %878 = vmatmul.f32.gmra.mxu0 %v523
        %v879 = vpop.f32.mrf.mxu0
        %v880 = vadd.f32 %v854, %v879
        %881 = vmatmul.f32.gmra.mxu0 %v525
        %v882 = vpop.f32.mrf.mxu0
        %v883 = vadd.f32 %v854, %v882
        %884 = vdwg.mxu0
        %885 = vmatpush.msra.mxu0 0.0
        %886 = vmatpush.msra.mxu0 0.0
        %887 = vmatpush.msra.mxu0 0.0
        %888 = vmatpush.msra.mxu0 0.0
        %889 = vmatpush.msra.mxu0 0.0
        %890 = vmatpush.msra.mxu0 0.0
        %891 = vmatpush.msra.mxu0 0.0
        %892 = vmatpush.msra.mxu0 0.0
        %893 = vmatpush.msra.mxu0 0.0
        %894 = vmatpush.msra.mxu0 0.0
        %895 = vmatpush.msra.mxu0 0.0
        %896 = vmatpush.msra.mxu0 0.0
        %897 = vmatpush.msra.mxu0 0.0
        %898 = vmatpush.msra.mxu0 %v857
        %899 = vmatpush.msra.mxu0 %v850
        %900 = vmatpush.msra.mxu0 %v848
        %901 = vmatmul.f32.gmra.mxu0 %v574
        %v902 = vpop.f32.mrf.mxu0
        %v903 = vadd.f32 %v880, %v902
        %904 = vmatmul.f32.gmra.mxu0 %v577
        %v905 = vpop.f32.mrf.mxu0
        %v906 = vadd.f32 %v883, %v905
        %907 = vdwg.mxu0
        %908 = vmatpush.msra.mxu0 %v847
        %909 = vmatpush.msra.mxu0 %v845
        %910 = vmatpush.msra.mxu0 %v843
        %911 = vmatpush.msra.mxu0 %v841
        %912 = vmatpush.msra.mxu0 %v839
        %913 = vmatpush.msra.mxu0 %v837
        %914 = vmatpush.msra.mxu0 %v835
        %915 = vmatpush.msra.mxu0 %v833
        %916 = vmatpush.msra.mxu0 %v831
        %917 = vmatpush.msra.mxu0 %v829
        %918 = vmatpush.msra.mxu0 %v827
        %919 = vmatpush.msra.mxu0 %v825
        %920 = vmatpush.msra.mxu0 %v823
        %921 = vmatpush.msra.mxu0 %v821
        %922 = vmatpush.msra.mxu0 %v819
        %923 = vmatpush.msra.mxu0 %v817
        %924 = vmatmul.f32.gmra.mxu0 %v523
        %v925 = vpop.f32.mrf.mxu0
        %v926 = vadd.f32 %v855, %v925
        %927 = vmatmul.f32.gmra.mxu0 %v525
        %v928 = vpop.f32.mrf.mxu0
        %v929 = vadd.f32 %v855, %v928
        %930 = vdwg.mxu0
        %931 = vmatpush.msra.mxu0 0.0
        %932 = vmatpush.msra.mxu0 0.0
        %933 = vmatpush.msra.mxu0 0.0
        %934 = vmatpush.msra.mxu0 0.0
        %935 = vmatpush.msra.mxu0 0.0
        %936 = vmatpush.msra.mxu0 0.0
        %937 = vmatpush.msra.mxu0 0.0
        %938 = vmatpush.msra.mxu0 0.0
        %939 = vmatpush.msra.mxu0 0.0
        %940 = vmatpush.msra.mxu0 0.0
        %941 = vmatpush.msra.mxu0 0.0
        %942 = vmatpush.msra.mxu0 0.0
        %943 = vmatpush.msra.mxu0 0.0
        %944 = vmatpush.msra.mxu0 %v860
        %945 = vmatpush.msra.mxu0 %v851
        %946 = vmatpush.msra.mxu0 %v849
        %947 = vmatmul.f32.gmra.mxu0 %v574
        %v948 = vpop.f32.mrf.mxu0
        %v949 = vadd.f32 %v926, %v948
        %950 = vmatmul.f32.gmra.mxu0 %v577
        %v951 = vpop.f32.mrf.mxu0
        %v952 = vadd.f32 %v929, %v951
        %953 = vdwg.mxu0
        %v954 = vld [vmem:[%s1] sm:$0xff]
        %v955 = vld [vmem:[%s1 + $0x8] sm:$0xff]
        %v956 = vld [vmem:[%s1 + $0x10] sm:$0x3]
        %v957 = vld [vmem:[%s1 + $0x18] sm:$0x3]
        %v962 = vrot.slane %v955, 7
        %v963 = vrot.slane %v957, 7
        %vm964 = vcmask 1040384
        %v965 = vsel %vm964, %v954, %v962
        %vm966 = vcmask 1041409
        %v967 = vsel %vm966, %v954, %v962
        %v968 = vrot.slane %v967, 1
        %vm969 = vcmask 1042434
        %v970 = vsel %vm969, %v954, %v962
        %v971 = vrot.slane %v970, 2
        %vm972 = vcmask 1043459
        %v973 = vsel %vm972, %v954, %v962
        %v974 = vrot.slane %v973, 3
        %vm975 = vcmask 1044484
        %v976 = vsel %vm975, %v954, %v962
        %v977 = vrot.slane %v976, 4
        %vm978 = vcmask 1045509
        %v979 = vsel %vm978, %v954, %v962
        %v980 = vrot.slane %v979, 5
        %vm981 = vcmask 1046534
        %v982 = vsel %vm981, %v954, %v962
        %v983 = vrot.slane %v982, 6
        %vm984 = vcmask 1046528
        %v985 = vsel %vm984, %v962, %v954
        %v986 = vrot.slane %v985, 7
        %v987 = vsel %vm964, %v956, %v963
        %v988 = vsel %vm966, %v956, %v963
        %v989 = vrot.slane %v988, 1
        %v990 = vperm.slane %v965, 0
        %v991 = vperm.slane %v965, 1
        %v992 = vperm.slane %v968, 0
        %v993 = vperm.slane %v968, 1
        %v994 = vperm.slane %v971, 0
        %v995 = vperm.slane %v971, 1
        %v996 = vperm.slane %v974, 0
        %v997 = vperm.slane %v974, 1
        %v998 = vperm.slane %v977, 0
        %v999 = vperm.slane %v977, 1
        %v1000 = vperm.slane %v980, 0
        %v1001 = vperm.slane %v980, 1
        %v1002 = vperm.slane %v983, 0
        %v1003 = vperm.slane %v983, 1
        %v1004 = vperm.slane %v986, 0
        %v1005 = vperm.slane %v986, 1
        %v1006 = vperm.slane %v987, 0
        %v1007 = vperm.slane %v987, 1
        %v1008 = vperm.slane %v989, 0
        %v1009 = vperm.slane %v989, 1
        %v1030 = vmul.f32 %v627, %v990
        %v1031 = vmul.f32 %v673, %v991
        %v1032 = vmul.f32 %v630, %v990
        %v1033 = vmul.f32 %v676, %v991
        %v1034 = vmul.f32 %v627, %v992
        %v1035 = vmul.f32 %v673, %v993
        %v1036 = vmul.f32 %v630, %v992
        %v1037 = vmul.f32 %v676, %v993
        %v1038 = vmul.f32 %v627, %v994
        %v1039 = vmul.f32 %v673, %v995
        %v1040 = vmul.f32 %v630, %v994
        %v1041 = vmul.f32 %v676, %v995
        %v1042 = vmul.f32 %v627, %v996
        %v1043 = vmul.f32 %v673, %v997
        %v1044 = vmul.f32 %v630, %v996
        %v1045 = vmul.f32 %v676, %v997
        %v1046 = vmul.f32 %v627, %v998
        %v1047 = vmul.f32 %v673, %v999
        %v1048 = vmul.f32 %v630, %v998
        %v1049 = vmul.f32 %v676, %v999
        %v1050 = vmul.f32 %v627, %v1000
        %v1051 = vmul.f32 %v673, %v1001
        %v1052 = vmul.f32 %v630, %v1000
        %v1053 = vmul.f32 %v676, %v1001
        %v1054 = vmul.f32 %v627, %v1002
        %v1055 = vmul.f32 %v673, %v1003
        %v1056 = vmul.f32 %v630, %v1002
        %v1057 = vmul.f32 %v676, %v1003
        %v1058 = vmul.f32 %v627, %v1004
        %v1059 = vmul.f32 %v673, %v1005
        %v1060 = vmul.f32 %v630, %v1004
        %v1061 = vmul.f32 %v676, %v1005
        %v1062 = vmul.f32 %v627, %v1006
        %v1063 = vmul.f32 %v673, %v1007
        %v1064 = vmul.f32 %v630, %v1006
        %v1065 = vmul.f32 %v676, %v1007
        %v1066 = vmul.f32 %v627, %v1008
        %v1067 = vmul.f32 %v673, %v1009
        %v1068 = vmul.f32 %v630, %v1008
        %v1069 = vmul.f32 %v676, %v1009
        %v1070 = vmul.f32 %v1030, 0.2581989
        %v1071 = vmul.f32 %v1031, 0.2581989
        %v1072 = vmul.f32 %v1032, 0.2581989
        %v1073 = vmul.f32 %v1033, 0.2581989
        %v1074 = vmul.f32 %v1034, 0.2581989
        %v1075 = vmul.f32 %v1035, 0.2581989
        %v1076 = vmul.f32 %v1036, 0.2581989
        %v1077 = vmul.f32 %v1037, 0.2581989
        %v1078 = vmul.f32 %v1038, 0.2581989
        %v1079 = vmul.f32 %v1039, 0.2581989
        %v1080 = vmul.f32 %v1040, 0.2581989
        %v1081 = vmul.f32 %v1041, 0.2581989
        %v1082 = vmul.f32 %v1042, 0.2581989
        %v1083 = vmul.f32 %v1043, 0.2581989
        %v1084 = vmul.f32 %v1044, 0.2581989
        %v1085 = vmul.f32 %v1045, 0.2581989
        %v1086 = vmul.f32 %v1046, 0.2581989
        %v1087 = vmul.f32 %v1047, 0.2581989
        %v1088 = vmul.f32 %v1048, 0.2581989
        %v1089 = vmul.f32 %v1049, 0.2581989
        %v1090 = vmul.f32 %v1050, 0.2581989
        %v1091 = vmul.f32 %v1051, 0.2581989
        %v1092 = vmul.f32 %v1052, 0.2581989
        %v1093 = vmul.f32 %v1053, 0.2581989
        %v1094 = vmul.f32 %v1054, 0.2581989
        %v1095 = vmul.f32 %v1055, 0.2581989
        %v1096 = vmul.f32 %v1056, 0.2581989
        %v1097 = vmul.f32 %v1057, 0.2581989
        %v1098 = vmul.f32 %v1058, 0.2581989
        %v1099 = vmul.f32 %v1059, 0.2581989
        %v1100 = vmul.f32 %v1060, 0.2581989
        %v1101 = vmul.f32 %v1061, 0.2581989
        %v1102 = vmul.f32 %v1062, 0.2581989
        %v1103 = vmul.f32 %v1063, 0.2581989
        %v1104 = vmul.f32 %v1064, 0.2581989
        %v1105 = vmul.f32 %v1065, 0.2581989
        %v1106 = vmul.f32 %v1066, 0.2581989
        %v1107 = vmul.f32 %v1067, 0.2581989
        %v1108 = vmul.f32 %v1068, 0.2581989
        %v1109 = vmul.f32 %v1069, 0.2581989
        %v1110 = vmul.f32 %v765, %v990
        %v1111 = vmul.f32 %v811, %v991
        %v1112 = vmul.f32 %v768, %v990
        %v1113 = vmul.f32 %v814, %v991
        %v1114 = vmul.f32 %v765, %v992
        %v1115 = vmul.f32 %v811, %v993
        %v1116 = vmul.f32 %v768, %v992
        %v1117 = vmul.f32 %v814, %v993
        %v1118 = vmul.f32 %v765, %v994
        %v1119 = vmul.f32 %v811, %v995
        %v1120 = vmul.f32 %v768, %v994
        %v1121 = vmul.f32 %v814, %v995
        %v1122 = vmul.f32 %v765, %v996
        %v1123 = vmul.f32 %v811, %v997
        %v1124 = vmul.f32 %v768, %v996
        %v1125 = vmul.f32 %v814, %v997
        %v1126 = vmul.f32 %v765, %v998
        %v1127 = vmul.f32 %v811, %v999
        %v1128 = vmul.f32 %v768, %v998
        %v1129 = vmul.f32 %v814, %v999
        %v1130 = vmul.f32 %v765, %v1000
        %v1131 = vmul.f32 %v811, %v1001
        %v1132 = vmul.f32 %v768, %v1000
        %v1133 = vmul.f32 %v814, %v1001
        %v1134 = vmul.f32 %v765, %v1002
        %v1135 = vmul.f32 %v811, %v1003
        %v1136 = vmul.f32 %v768, %v1002
        %v1137 = vmul.f32 %v814, %v1003
        %v1138 = vmul.f32 %v765, %v1004
        %v1139 = vmul.f32 %v811, %v1005
        %v1140 = vmul.f32 %v768, %v1004
        %v1141 = vmul.f32 %v814, %v1005
        %v1142 = vmul.f32 %v765, %v1006
        %v1143 = vmul.f32 %v811, %v1007
        %v1144 = vmul.f32 %v768, %v1006
        %v1145 = vmul.f32 %v814, %v1007
        %v1146 = vmul.f32 %v765, %v1008
        %v1147 = vmul.f32 %v811, %v1009
        %v1148 = vmul.f32 %v768, %v1008
        %v1149 = vmul.f32 %v814, %v1009
        %v1150 = vmul.f32 %v903, %v990
        %v1151 = vmul.f32 %v949, %v991
        %v1152 = vmul.f32 %v906, %v990
        %v1153 = vmul.f32 %v952, %v991
        %v1154 = vmul.f32 %v903, %v992
        %v1155 = vmul.f32 %v949, %v993
        %v1156 = vmul.f32 %v906, %v992
        %v1157 = vmul.f32 %v952, %v993
        %v1158 = vmul.f32 %v903, %v994
        %v1159 = vmul.f32 %v949, %v995
        %v1160 = vmul.f32 %v906, %v994
        %v1161 = vmul.f32 %v952, %v995
        %v1162 = vmul.f32 %v903, %v996
        %v1163 = vmul.f32 %v949, %v997
        %v1164 = vmul.f32 %v906, %v996
        %v1165 = vmul.f32 %v952, %v997
        %v1166 = vmul.f32 %v903, %v998
        %v1167 = vmul.f32 %v949, %v999
        %v1168 = vmul.f32 %v906, %v998
        %v1169 = vmul.f32 %v952, %v999
        %v1170 = vmul.f32 %v903, %v1000
        %v1171 = vmul.f32 %v949, %v1001
        %v1172 = vmul.f32 %v906, %v1000
        %v1173 = vmul.f32 %v952, %v1001
        %v1174 = vmul.f32 %v903, %v1002
        %v1175 = vmul.f32 %v949, %v1003
        %v1176 = vmul.f32 %v906, %v1002
        %v1177 = vmul.f32 %v952, %v1003
        %v1178 = vmul.f32 %v903, %v1004
        %v1179 = vmul.f32 %v949, %v1005
        %v1180 = vmul.f32 %v906, %v1004
        %v1181 = vmul.f32 %v952, %v1005
        %v1182 = vmul.f32 %v903, %v1006
        %v1183 = vmul.f32 %v949, %v1007
        %v1184 = vmul.f32 %v906, %v1006
        %v1185 = vmul.f32 %v952, %v1007
        %v1186 = vmul.f32 %v903, %v1008
        %v1187 = vmul.f32 %v949, %v1009
        %v1188 = vmul.f32 %v906, %v1008
        %v1189 = vmul.f32 %v952, %v1009
        %v1190 = vld [vmem:[%s2] sm:$0xff]
        %v1191 = vld [vmem:[%s2 + $0x8] sm:$0xff]
        %v1193 = vsel %vm572, %v1071, 0
        %v1196 = vsel %vm572, %v1073, 0
        %v1199 = vsel %vm572, %v1111, 0
        %v1202 = vsel %vm572, %v1113, 0
        %1204 = vmatpush.xpose.msra.mxu0 0.0
        %1205 = vmatpush.xpose.msra.mxu0 0.0
        %1206 = vmatpush.xpose.msra.mxu0 0.0
        %1207 = vmatpush.xpose.msra.mxu0 0.0
        %1208 = vmatpush.xpose.msra.mxu0 0.0
        %1209 = vmatpush.xpose.msra.mxu0 0.0
        %1210 = vmatpush.xpose.msra.mxu0 0.0
        %1211 = vmatpush.xpose.msra.mxu0 0.0
        %1212 = vmatpush.xpose.msra.mxu0 0.0
        %1213 = vmatpush.xpose.msra.mxu0 0.0
        %1214 = vmatpush.xpose.msra.mxu0 0.0
        %1215 = vmatpush.xpose.msra.mxu0 0.0
        %1216 = vmatpush.xpose.msra.mxu0 0.0
        %1217 = vmatpush.xpose.msra.mxu0 0.0
        %1218 = vmatpush.xpose.msra.mxu0 %v1112
        %1219 = vmatpush.xpose.msra.mxu0 %v1110
        %1220 = vmatmul.f32.gmra.mxu0 %v1070
        %v1221 = vpop.f32.mrf.mxu0
        %v1222 = vadd.f32 %v1190, %v1221
        %1223 = vmatmul.f32.gmra.mxu0 %v1072
        %v1224 = vpop.f32.mrf.mxu0
        %v1225 = vadd.f32 %v1191, %v1224
        %1226 = vdwg.mxu0
        %1227 = vmatpush.xpose.msra.mxu0 0.0
        %1228 = vmatpush.xpose.msra.mxu0 0.0
        %1229 = vmatpush.xpose.msra.mxu0 0.0
        %1230 = vmatpush.xpose.msra.mxu0 0.0
        %1231 = vmatpush.xpose.msra.mxu0 0.0
        %1232 = vmatpush.xpose.msra.mxu0 0.0
        %1233 = vmatpush.xpose.msra.mxu0 0.0
        %1234 = vmatpush.xpose.msra.mxu0 0.0
        %1235 = vmatpush.xpose.msra.mxu0 0.0
        %1236 = vmatpush.xpose.msra.mxu0 0.0
        %1237 = vmatpush.xpose.msra.mxu0 0.0
        %1238 = vmatpush.xpose.msra.mxu0 0.0
        %1239 = vmatpush.xpose.msra.mxu0 0.0
        %1240 = vmatpush.xpose.msra.mxu0 0.0
        %1241 = vmatpush.xpose.msra.mxu0 %v1202
        %1242 = vmatpush.xpose.msra.mxu0 %v1199
        %1243 = vmatmul.f32.gmra.mxu0 %v1193
        %v1244 = vpop.f32.mrf.mxu0
        %v1245 = vadd.f32 %v1222, %v1244
        %1246 = vmatmul.f32.gmra.mxu0 %v1196
        %v1247 = vpop.f32.mrf.mxu0
        %v1248 = vadd.f32 %v1225, %v1247
        %1249 = vdwg.mxu0
        %v1251 = vsel %vm572, %v1075, 0
        %v1254 = vsel %vm572, %v1077, 0
        %v1257 = vsel %vm572, %v1115, 0
        %v1260 = vsel %vm572, %v1117, 0
        %1262 = vmatpush.xpose.msra.mxu0 0.0
        %1263 = vmatpush.xpose.msra.mxu0 0.0
        %1264 = vmatpush.xpose.msra.mxu0 0.0
        %1265 = vmatpush.xpose.msra.mxu0 0.0
        %1266 = vmatpush.xpose.msra.mxu0 0.0
        %1267 = vmatpush.xpose.msra.mxu0 0.0
        %1268 = vmatpush.xpose.msra.mxu0 0.0
        %1269 = vmatpush.xpose.msra.mxu0 0.0
        %1270 = vmatpush.xpose.msra.mxu0 0.0
        %1271 = vmatpush.xpose.msra.mxu0 0.0
        %1272 = vmatpush.xpose.msra.mxu0 0.0
        %1273 = vmatpush.xpose.msra.mxu0 0.0
        %1274 = vmatpush.xpose.msra.mxu0 0.0
        %1275 = vmatpush.xpose.msra.mxu0 0.0
        %1276 = vmatpush.xpose.msra.mxu0 %v1116
        %1277 = vmatpush.xpose.msra.mxu0 %v1114
        %1278 = vmatmul.f32.gmra.mxu0 %v1074
        %v1279 = vpop.f32.mrf.mxu0
        %v1280 = vadd.f32 %v1190, %v1279
        %1281 = vmatmul.f32.gmra.mxu0 %v1076
        %v1282 = vpop.f32.mrf.mxu0
        %v1283 = vadd.f32 %v1191, %v1282
        %1284 = vdwg.mxu0
        %1285 = vmatpush.xpose.msra.mxu0 0.0
        %1286 = vmatpush.xpose.msra.mxu0 0.0
        %1287 = vmatpush.xpose.msra.mxu0 0.0
        %1288 = vmatpush.xpose.msra.mxu0 0.0
        %1289 = vmatpush.xpose.msra.mxu0 0.0
        %1290 = vmatpush.xpose.msra.mxu0 0.0
        %1291 = vmatpush.xpose.msra.mxu0 0.0
        %1292 = vmatpush.xpose.msra.mxu0 0.0
        %1293 = vmatpush.xpose.msra.mxu0 0.0
        %1294 = vmatpush.xpose.msra.mxu0 0.0
        %1295 = vmatpush.xpose.msra.mxu0 0.0
        %1296 = vmatpush.xpose.msra.mxu0 0.0
        %1297 = vmatpush.xpose.msra.mxu0 0.0
        %1298 = vmatpush.xpose.msra.mxu0 0.0
        %1299 = vmatpush.xpose.msra.mxu0 %v1260
        %1300 = vmatpush.xpose.msra.mxu0 %v1257
        %1301 = vmatmul.f32.gmra.mxu0 %v1251
        %v1302 = vpop.f32.mrf.mxu0
        %v1303 = vadd.f32 %v1280, %v1302
        %1304 = vmatmul.f32.gmra.mxu0 %v1254
        %v1305 = vpop.f32.mrf.mxu0
        %v1306 = vadd.f32 %v1283, %v1305
        %1307 = vdwg.mxu0
        %v1309 = vsel %vm572, %v1079, 0
        %v1312 = vsel %vm572, %v1081, 0
        %v1315 = vsel %vm572, %v1119, 0
        %v1318 = vsel %vm572, %v1121, 0
        %1320 = vmatpush.xpose.msra.mxu0 0.0
        %1321 = vmatpush.xpose.msra.mxu0 0.0
        %1322 = vmatpush.xpose.msra.mxu0 0.0
        %1323 = vmatpush.xpose.msra.mxu0 0.0
        %1324 = vmatpush.xpose.msra.mxu0 0.0
        %1325 = vmatpush.xpose.msra.mxu0 0.0
        %1326 = vmatpush.xpose.msra.mxu0 0.0
        %1327 = vmatpush.xpose.msra.mxu0 0.0
        %1328 = vmatpush.xpose.msra.mxu0 0.0
        %1329 = vmatpush.xpose.msra.mxu0 0.0
        %1330 = vmatpush.xpose.msra.mxu0 0.0
        %1331 = vmatpush.xpose.msra.mxu0 0.0
        %1332 = vmatpush.xpose.msra.mxu0 0.0
        %1333 = vmatpush.xpose.msra.mxu0 0.0
        %1334 = vmatpush.xpose.msra.mxu0 %v1120
        %1335 = vmatpush.xpose.msra.mxu0 %v1118
        %1336 = vmatmul.f32.gmra.mxu0 %v1078
        %v1337 = vpop.f32.mrf.mxu0
        %v1338 = vadd.f32 %v1190, %v1337
        %1339 = vmatmul.f32.gmra.mxu0 %v1080
        %v1340 = vpop.f32.mrf.mxu0
        %v1341 = vadd.f32 %v1191, %v1340
        %1342 = vdwg.mxu0
        %1343 = vmatpush.xpose.msra.mxu0 0.0
        %1344 = vmatpush.xpose.msra.mxu0 0.0
        %1345 = vmatpush.xpose.msra.mxu0 0.0
        %1346 = vmatpush.xpose.msra.mxu0 0.0
        %1347 = vmatpush.xpose.msra.mxu0 0.0
        %1348 = vmatpush.xpose.msra.mxu0 0.0
        %1349 = vmatpush.xpose.msra.mxu0 0.0
        %1350 = vmatpush.xpose.msra.mxu0 0.0
        %1351 = vmatpush.xpose.msra.mxu0 0.0
        %1352 = vmatpush.xpose.msra.mxu0 0.0
        %1353 = vmatpush.xpose.msra.mxu0 0.0
        %1354 = vmatpush.xpose.msra.mxu0 0.0
        %1355 = vmatpush.xpose.msra.mxu0 0.0
        %1356 = vmatpush.xpose.msra.mxu0 0.0
        %1357 = vmatpush.xpose.msra.mxu0 %v1318
        %1358 = vmatpush.xpose.msra.mxu0 %v1315
        %1359 = vmatmul.f32.gmra.mxu0 %v1309
        %v1360 = vpop.f32.mrf.mxu0
        %v1361 = vadd.f32 %v1338, %v1360
        %1362 = vmatmul.f32.gmra.mxu0 %v1312
        %v1363 = vpop.f32.mrf.mxu0
        %v1364 = vadd.f32 %v1341, %v1363
        %1365 = vdwg.mxu0
        %v1367 = vsel %vm572, %v1083, 0
        %v1370 = vsel %vm572, %v1085, 0
        %v1373 = vsel %vm572, %v1123, 0
        %v1376 = vsel %vm572, %v1125, 0
        %1378 = vmatpush.xpose.msra.mxu0 0.0
        %1379 = vmatpush.xpose.msra.mxu0 0.0
        %1380 = vmatpush.xpose.msra.mxu0 0.0
        %1381 = vmatpush.xpose.msra.mxu0 0.0
        %1382 = vmatpush.xpose.msra.mxu0 0.0
        %1383 = vmatpush.xpose.msra.mxu0 0.0
        %1384 = vmatpush.xpose.msra.mxu0 0.0
        %1385 = vmatpush.xpose.msra.mxu0 0.0
        %1386 = vmatpush.xpose.msra.mxu0 0.0
        %1387 = vmatpush.xpose.msra.mxu0 0.0
        %1388 = vmatpush.xpose.msra.mxu0 0.0
        %1389 = vmatpush.xpose.msra.mxu0 0.0
        %1390 = vmatpush.xpose.msra.mxu0 0.0
        %1391 = vmatpush.xpose.msra.mxu0 0.0
        %1392 = vmatpush.xpose.msra.mxu0 %v1124
        %1393 = vmatpush.xpose.msra.mxu0 %v1122
        %1394 = vmatmul.f32.gmra.mxu0 %v1082
        %v1395 = vpop.f32.mrf.mxu0
        %v1396 = vadd.f32 %v1190, %v1395
        %1397 = vmatmul.f32.gmra.mxu0 %v1084
        %v1398 = vpop.f32.mrf.mxu0
        %v1399 = vadd.f32 %v1191, %v1398
        %1400 = vdwg.mxu0
        %1401 = vmatpush.xpose.msra.mxu0 0.0
        %1402 = vmatpush.xpose.msra.mxu0 0.0
        %1403 = vmatpush.xpose.msra.mxu0 0.0
        %1404 = vmatpush.xpose.msra.mxu0 0.0
        %1405 = vmatpush.xpose.msra.mxu0 0.0
        %1406 = vmatpush.xpose.msra.mxu0 0.0
        %1407 = vmatpush.xpose.msra.mxu0 0.0
        %1408 = vmatpush.xpose.msra.mxu0 0.0
        %1409 = vmatpush.xpose.msra.mxu0 0.0
        %1410 = vmatpush.xpose.msra.mxu0 0.0
        %1411 = vmatpush.xpose.msra.mxu0 0.0
        %1412 = vmatpush.xpose.msra.mxu0 0.0
        %1413 = vmatpush.xpose.msra.mxu0 0.0
        %1414 = vmatpush.xpose.msra.mxu0 0.0
        %1415 = vmatpush.xpose.msra.mxu0 %v1376
        %1416 = vmatpush.xpose.msra.mxu0 %v1373
        %1417 = vmatmul.f32.gmra.mxu0 %v1367
        %v1418 = vpop.f32.mrf.mxu0
        %v1419 = vadd.f32 %v1396, %v1418
        %1420 = vmatmul.f32.gmra.mxu0 %v1370
        %v1421 = vpop.f32.mrf.mxu0
        %v1422 = vadd.f32 %v1399, %v1421
        %1423 = vdwg.mxu0
        %v1425 = vsel %vm572, %v1087, 0
        %v1428 = vsel %vm572, %v1089, 0
        %v1431 = vsel %vm572, %v1127, 0
        %v1434 = vsel %vm572, %v1129, 0
        %1436 = vmatpush.xpose.msra.mxu0 0.0
        %1437 = vmatpush.xpose.msra.mxu0 0.0
        %1438 = vmatpush.xpose.msra.mxu0 0.0
        %1439 = vmatpush.xpose.msra.mxu0 0.0
        %1440 = vmatpush.xpose.msra.mxu0 0.0
        %1441 = vmatpush.xpose.msra.mxu0 0.0
        %1442 = vmatpush.xpose.msra.mxu0 0.0
        %1443 = vmatpush.xpose.msra.mxu0 0.0
        %1444 = vmatpush.xpose.msra.mxu0 0.0
        %1445 = vmatpush.xpose.msra.mxu0 0.0
        %1446 = vmatpush.xpose.msra.mxu0 0.0
        %1447 = vmatpush.xpose.msra.mxu0 0.0
        %1448 = vmatpush.xpose.msra.mxu0 0.0
        %1449 = vmatpush.xpose.msra.mxu0 0.0
        %1450 = vmatpush.xpose.msra.mxu0 %v1128
        %1451 = vmatpush.xpose.msra.mxu0 %v1126
        %1452 = vmatmul.f32.gmra.mxu0 %v1086
        %v1453 = vpop.f32.mrf.mxu0
        %v1454 = vadd.f32 %v1190, %v1453
        %1455 = vmatmul.f32.gmra.mxu0 %v1088
        %v1456 = vpop.f32.mrf.mxu0
        %v1457 = vadd.f32 %v1191, %v1456
        %1458 = vdwg.mxu0
        %1459 = vmatpush.xpose.msra.mxu0 0.0
        %1460 = vmatpush.xpose.msra.mxu0 0.0
        %1461 = vmatpush.xpose.msra.mxu0 0.0
        %1462 = vmatpush.xpose.msra.mxu0 0.0
        %1463 = vmatpush.xpose.msra.mxu0 0.0
        %1464 = vmatpush.xpose.msra.mxu0 0.0
        %1465 = vmatpush.xpose.msra.mxu0 0.0
        %1466 = vmatpush.xpose.msra.mxu0 0.0
        %1467 = vmatpush.xpose.msra.mxu0 0.0
        %1468 = vmatpush.xpose.msra.mxu0 0.0
        %1469 = vmatpush.xpose.msra.mxu0 0.0
        %1470 = vmatpush.xpose.msra.mxu0 0.0
        %1471 = vmatpush.xpose.msra.mxu0 0.0
        %1472 = vmatpush.xpose.msra.mxu0 0.0
        %1473 = vmatpush.xpose.msra.mxu0 %v1434
        %1474 = vmatpush.xpose.msra.mxu0 %v1431
        %1475 = vmatmul.f32.gmra.mxu0 %v1425
        %v1476 = vpop.f32.mrf.mxu0
        %v1477 = vadd.f32 %v1454, %v1476
        %1478 = vmatmul.f32.gmra.mxu0 %v1428
        %v1479 = vpop.f32.mrf.mxu0
        %v1480 = vadd.f32 %v1457, %v1479
        %1481 = vdwg.mxu0
        %v1483 = vsel %vm572, %v1091, 0
        %v1486 = vsel %vm572, %v1093, 0
        %v1489 = vsel %vm572, %v1131, 0
        %v1492 = vsel %vm572, %v1133, 0
        %1494 = vmatpush.xpose.msra.mxu0 0.0
        %1495 = vmatpush.xpose.msra.mxu0 0.0
        %1496 = vmatpush.xpose.msra.mxu0 0.0
        %1497 = vmatpush.xpose.msra.mxu0 0.0
        %1498 = vmatpush.xpose.msra.mxu0 0.0
        %1499 = vmatpush.xpose.msra.mxu0 0.0
        %1500 = vmatpush.xpose.msra.mxu0 0.0
        %1501 = vmatpush.xpose.msra.mxu0 0.0
        %1502 = vmatpush.xpose.msra.mxu0 0.0
        %1503 = vmatpush.xpose.msra.mxu0 0.0
        %1504 = vmatpush.xpose.msra.mxu0 0.0
        %1505 = vmatpush.xpose.msra.mxu0 0.0
        %1506 = vmatpush.xpose.msra.mxu0 0.0
        %1507 = vmatpush.xpose.msra.mxu0 0.0
        %1508 = vmatpush.xpose.msra.mxu0 %v1132
        %1509 = vmatpush.xpose.msra.mxu0 %v1130
        %1510 = vmatmul.f32.gmra.mxu0 %v1090
        %v1511 = vpop.f32.mrf.mxu0
        %v1512 = vadd.f32 %v1190, %v1511
        %1513 = vmatmul.f32.gmra.mxu0 %v1092
        %v1514 = vpop.f32.mrf.mxu0
        %v1515 = vadd.f32 %v1191, %v1514
        %1516 = vdwg.mxu0
        %1517 = vmatpush.xpose.msra.mxu0 0.0
        %1518 = vmatpush.xpose.msra.mxu0 0.0
        %1519 = vmatpush.xpose.msra.mxu0 0.0
        %1520 = vmatpush.xpose.msra.mxu0 0.0
        %1521 = vmatpush.xpose.msra.mxu0 0.0
        %1522 = vmatpush.xpose.msra.mxu0 0.0
        %1523 = vmatpush.xpose.msra.mxu0 0.0
        %1524 = vmatpush.xpose.msra.mxu0 0.0
        %1525 = vmatpush.xpose.msra.mxu0 0.0
        %1526 = vmatpush.xpose.msra.mxu0 0.0
        %1527 = vmatpush.xpose.msra.mxu0 0.0
        %1528 = vmatpush.xpose.msra.mxu0 0.0
        %1529 = vmatpush.xpose.msra.mxu0 0.0
        %1530 = vmatpush.xpose.msra.mxu0 0.0
        %1531 = vmatpush.xpose.msra.mxu0 %v1492
        %1532 = vmatpush.xpose.msra.mxu0 %v1489
        %1533 = vmatmul.f32.gmra.mxu0 %v1483
        %v1534 = vpop.f32.mrf.mxu0
        %v1535 = vadd.f32 %v1512, %v1534
        %1536 = vmatmul.f32.gmra.mxu0 %v1486
        %v1537 = vpop.f32.mrf.mxu0
        %v1538 = vadd.f32 %v1515, %v1537
        %1539 = vdwg.mxu0
        %v1541 = vsel %vm572, %v1095, 0
        %v1544 = vsel %vm572, %v1097, 0
        %v1547 = vsel %vm572, %v1135, 0
        %v1550 = vsel %vm572, %v1137, 0
        %1552 = vmatpush.xpose.msra.mxu0 0.0
        %1553 = vmatpush.xpose.msra.mxu0 0.0
        %1554 = vmatpush.xpose.msra.mxu0 0.0
        %1555 = vmatpush.xpose.msra.mxu0 0.0
        %1556 = vmatpush.xpose.msra.mxu0 0.0
        %1557 = vmatpush.xpose.msra.mxu0 0.0
        %1558 = vmatpush.xpose.msra.mxu0 0.0
        %1559 = vmatpush.xpose.msra.mxu0 0.0
        %1560 = vmatpush.xpose.msra.mxu0 0.0
        %1561 = vmatpush.xpose.msra.mxu0 0.0
        %1562 = vmatpush.xpose.msra.mxu0 0.0
        %1563 = vmatpush.xpose.msra.mxu0 0.0
        %1564 = vmatpush.xpose.msra.mxu0 0.0
        %1565 = vmatpush.xpose.msra.mxu0 0.0
        %1566 = vmatpush.xpose.msra.mxu0 %v1136
        %1567 = vmatpush.xpose.msra.mxu0 %v1134
        %1568 = vmatmul.f32.gmra.mxu0 %v1094
        %v1569 = vpop.f32.mrf.mxu0
        %v1570 = vadd.f32 %v1190, %v1569
        %1571 = vmatmul.f32.gmra.mxu0 %v1096
        %v1572 = vpop.f32.mrf.mxu0
        %v1573 = vadd.f32 %v1191, %v1572
        %1574 = vdwg.mxu0
        %1575 = vmatpush.xpose.msra.mxu0 0.0
        %1576 = vmatpush.xpose.msra.mxu0 0.0
        %1577 = vmatpush.xpose.msra.mxu0 0.0
        %1578 = vmatpush.xpose.msra.mxu0 0.0
        %1579 = vmatpush.xpose.msra.mxu0 0.0
        %1580 = vmatpush.xpose.msra.mxu0 0.0
        %1581 = vmatpush.xpose.msra.mxu0 0.0
        %1582 = vmatpush.xpose.msra.mxu0 0.0
        %1583 = vmatpush.xpose.msra.mxu0 0.0
        %1584 = vmatpush.xpose.msra.mxu0 0.0
        %1585 = vmatpush.xpose.msra.mxu0 0.0
        %1586 = vmatpush.xpose.msra.mxu0 0.0
        %1587 = vmatpush.xpose.msra.mxu0 0.0
        %1588 = vmatpush.xpose.msra.mxu0 0.0
        %1589 = vmatpush.xpose.msra.mxu0 %v1550
        %1590 = vmatpush.xpose.msra.mxu0 %v1547
        %1591 = vmatmul.f32.gmra.mxu0 %v1541
        %v1592 = vpop.f32.mrf.mxu0
        %v1593 = vadd.f32 %v1570, %v1592
        %1594 = vmatmul.f32.gmra.mxu0 %v1544
        %v1595 = vpop.f32.mrf.mxu0
        %v1596 = vadd.f32 %v1573, %v1595
        %1597 = vdwg.mxu0
        %v1599 = vsel %vm572, %v1099, 0
        %v1602 = vsel %vm572, %v1101, 0
        %v1605 = vsel %vm572, %v1139, 0
        %v1608 = vsel %vm572, %v1141, 0
        %1610 = vmatpush.xpose.msra.mxu0 0.0
        %1611 = vmatpush.xpose.msra.mxu0 0.0
        %1612 = vmatpush.xpose.msra.mxu0 0.0
        %1613 = vmatpush.xpose.msra.mxu0 0.0
        %1614 = vmatpush.xpose.msra.mxu0 0.0
        %1615 = vmatpush.xpose.msra.mxu0 0.0
        %1616 = vmatpush.xpose.msra.mxu0 0.0
        %1617 = vmatpush.xpose.msra.mxu0 0.0
        %1618 = vmatpush.xpose.msra.mxu0 0.0
        %1619 = vmatpush.xpose.msra.mxu0 0.0
        %1620 = vmatpush.xpose.msra.mxu0 0.0
        %1621 = vmatpush.xpose.msra.mxu0 0.0
        %1622 = vmatpush.xpose.msra.mxu0 0.0
        %1623 = vmatpush.xpose.msra.mxu0 0.0
        %1624 = vmatpush.xpose.msra.mxu0 %v1140
        %1625 = vmatpush.xpose.msra.mxu0 %v1138
        %1626 = vmatmul.f32.gmra.mxu0 %v1098
        %v1627 = vpop.f32.mrf.mxu0
        %v1628 = vadd.f32 %v1190, %v1627
        %1629 = vmatmul.f32.gmra.mxu0 %v1100
        %v1630 = vpop.f32.mrf.mxu0
        %v1631 = vadd.f32 %v1191, %v1630
        %1632 = vdwg.mxu0
        %1633 = vmatpush.xpose.msra.mxu0 0.0
        %1634 = vmatpush.xpose.msra.mxu0 0.0
        %1635 = vmatpush.xpose.msra.mxu0 0.0
        %1636 = vmatpush.xpose.msra.mxu0 0.0
        %1637 = vmatpush.xpose.msra.mxu0 0.0
        %1638 = vmatpush.xpose.msra.mxu0 0.0
        %1639 = vmatpush.xpose.msra.mxu0 0.0
        %1640 = vmatpush.xpose.msra.mxu0 0.0
        %1641 = vmatpush.xpose.msra.mxu0 0.0
        %1642 = vmatpush.xpose.msra.mxu0 0.0
        %1643 = vmatpush.xpose.msra.mxu0 0.0
        %1644 = vmatpush.xpose.msra.mxu0 0.0
        %1645 = vmatpush.xpose.msra.mxu0 0.0
        %1646 = vmatpush.xpose.msra.mxu0 0.0
        %1647 = vmatpush.xpose.msra.mxu0 %v1608
        %1648 = vmatpush.xpose.msra.mxu0 %v1605
        %1649 = vmatmul.f32.gmra.mxu0 %v1599
        %v1650 = vpop.f32.mrf.mxu0
        %v1651 = vadd.f32 %v1628, %v1650
        %1652 = vmatmul.f32.gmra.mxu0 %v1602
        %v1653 = vpop.f32.mrf.mxu0
        %v1654 = vadd.f32 %v1631, %v1653
        %1655 = vdwg.mxu0
        %v1657 = vsel %vm572, %v1103, 0
        %v1660 = vsel %vm572, %v1105, 0
        %v1663 = vsel %vm572, %v1143, 0
        %v1666 = vsel %vm572, %v1145, 0
        %1668 = vmatpush.xpose.msra.mxu0 0.0
        %1669 = vmatpush.xpose.msra.mxu0 0.0
        %1670 = vmatpush.xpose.msra.mxu0 0.0
        %1671 = vmatpush.xpose.msra.mxu0 0.0
        %1672 = vmatpush.xpose.msra.mxu0 0.0
        %1673 = vmatpush.xpose.msra.mxu0 0.0
        %1674 = vmatpush.xpose.msra.mxu0 0.0
        %1675 = vmatpush.xpose.msra.mxu0 0.0
        %1676 = vmatpush.xpose.msra.mxu0 0.0
        %1677 = vmatpush.xpose.msra.mxu0 0.0
        %1678 = vmatpush.xpose.msra.mxu0 0.0
        %1679 = vmatpush.xpose.msra.mxu0 0.0
        %1680 = vmatpush.xpose.msra.mxu0 0.0
        %1681 = vmatpush.xpose.msra.mxu0 0.0
        %1682 = vmatpush.xpose.msra.mxu0 %v1144
        %1683 = vmatpush.xpose.msra.mxu0 %v1142
        %1684 = vmatmul.f32.gmra.mxu0 %v1102
        %v1685 = vpop.f32.mrf.mxu0
        %v1686 = vadd.f32 %v1190, %v1685
        %1687 = vmatmul.f32.gmra.mxu0 %v1104
        %v1688 = vpop.f32.mrf.mxu0
        %v1689 = vadd.f32 %v1191, %v1688
        %1690 = vdwg.mxu0
        %1691 = vmatpush.xpose.msra.mxu0 0.0
        %1692 = vmatpush.xpose.msra.mxu0 0.0
        %1693 = vmatpush.xpose.msra.mxu0 0.0
        %1694 = vmatpush.xpose.msra.mxu0 0.0
        %1695 = vmatpush.xpose.msra.mxu0 0.0
        %1696 = vmatpush.xpose.msra.mxu0 0.0
        %1697 = vmatpush.xpose.msra.mxu0 0.0
        %1698 = vmatpush.xpose.msra.mxu0 0.0
        %1699 = vmatpush.xpose.msra.mxu0 0.0
        %1700 = vmatpush.xpose.msra.mxu0 0.0
        %1701 = vmatpush.xpose.msra.mxu0 0.0
        %1702 = vmatpush.xpose.msra.mxu0 0.0
        %1703 = vmatpush.xpose.msra.mxu0 0.0
        %1704 = vmatpush.xpose.msra.mxu0 0.0
        %1705 = vmatpush.xpose.msra.mxu0 %v1666
        %1706 = vmatpush.xpose.msra.mxu0 %v1663
        %1707 = vmatmul.f32.gmra.mxu0 %v1657
        %v1708 = vpop.f32.mrf.mxu0
        %v1709 = vadd.f32 %v1686, %v1708
        %1710 = vmatmul.f32.gmra.mxu0 %v1660
        %v1711 = vpop.f32.mrf.mxu0
        %v1712 = vadd.f32 %v1689, %v1711
        %1713 = vdwg.mxu0
        %v1715 = vsel %vm572, %v1107, 0
        %v1718 = vsel %vm572, %v1109, 0
        %v1721 = vsel %vm572, %v1147, 0
        %v1724 = vsel %vm572, %v1149, 0
        %1726 = vmatpush.xpose.msra.mxu0 0.0
        %1727 = vmatpush.xpose.msra.mxu0 0.0
        %1728 = vmatpush.xpose.msra.mxu0 0.0
        %1729 = vmatpush.xpose.msra.mxu0 0.0
        %1730 = vmatpush.xpose.msra.mxu0 0.0
        %1731 = vmatpush.xpose.msra.mxu0 0.0
        %1732 = vmatpush.xpose.msra.mxu0 0.0
        %1733 = vmatpush.xpose.msra.mxu0 0.0
        %1734 = vmatpush.xpose.msra.mxu0 0.0
        %1735 = vmatpush.xpose.msra.mxu0 0.0
        %1736 = vmatpush.xpose.msra.mxu0 0.0
        %1737 = vmatpush.xpose.msra.mxu0 0.0
        %1738 = vmatpush.xpose.msra.mxu0 0.0
        %1739 = vmatpush.xpose.msra.mxu0 0.0
        %1740 = vmatpush.xpose.msra.mxu0 %v1148
        %1741 = vmatpush.xpose.msra.mxu0 %v1146
        %1742 = vmatmul.f32.gmra.mxu0 %v1106
        %v1743 = vpop.f32.mrf.mxu0
        %v1744 = vadd.f32 %v1190, %v1743
        %1745 = vmatmul.f32.gmra.mxu0 %v1108
        %v1746 = vpop.f32.mrf.mxu0
        %v1747 = vadd.f32 %v1191, %v1746
        %1748 = vdwg.mxu0
        %1749 = vmatpush.xpose.msra.mxu0 0.0
        %1750 = vmatpush.xpose.msra.mxu0 0.0
        %1751 = vmatpush.xpose.msra.mxu0 0.0
        %1752 = vmatpush.xpose.msra.mxu0 0.0
        %1753 = vmatpush.xpose.msra.mxu0 0.0
        %1754 = vmatpush.xpose.msra.mxu0 0.0
        %1755 = vmatpush.xpose.msra.mxu0 0.0
        %1756 = vmatpush.xpose.msra.mxu0 0.0
        %1757 = vmatpush.xpose.msra.mxu0 0.0
        %1758 = vmatpush.xpose.msra.mxu0 0.0
        %1759 = vmatpush.xpose.msra.mxu0 0.0
        %1760 = vmatpush.xpose.msra.mxu0 0.0
        %1761 = vmatpush.xpose.msra.mxu0 0.0
        %1762 = vmatpush.xpose.msra.mxu0 0.0
        %1763 = vmatpush.xpose.msra.mxu0 %v1724
        %1764 = vmatpush.xpose.msra.mxu0 %v1721
        %1765 = vmatmul.f32.gmra.mxu0 %v1715
        %v1766 = vpop.f32.mrf.mxu0
        %v1767 = vadd.f32 %v1744, %v1766
        %1768 = vmatmul.f32.gmra.mxu0 %v1718
        %v1769 = vpop.f32.mrf.mxu0
        %v1770 = vadd.f32 %v1747, %v1769
        %1771 = vdwg.mxu0
        %vm1772 = vcmask 130048
        %v1773 = vsel %vm1772, %v1245, -inf
        %1774 = vmax.xlane.f32.xlu0 %v1773
        %v1775 = vpop.xlane.xlu0 %1774
        %v1776 = vsel %vm1772, %v1248, -inf
        %1777 = vmax.xlane.f32.xlu0 %v1776
        %v1778 = vpop.xlane.xlu0 %1777
        %v1779 = vsel %vm1772, %v1303, -inf
        %1780 = vmax.xlane.f32.xlu0 %v1779
        %v1781 = vpop.xlane.xlu0 %1780
        %v1782 = vsel %vm1772, %v1306, -inf
        %1783 = vmax.xlane.f32.xlu0 %v1782
        %v1784 = vpop.xlane.xlu0 %1783
        %v1785 = vsel %vm1772, %v1361, -inf
        %1786 = vmax.xlane.f32.xlu0 %v1785
        %v1787 = vpop.xlane.xlu0 %1786
        %v1788 = vsel %vm1772, %v1364, -inf
        %1789 = vmax.xlane.f32.xlu0 %v1788
        %v1790 = vpop.xlane.xlu0 %1789
        %v1791 = vsel %vm1772, %v1419, -inf
        %1792 = vmax.xlane.f32.xlu0 %v1791
        %v1793 = vpop.xlane.xlu0 %1792
        %v1794 = vsel %vm1772, %v1422, -inf
        %1795 = vmax.xlane.f32.xlu0 %v1794
        %v1796 = vpop.xlane.xlu0 %1795
        %v1797 = vsel %vm1772, %v1477, -inf
        %1798 = vmax.xlane.f32.xlu0 %v1797
        %v1799 = vpop.xlane.xlu0 %1798
        %v1800 = vsel %vm1772, %v1480, -inf
        %1801 = vmax.xlane.f32.xlu0 %v1800
        %v1802 = vpop.xlane.xlu0 %1801
        %v1803 = vsel %vm1772, %v1535, -inf
        %1804 = vmax.xlane.f32.xlu0 %v1803
        %v1805 = vpop.xlane.xlu0 %1804
        %v1806 = vsel %vm1772, %v1538, -inf
        %1807 = vmax.xlane.f32.xlu0 %v1806
        %v1808 = vpop.xlane.xlu0 %1807
        %v1809 = vsel %vm1772, %v1593, -inf
        %1810 = vmax.xlane.f32.xlu0 %v1809
        %v1811 = vpop.xlane.xlu0 %1810
        %v1812 = vsel %vm1772, %v1596, -inf
        %1813 = vmax.xlane.f32.xlu0 %v1812
        %v1814 = vpop.xlane.xlu0 %1813
        %v1815 = vsel %vm1772, %v1651, -inf
        %1816 = vmax.xlane.f32.xlu0 %v1815
        %v1817 = vpop.xlane.xlu0 %1816
        %v1818 = vsel %vm1772, %v1654, -inf
        %1819 = vmax.xlane.f32.xlu0 %v1818
        %v1820 = vpop.xlane.xlu0 %1819
        %v1821 = vsel %vm1772, %v1709, -inf
        %1822 = vmax.xlane.f32.xlu0 %v1821
        %v1823 = vpop.xlane.xlu0 %1822
        %v1824 = vsel %vm1772, %v1712, -inf
        %1825 = vmax.xlane.f32.xlu0 %v1824
        %v1826 = vpop.xlane.xlu0 %1825
        %v1827 = vsel %vm1772, %v1767, -inf
        %1828 = vmax.xlane.f32.xlu0 %v1827
        %v1829 = vpop.xlane.xlu0 %1828
        %v1830 = vsel %vm1772, %v1770, -inf
        %1831 = vmax.xlane.f32.xlu0 %v1830
        %v1832 = vpop.xlane.xlu0 %1831
        %v1833 = vsub.f32 %v1245, %v1775
        %v1834 = vsub.f32 %v1248, %v1778
        %v1835 = vsub.f32 %v1303, %v1781
        %v1836 = vsub.f32 %v1306, %v1784
        %v1837 = vsub.f32 %v1361, %v1787
        %v1838 = vsub.f32 %v1364, %v1790
        %v1839 = vsub.f32 %v1419, %v1793
        %v1840 = vsub.f32 %v1422, %v1796
        %v1841 = vsub.f32 %v1477, %v1799
        %v1842 = vsub.f32 %v1480, %v1802
        %v1843 = vsub.f32 %v1535, %v1805
        %v1844 = vsub.f32 %v1538, %v1808
        %v1845 = vsub.f32 %v1593, %v1811
        %v1846 = vsub.f32 %v1596, %v1814
        %v1847 = vsub.f32 %v1651, %v1817
        %v1848 = vsub.f32 %v1654, %v1820
        %v1849 = vsub.f32 %v1709, %v1823
        %v1850 = vsub.f32 %v1712, %v1826
        %v1851 = vsub.f32 %v1767, %v1829
        %v1852 = vsub.f32 %v1770, %v1832
        %v1853 = vmul.f32 %v1833, 1.442695
        %v1854 = vpow.pop %v1853
        %v1855 = vmul.f32 %v1834, 1.442695
        %v1856 = vpow.pop %v1855
        %v1857 = vmul.f32 %v1835, 1.442695
        %v1858 = vpow.pop %v1857
        %v1859 = vmul.f32 %v1836, 1.442695
        %v1860 = vpow.pop %v1859
        %v1861 = vmul.f32 %v1837, 1.442695
        %v1862 = vpow.pop %v1861
        %v1863 = vmul.f32 %v1838, 1.442695
        %v1864 = vpow.pop %v1863
        %v1865 = vmul.f32 %v1839, 1.442695
        %v1866 = vpow.pop %v1865
        %v1867 = vmul.f32 %v1840, 1.442695
        %v1868 = vpow.pop %v1867
        %v1869 = vmul.f32 %v1841, 1.442695
        %v1870 = vpow.pop %v1869
        %v1871 = vmul.f32 %v1842, 1.442695
        %v1872 = vpow.pop %v1871
        %v1873 = vmul.f32 %v1843, 1.442695
        %v1874 = vpow.pop %v1873
        %v1875 = vmul.f32 %v1844, 1.442695
        %v1876 = vpow.pop %v1875
        %v1877 = vmul.f32 %v1845, 1.442695
        %v1878 = vpow.pop %v1877
        %v1879 = vmul.f32 %v1846, 1.442695
        %v1880 = vpow.pop %v1879
        %v1881 = vmul.f32 %v1847, 1.442695
        %v1882 = vpow.pop %v1881
        %v1883 = vmul.f32 %v1848, 1.442695
        %v1884 = vpow.pop %v1883
        %v1885 = vmul.f32 %v1849, 1.442695
        %v1886 = vpow.pop %v1885
        %v1887 = vmul.f32 %v1850, 1.442695
        %v1888 = vpow.pop %v1887
        %v1889 = vmul.f32 %v1851, 1.442695
        %v1890 = vpow.pop %v1889
        %v1891 = vmul.f32 %v1852, 1.442695
        %v1892 = vpow.pop %v1891
        %v1893 = vsel %vm1772, %v1854, 0.0
        %1894 = vadd.xlane.f32.xlu0 %v1893
        %v1895 = vpop.xlane.xlu0 %1894
        %v1896 = vsel %vm1772, %v1856, 0.0
        %1897 = vadd.xlane.f32.xlu0 %v1896
        %v1898 = vpop.xlane.xlu0 %1897
        %v1899 = vsel %vm1772, %v1858, 0.0
        %1900 = vadd.xlane.f32.xlu0 %v1899
        %v1901 = vpop.xlane.xlu0 %1900
        %v1902 = vsel %vm1772, %v1860, 0.0
        %1903 = vadd.xlane.f32.xlu0 %v1902
        %v1904 = vpop.xlane.xlu0 %1903
        %v1905 = vsel %vm1772, %v1862, 0.0
        %1906 = vadd.xlane.f32.xlu0 %v1905
        %v1907 = vpop.xlane.xlu0 %1906
        %v1908 = vsel %vm1772, %v1864, 0.0
        %1909 = vadd.xlane.f32.xlu0 %v1908
        %v1910 = vpop.xlane.xlu0 %1909
        %v1911 = vsel %vm1772, %v1866, 0.0
        %1912 = vadd.xlane.f32.xlu0 %v1911
        %v1913 = vpop.xlane.xlu0 %1912
        %v1914 = vsel %vm1772, %v1868, 0.0
        %1915 = vadd.xlane.f32.xlu0 %v1914
        %v1916 = vpop.xlane.xlu0 %1915
        %v1917 = vsel %vm1772, %v1870, 0.0
        %1918 = vadd.xlane.f32.xlu0 %v1917
        %v1919 = vpop.xlane.xlu0 %1918
        %v1920 = vsel %vm1772, %v1872, 0.0
        %1921 = vadd.xlane.f32.xlu0 %v1920
        %v1922 = vpop.xlane.xlu0 %1921
        %v1923 = vsel %vm1772, %v1874, 0.0
        %1924 = vadd.xlane.f32.xlu0 %v1923
        %v1925 = vpop.xlane.xlu0 %1924
        %v1926 = vsel %vm1772, %v1876, 0.0
        %1927 = vadd.xlane.f32.xlu0 %v1926
        %v1928 = vpop.xlane.xlu0 %1927
        %v1929 = vsel %vm1772, %v1878, 0.0
        %1930 = vadd.xlane.f32.xlu0 %v1929
        %v1931 = vpop.xlane.xlu0 %1930
        %v1932 = vsel %vm1772, %v1880, 0.0
        %1933 = vadd.xlane.f32.xlu0 %v1932
        %v1934 = vpop.xlane.xlu0 %1933
        %v1935 = vsel %vm1772, %v1882, 0.0
        %1936 = vadd.xlane.f32.xlu0 %v1935
        %v1937 = vpop.xlane.xlu0 %1936
        %v1938 = vsel %vm1772, %v1884, 0.0
        %1939 = vadd.xlane.f32.xlu0 %v1938
        %v1940 = vpop.xlane.xlu0 %1939
        %v1941 = vsel %vm1772, %v1886, 0.0
        %1942 = vadd.xlane.f32.xlu0 %v1941
        %v1943 = vpop.xlane.xlu0 %1942
        %v1944 = vsel %vm1772, %v1888, 0.0
        %1945 = vadd.xlane.f32.xlu0 %v1944
        %v1946 = vpop.xlane.xlu0 %1945
        %v1947 = vsel %vm1772, %v1890, 0.0
        %1948 = vadd.xlane.f32.xlu0 %v1947
        %v1949 = vpop.xlane.xlu0 %1948
        %v1950 = vsel %vm1772, %v1892, 0.0
        %1951 = vadd.xlane.f32.xlu0 %v1950
        %v1952 = vpop.xlane.xlu0 %1951
        %v1953 = vrcp.pop %v1895
        %v1954 = vrcp.pop %v1898
        %v1955 = vrcp.pop %v1901
        %v1956 = vrcp.pop %v1904
        %v1957 = vrcp.pop %v1907
        %v1958 = vrcp.pop %v1910
        %v1959 = vrcp.pop %v1913
        %v1960 = vrcp.pop %v1916
        %v1961 = vrcp.pop %v1919
        %v1962 = vrcp.pop %v1922
        %v1963 = vrcp.pop %v1925
        %v1964 = vrcp.pop %v1928
        %v1965 = vrcp.pop %v1931
        %v1966 = vrcp.pop %v1934
        %v1967 = vrcp.pop %v1937
        %v1968 = vrcp.pop %v1940
        %v1969 = vrcp.pop %v1943
        %v1970 = vrcp.pop %v1946
        %v1971 = vrcp.pop %v1949
        %v1972 = vrcp.pop %v1952
        %v1973 = vmul.f32 %v1854, %v1953
        %v1974 = vmul.f32 %v1856, %v1954
        %v1975 = vmul.f32 %v1858, %v1955
        %v1976 = vmul.f32 %v1860, %v1956
        %v1977 = vmul.f32 %v1862, %v1957
        %v1978 = vmul.f32 %v1864, %v1958
        %v1979 = vmul.f32 %v1866, %v1959
        %v1980 = vmul.f32 %v1868, %v1960
        %v1981 = vmul.f32 %v1870, %v1961
        %v1982 = vmul.f32 %v1872, %v1962
        %v1983 = vmul.f32 %v1874, %v1963
        %v1984 = vmul.f32 %v1876, %v1964
        %v1985 = vmul.f32 %v1878, %v1965
        %v1986 = vmul.f32 %v1880, %v1966
        %v1987 = vmul.f32 %v1882, %v1967
        %v1988 = vmul.f32 %v1884, %v1968
        %v1989 = vmul.f32 %v1886, %v1969
        %v1990 = vmul.f32 %v1888, %v1970
        %v1991 = vmul.f32 %v1890, %v1971
        %v1992 = vmul.f32 %v1892, %v1972
        %v1994 = vsel %vm1772, %v1973, 0
        %v1997 = vsel %vm1772, %v1974, 0
        %1999 = vmatpush.msra.mxu0 0.0
        %2000 = vmatpush.msra.mxu0 0.0
        %2001 = vmatpush.msra.mxu0 0.0
        %2002 = vmatpush.msra.mxu0 0.0
        %2003 = vmatpush.msra.mxu0 0.0
        %2004 = vmatpush.msra.mxu0 0.0
        %2005 = vmatpush.msra.mxu0 0.0
        %2006 = vmatpush.msra.mxu0 0.0
        %2007 = vmatpush.msra.mxu0 0.0
        %2008 = vmatpush.msra.mxu0 0.0
        %2009 = vmatpush.msra.mxu0 0.0
        %2010 = vmatpush.msra.mxu0 0.0
        %2011 = vmatpush.msra.mxu0 0.0
        %2012 = vmatpush.msra.mxu0 0.0
        %2013 = vmatpush.msra.mxu0 %v1152
        %2014 = vmatpush.msra.mxu0 %v1150
        %2015 = vmatmul.f32.gmra.mxu0 %v1994
        %v2016 = vpop.f32.mrf.mxu0
        %v2017 = vadd.f32 0.0, %v2016
        %2018 = vmatmul.f32.gmra.mxu0 %v1997
        %v2019 = vpop.f32.mrf.mxu0
        %v2020 = vadd.f32 0.0, %v2019
        %2021 = vdwg.mxu0
        %2022 = vmatpush.msra.mxu0 0.0
        %2023 = vmatpush.msra.mxu0 0.0
        %2024 = vmatpush.msra.mxu0 0.0
        %2025 = vmatpush.msra.mxu0 0.0
        %2026 = vmatpush.msra.mxu0 0.0
        %2027 = vmatpush.msra.mxu0 0.0
        %2028 = vmatpush.msra.mxu0 0.0
        %2029 = vmatpush.msra.mxu0 0.0
        %2030 = vmatpush.msra.mxu0 0.0
        %2031 = vmatpush.msra.mxu0 0.0
        %2032 = vmatpush.msra.mxu0 0.0
        %2033 = vmatpush.msra.mxu0 0.0
        %2034 = vmatpush.msra.mxu0 0.0
        %2035 = vmatpush.msra.mxu0 0.0
        %2036 = vmatpush.msra.mxu0 %v1153
        %2037 = vmatpush.msra.mxu0 %v1151
        %2038 = vmatmul.f32.gmra.mxu0 %v1994
        %v2039 = vpop.f32.mrf.mxu0
        %v2040 = vadd.f32 0.0, %v2039
        %2041 = vmatmul.f32.gmra.mxu0 %v1997
        %v2042 = vpop.f32.mrf.mxu0
        %v2043 = vadd.f32 0.0, %v2042
        %2044 = vdwg.mxu0
        %v2046 = vsel %vm1772, %v1975, 0
        %v2049 = vsel %vm1772, %v1976, 0
        %2051 = vmatpush.msra.mxu0 0.0
        %2052 = vmatpush.msra.mxu0 0.0
        %2053 = vmatpush.msra.mxu0 0.0
        %2054 = vmatpush.msra.mxu0 0.0
        %2055 = vmatpush.msra.mxu0 0.0
        %2056 = vmatpush.msra.mxu0 0.0
        %2057 = vmatpush.msra.mxu0 0.0
        %2058 = vmatpush.msra.mxu0 0.0
        %2059 = vmatpush.msra.mxu0 0.0
        %2060 = vmatpush.msra.mxu0 0.0
        %2061 = vmatpush.msra.mxu0 0.0
        %2062 = vmatpush.msra.mxu0 0.0
        %2063 = vmatpush.msra.mxu0 0.0
        %2064 = vmatpush.msra.mxu0 0.0
        %2065 = vmatpush.msra.mxu0 %v1156
        %2066 = vmatpush.msra.mxu0 %v1154
        %2067 = vmatmul.f32.gmra.mxu0 %v2046
        %v2068 = vpop.f32.mrf.mxu0
        %v2069 = vadd.f32 0.0, %v2068
        %2070 = vmatmul.f32.gmra.mxu0 %v2049
        %v2071 = vpop.f32.mrf.mxu0
        %v2072 = vadd.f32 0.0, %v2071
        %2073 = vdwg.mxu0
        %2074 = vmatpush.msra.mxu0 0.0
        %2075 = vmatpush.msra.mxu0 0.0
        %2076 = vmatpush.msra.mxu0 0.0
        %2077 = vmatpush.msra.mxu0 0.0
        %2078 = vmatpush.msra.mxu0 0.0
        %2079 = vmatpush.msra.mxu0 0.0
        %2080 = vmatpush.msra.mxu0 0.0
        %2081 = vmatpush.msra.mxu0 0.0
        %2082 = vmatpush.msra.mxu0 0.0
        %2083 = vmatpush.msra.mxu0 0.0
        %2084 = vmatpush.msra.mxu0 0.0
        %2085 = vmatpush.msra.mxu0 0.0
        %2086 = vmatpush.msra.mxu0 0.0
        %2087 = vmatpush.msra.mxu0 0.0
        %2088 = vmatpush.msra.mxu0 %v1157
        %2089 = vmatpush.msra.mxu0 %v1155
        %2090 = vmatmul.f32.gmra.mxu0 %v2046
        %v2091 = vpop.f32.mrf.mxu0
        %v2092 = vadd.f32 0.0, %v2091
        %2093 = vmatmul.f32.gmra.mxu0 %v2049
        %v2094 = vpop.f32.mrf.mxu0
        %v2095 = vadd.f32 0.0, %v2094
        %2096 = vdwg.mxu0
        %v2098 = vsel %vm1772, %v1977, 0
        %v2101 = vsel %vm1772, %v1978, 0
        %2103 = vmatpush.msra.mxu0 0.0
        %2104 = vmatpush.msra.mxu0 0.0
        %2105 = vmatpush.msra.mxu0 0.0
        %2106 = vmatpush.msra.mxu0 0.0
        %2107 = vmatpush.msra.mxu0 0.0
        %2108 = vmatpush.msra.mxu0 0.0
        %2109 = vmatpush.msra.mxu0 0.0
        %2110 = vmatpush.msra.mxu0 0.0
        %2111 = vmatpush.msra.mxu0 0.0
        %2112 = vmatpush.msra.mxu0 0.0
        %2113 = vmatpush.msra.mxu0 0.0
        %2114 = vmatpush.msra.mxu0 0.0
        %2115 = vmatpush.msra.mxu0 0.0
        %2116 = vmatpush.msra.mxu0 0.0
        %2117 = vmatpush.msra.mxu0 %v1160
        %2118 = vmatpush.msra.mxu0 %v1158
        %2119 = vmatmul.f32.gmra.mxu0 %v2098
        %v2120 = vpop.f32.mrf.mxu0
        %v2121 = vadd.f32 0.0, %v2120
        %2122 = vmatmul.f32.gmra.mxu0 %v2101
        %v2123 = vpop.f32.mrf.mxu0
        %v2124 = vadd.f32 0.0, %v2123
        %2125 = vdwg.mxu0
        %2126 = vmatpush.msra.mxu0 0.0
        %2127 = vmatpush.msra.mxu0 0.0
        %2128 = vmatpush.msra.mxu0 0.0
        %2129 = vmatpush.msra.mxu0 0.0
        %2130 = vmatpush.msra.mxu0 0.0
        %2131 = vmatpush.msra.mxu0 0.0
        %2132 = vmatpush.msra.mxu0 0.0
        %2133 = vmatpush.msra.mxu0 0.0
        %2134 = vmatpush.msra.mxu0 0.0
        %2135 = vmatpush.msra.mxu0 0.0
        %2136 = vmatpush.msra.mxu0 0.0
        %2137 = vmatpush.msra.mxu0 0.0
        %2138 = vmatpush.msra.mxu0 0.0
        %2139 = vmatpush.msra.mxu0 0.0
        %2140 = vmatpush.msra.mxu0 %v1161
        %2141 = vmatpush.msra.mxu0 %v1159
        %2142 = vmatmul.f32.gmra.mxu0 %v2098
        %v2143 = vpop.f32.mrf.mxu0
        %v2144 = vadd.f32 0.0, %v2143
        %2145 = vmatmul.f32.gmra.mxu0 %v2101
        %v2146 = vpop.f32.mrf.mxu0
        %v2147 = vadd.f32 0.0, %v2146
        %2148 = vdwg.mxu0
        %v2150 = vsel %vm1772, %v1979, 0
        %v2153 = vsel %vm1772, %v1980, 0
        %2155 = vmatpush.msra.mxu0 0.0
        %2156 = vmatpush.msra.mxu0 0.0
        %2157 = vmatpush.msra.mxu0 0.0
        %2158 = vmatpush.msra.mxu0 0.0
        %2159 = vmatpush.msra.mxu0 0.0
        %2160 = vmatpush.msra.mxu0 0.0
        %2161 = vmatpush.msra.mxu0 0.0
        %2162 = vmatpush.msra.mxu0 0.0
        %2163 = vmatpush.msra.mxu0 0.0
        %2164 = vmatpush.msra.mxu0 0.0
        %2165 = vmatpush.msra.mxu0 0.0
        %2166 = vmatpush.msra.mxu0 0.0
        %2167 = vmatpush.msra.mxu0 0.0
        %2168 = vmatpush.msra.mxu0 0.0
        %2169 = vmatpush.msra.mxu0 %v1164
        %2170 = vmatpush.msra.mxu0 %v1162
        %2171 = vmatmul.f32.gmra.mxu0 %v2150
        %v2172 = vpop.f32.mrf.mxu0
        %v2173 = vadd.f32 0.0, %v2172
        %2174 = vmatmul.f32.gmra.mxu0 %v2153
        %v2175 = vpop.f32.mrf.mxu0
        %v2176 = vadd.f32 0.0, %v2175
        %2177 = vdwg.mxu0
        %2178 = vmatpush.msra.mxu0 0.0
        %2179 = vmatpush.msra.mxu0 0.0
        %2180 = vmatpush.msra.mxu0 0.0
        %2181 = vmatpush.msra.mxu0 0.0
        %2182 = vmatpush.msra.mxu0 0.0
        %2183 = vmatpush.msra.mxu0 0.0
        %2184 = vmatpush.msra.mxu0 0.0
        %2185 = vmatpush.msra.mxu0 0.0
        %2186 = vmatpush.msra.mxu0 0.0
        %2187 = vmatpush.msra.mxu0 0.0
        %2188 = vmatpush.msra.mxu0 0.0
        %2189 = vmatpush.msra.mxu0 0.0
        %2190 = vmatpush.msra.mxu0 0.0
        %2191 = vmatpush.msra.mxu0 0.0
        %2192 = vmatpush.msra.mxu0 %v1165
        %2193 = vmatpush.msra.mxu0 %v1163
        %2194 = vmatmul.f32.gmra.mxu0 %v2150
        %v2195 = vpop.f32.mrf.mxu0
        %v2196 = vadd.f32 0.0, %v2195
        %2197 = vmatmul.f32.gmra.mxu0 %v2153
        %v2198 = vpop.f32.mrf.mxu0
        %v2199 = vadd.f32 0.0, %v2198
        %2200 = vdwg.mxu0
        %v2202 = vsel %vm1772, %v1981, 0
        %v2205 = vsel %vm1772, %v1982, 0
        %2207 = vmatpush.msra.mxu0 0.0
        %2208 = vmatpush.msra.mxu0 0.0
        %2209 = vmatpush.msra.mxu0 0.0
        %2210 = vmatpush.msra.mxu0 0.0
        %2211 = vmatpush.msra.mxu0 0.0
        %2212 = vmatpush.msra.mxu0 0.0
        %2213 = vmatpush.msra.mxu0 0.0
        %2214 = vmatpush.msra.mxu0 0.0
        %2215 = vmatpush.msra.mxu0 0.0
        %2216 = vmatpush.msra.mxu0 0.0
        %2217 = vmatpush.msra.mxu0 0.0
        %2218 = vmatpush.msra.mxu0 0.0
        %2219 = vmatpush.msra.mxu0 0.0
        %2220 = vmatpush.msra.mxu0 0.0
        %2221 = vmatpush.msra.mxu0 %v1168
        %2222 = vmatpush.msra.mxu0 %v1166
        %2223 = vmatmul.f32.gmra.mxu0 %v2202
        %v2224 = vpop.f32.mrf.mxu0
        %v2225 = vadd.f32 0.0, %v2224
        %2226 = vmatmul.f32.gmra.mxu0 %v2205
        %v2227 = vpop.f32.mrf.mxu0
        %v2228 = vadd.f32 0.0, %v2227
        %2229 = vdwg.mxu0
        %2230 = vmatpush.msra.mxu0 0.0
        %2231 = vmatpush.msra.mxu0 0.0
        %2232 = vmatpush.msra.mxu0 0.0
        %2233 = vmatpush.msra.mxu0 0.0
        %2234 = vmatpush.msra.mxu0 0.0
        %2235 = vmatpush.msra.mxu0 0.0
        %2236 = vmatpush.msra.mxu0 0.0
        %2237 = vmatpush.msra.mxu0 0.0
        %2238 = vmatpush.msra.mxu0 0.0
        %2239 = vmatpush.msra.mxu0 0.0
        %2240 = vmatpush.msra.mxu0 0.0
        %2241 = vmatpush.msra.mxu0 0.0
        %2242 = vmatpush.msra.mxu0 0.0
        %2243 = vmatpush.msra.mxu0 0.0
        %2244 = vmatpush.msra.mxu0 %v1169
        %2245 = vmatpush.msra.mxu0 %v1167
        %2246 = vmatmul.f32.gmra.mxu0 %v2202
        %v2247 = vpop.f32.mrf.mxu0
        %v2248 = vadd.f32 0.0, %v2247
        %2249 = vmatmul.f32.gmra.mxu0 %v2205
        %v2250 = vpop.f32.mrf.mxu0
        %v2251 = vadd.f32 0.0, %v2250
        %2252 = vdwg.mxu0
        %v2254 = vsel %vm1772, %v1983, 0
        %v2257 = vsel %vm1772, %v1984, 0
        %2259 = vmatpush.msra.mxu0 0.0
        %2260 = vmatpush.msra.mxu0 0.0
        %2261 = vmatpush.msra.mxu0 0.0
        %2262 = vmatpush.msra.mxu0 0.0
        %2263 = vmatpush.msra.mxu0 0.0
        %2264 = vmatpush.msra.mxu0 0.0
        %2265 = vmatpush.msra.mxu0 0.0
        %2266 = vmatpush.msra.mxu0 0.0
        %2267 = vmatpush.msra.mxu0 0.0
        %2268 = vmatpush.msra.mxu0 0.0
        %2269 = vmatpush.msra.mxu0 0.0
        %2270 = vmatpush.msra.mxu0 0.0
        %2271 = vmatpush.msra.mxu0 0.0
        %2272 = vmatpush.msra.mxu0 0.0
        %2273 = vmatpush.msra.mxu0 %v1172
        %2274 = vmatpush.msra.mxu0 %v1170
        %2275 = vmatmul.f32.gmra.mxu0 %v2254
        %v2276 = vpop.f32.mrf.mxu0
        %v2277 = vadd.f32 0.0, %v2276
        %2278 = vmatmul.f32.gmra.mxu0 %v2257
        %v2279 = vpop.f32.mrf.mxu0
        %v2280 = vadd.f32 0.0, %v2279
        %2281 = vdwg.mxu0
        %2282 = vmatpush.msra.mxu0 0.0
        %2283 = vmatpush.msra.mxu0 0.0
        %2284 = vmatpush.msra.mxu0 0.0
        %2285 = vmatpush.msra.mxu0 0.0
        %2286 = vmatpush.msra.mxu0 0.0
        %2287 = vmatpush.msra.mxu0 0.0
        %2288 = vmatpush.msra.mxu0 0.0
        %2289 = vmatpush.msra.mxu0 0.0
        %2290 = vmatpush.msra.mxu0 0.0
        %2291 = vmatpush.msra.mxu0 0.0
        %2292 = vmatpush.msra.mxu0 0.0
        %2293 = vmatpush.msra.mxu0 0.0
        %2294 = vmatpush.msra.mxu0 0.0
        %2295 = vmatpush.msra.mxu0 0.0
        %2296 = vmatpush.msra.mxu0 %v1173
        %2297 = vmatpush.msra.mxu0 %v1171
        %2298 = vmatmul.f32.gmra.mxu0 %v2254
        %v2299 = vpop.f32.mrf.mxu0
        %v2300 = vadd.f32 0.0, %v2299
        %2301 = vmatmul.f32.gmra.mxu0 %v2257
        %v2302 = vpop.f32.mrf.mxu0
        %v2303 = vadd.f32 0.0, %v2302
        %2304 = vdwg.mxu0
        %v2306 = vsel %vm1772, %v1985, 0
        %v2309 = vsel %vm1772, %v1986, 0
        %2311 = vmatpush.msra.mxu0 0.0
        %2312 = vmatpush.msra.mxu0 0.0
        %2313 = vmatpush.msra.mxu0 0.0
        %2314 = vmatpush.msra.mxu0 0.0
        %2315 = vmatpush.msra.mxu0 0.0
        %2316 = vmatpush.msra.mxu0 0.0
        %2317 = vmatpush.msra.mxu0 0.0
        %2318 = vmatpush.msra.mxu0 0.0
        %2319 = vmatpush.msra.mxu0 0.0
        %2320 = vmatpush.msra.mxu0 0.0
        %2321 = vmatpush.msra.mxu0 0.0
        %2322 = vmatpush.msra.mxu0 0.0
        %2323 = vmatpush.msra.mxu0 0.0
        %2324 = vmatpush.msra.mxu0 0.0
        %2325 = vmatpush.msra.mxu0 %v1176
        %2326 = vmatpush.msra.mxu0 %v1174
        %2327 = vmatmul.f32.gmra.mxu0 %v2306
        %v2328 = vpop.f32.mrf.mxu0
        %v2329 = vadd.f32 0.0, %v2328
        %2330 = vmatmul.f32.gmra.mxu0 %v2309
        %v2331 = vpop.f32.mrf.mxu0
        %v2332 = vadd.f32 0.0, %v2331
        %2333 = vdwg.mxu0
        %2334 = vmatpush.msra.mxu0 0.0
        %2335 = vmatpush.msra.mxu0 0.0
        %2336 = vmatpush.msra.mxu0 0.0
        %2337 = vmatpush.msra.mxu0 0.0
        %2338 = vmatpush.msra.mxu0 0.0
        %2339 = vmatpush.msra.mxu0 0.0
        %2340 = vmatpush.msra.mxu0 0.0
        %2341 = vmatpush.msra.mxu0 0.0
        %2342 = vmatpush.msra.mxu0 0.0
        %2343 = vmatpush.msra.mxu0 0.0
        %2344 = vmatpush.msra.mxu0 0.0
        %2345 = vmatpush.msra.mxu0 0.0
        %2346 = vmatpush.msra.mxu0 0.0
        %2347 = vmatpush.msra.mxu0 0.0
        %2348 = vmatpush.msra.mxu0 %v1177
        %2349 = vmatpush.msra.mxu0 %v1175
        %2350 = vmatmul.f32.gmra.mxu0 %v2306
        %v2351 = vpop.f32.mrf.mxu0
        %v2352 = vadd.f32 0.0, %v2351
        %2353 = vmatmul.f32.gmra.mxu0 %v2309
        %v2354 = vpop.f32.mrf.mxu0
        %v2355 = vadd.f32 0.0, %v2354
        %2356 = vdwg.mxu0
        %v2358 = vsel %vm1772, %v1987, 0
        %v2361 = vsel %vm1772, %v1988, 0
        %2363 = vmatpush.msra.mxu0 0.0
        %2364 = vmatpush.msra.mxu0 0.0
        %2365 = vmatpush.msra.mxu0 0.0
        %2366 = vmatpush.msra.mxu0 0.0
        %2367 = vmatpush.msra.mxu0 0.0
        %2368 = vmatpush.msra.mxu0 0.0
        %2369 = vmatpush.msra.mxu0 0.0
        %2370 = vmatpush.msra.mxu0 0.0
        %2371 = vmatpush.msra.mxu0 0.0
        %2372 = vmatpush.msra.mxu0 0.0
        %2373 = vmatpush.msra.mxu0 0.0
        %2374 = vmatpush.msra.mxu0 0.0
        %2375 = vmatpush.msra.mxu0 0.0
        %2376 = vmatpush.msra.mxu0 0.0
        %2377 = vmatpush.msra.mxu0 %v1180
        %2378 = vmatpush.msra.mxu0 %v1178
        %2379 = vmatmul.f32.gmra.mxu0 %v2358
        %v2380 = vpop.f32.mrf.mxu0
        %v2381 = vadd.f32 0.0, %v2380
        %2382 = vmatmul.f32.gmra.mxu0 %v2361
        %v2383 = vpop.f32.mrf.mxu0
        %v2384 = vadd.f32 0.0, %v2383
        %2385 = vdwg.mxu0
        %2386 = vmatpush.msra.mxu0 0.0
        %2387 = vmatpush.msra.mxu0 0.0
        %2388 = vmatpush.msra.mxu0 0.0
        %2389 = vmatpush.msra.mxu0 0.0
        %2390 = vmatpush.msra.mxu0 0.0
        %2391 = vmatpush.msra.mxu0 0.0
        %2392 = vmatpush.msra.mxu0 0.0
        %2393 = vmatpush.msra.mxu0 0.0
        %2394 = vmatpush.msra.mxu0 0.0
        %2395 = vmatpush.msra.mxu0 0.0
        %2396 = vmatpush.msra.mxu0 0.0
        %2397 = vmatpush.msra.mxu0 0.0
        %2398 = vmatpush.msra.mxu0 0.0
        %2399 = vmatpush.msra.mxu0 0.0
        %2400 = vmatpush.msra.mxu0 %v1181
        %2401 = vmatpush.msra.mxu0 %v1179
        %2402 = vmatmul.f32.gmra.mxu0 %v2358
        %v2403 = vpop.f32.mrf.mxu0
        %v2404 = vadd.f32 0.0, %v2403
        %2405 = vmatmul.f32.gmra.mxu0 %v2361
        %v2406 = vpop.f32.mrf.mxu0
        %v2407 = vadd.f32 0.0, %v2406
        %2408 = vdwg.mxu0
        %v2410 = vsel %vm1772, %v1989, 0
        %v2413 = vsel %vm1772, %v1990, 0
        %2415 = vmatpush.msra.mxu0 0.0
        %2416 = vmatpush.msra.mxu0 0.0
        %2417 = vmatpush.msra.mxu0 0.0
        %2418 = vmatpush.msra.mxu0 0.0
        %2419 = vmatpush.msra.mxu0 0.0
        %2420 = vmatpush.msra.mxu0 0.0
        %2421 = vmatpush.msra.mxu0 0.0
        %2422 = vmatpush.msra.mxu0 0.0
        %2423 = vmatpush.msra.mxu0 0.0
        %2424 = vmatpush.msra.mxu0 0.0
        %2425 = vmatpush.msra.mxu0 0.0
        %2426 = vmatpush.msra.mxu0 0.0
        %2427 = vmatpush.msra.mxu0 0.0
        %2428 = vmatpush.msra.mxu0 0.0
        %2429 = vmatpush.msra.mxu0 %v1184
        %2430 = vmatpush.msra.mxu0 %v1182
        %2431 = vmatmul.f32.gmra.mxu0 %v2410
        %v2432 = vpop.f32.mrf.mxu0
        %v2433 = vadd.f32 0.0, %v2432
        %2434 = vmatmul.f32.gmra.mxu0 %v2413
        %v2435 = vpop.f32.mrf.mxu0
        %v2436 = vadd.f32 0.0, %v2435
        %2437 = vdwg.mxu0
        %2438 = vmatpush.msra.mxu0 0.0
        %2439 = vmatpush.msra.mxu0 0.0
        %2440 = vmatpush.msra.mxu0 0.0
        %2441 = vmatpush.msra.mxu0 0.0
        %2442 = vmatpush.msra.mxu0 0.0
        %2443 = vmatpush.msra.mxu0 0.0
        %2444 = vmatpush.msra.mxu0 0.0
        %2445 = vmatpush.msra.mxu0 0.0
        %2446 = vmatpush.msra.mxu0 0.0
        %2447 = vmatpush.msra.mxu0 0.0
        %2448 = vmatpush.msra.mxu0 0.0
        %2449 = vmatpush.msra.mxu0 0.0
        %2450 = vmatpush.msra.mxu0 0.0
        %2451 = vmatpush.msra.mxu0 0.0
        %2452 = vmatpush.msra.mxu0 %v1185
        %2453 = vmatpush.msra.mxu0 %v1183
        %2454 = vmatmul.f32.gmra.mxu0 %v2410
        %v2455 = vpop.f32.mrf.mxu0
        %v2456 = vadd.f32 0.0, %v2455
        %2457 = vmatmul.f32.gmra.mxu0 %v2413
        %v2458 = vpop.f32.mrf.mxu0
        %v2459 = vadd.f32 0.0, %v2458
        %2460 = vdwg.mxu0
        %v2462 = vsel %vm1772, %v1991, 0
        %v2465 = vsel %vm1772, %v1992, 0
        %2467 = vmatpush.msra.mxu0 0.0
        %2468 = vmatpush.msra.mxu0 0.0
        %2469 = vmatpush.msra.mxu0 0.0
        %2470 = vmatpush.msra.mxu0 0.0
        %2471 = vmatpush.msra.mxu0 0.0
        %2472 = vmatpush.msra.mxu0 0.0
        %2473 = vmatpush.msra.mxu0 0.0
        %2474 = vmatpush.msra.mxu0 0.0
        %2475 = vmatpush.msra.mxu0 0.0
        %2476 = vmatpush.msra.mxu0 0.0
        %2477 = vmatpush.msra.mxu0 0.0
        %2478 = vmatpush.msra.mxu0 0.0
        %2479 = vmatpush.msra.mxu0 0.0
        %2480 = vmatpush.msra.mxu0 0.0
        %2481 = vmatpush.msra.mxu0 %v1188
        %2482 = vmatpush.msra.mxu0 %v1186
        %2483 = vmatmul.f32.gmra.mxu0 %v2462
        %v2484 = vpop.f32.mrf.mxu0
        %v2485 = vadd.f32 0.0, %v2484
        %2486 = vmatmul.f32.gmra.mxu0 %v2465
        %v2487 = vpop.f32.mrf.mxu0
        %v2488 = vadd.f32 0.0, %v2487
        %2489 = vdwg.mxu0
        %2490 = vmatpush.msra.mxu0 0.0
        %2491 = vmatpush.msra.mxu0 0.0
        %2492 = vmatpush.msra.mxu0 0.0
        %2493 = vmatpush.msra.mxu0 0.0
        %2494 = vmatpush.msra.mxu0 0.0
        %2495 = vmatpush.msra.mxu0 0.0
        %2496 = vmatpush.msra.mxu0 0.0
        %2497 = vmatpush.msra.mxu0 0.0
        %2498 = vmatpush.msra.mxu0 0.0
        %2499 = vmatpush.msra.mxu0 0.0
        %2500 = vmatpush.msra.mxu0 0.0
        %2501 = vmatpush.msra.mxu0 0.0
        %2502 = vmatpush.msra.mxu0 0.0
        %2503 = vmatpush.msra.mxu0 0.0
        %2504 = vmatpush.msra.mxu0 %v1189
        %2505 = vmatpush.msra.mxu0 %v1187
        %2506 = vmatmul.f32.gmra.mxu0 %v2462
        %v2507 = vpop.f32.mrf.mxu0
        %v2508 = vadd.f32 0.0, %v2507
        %2509 = vmatmul.f32.gmra.mxu0 %v2465
        %v2510 = vpop.f32.mrf.mxu0
        %v2511 = vadd.f32 0.0, %v2510
        %2512 = vdwg.mxu0
        %v2513 = vadd.f32 %v2017, %v2069
        %v2514 = vadd.f32 %v2513, %v2121
        %v2515 = vadd.f32 %v2514, %v2173
        %v2516 = vadd.f32 %v2515, %v2225
        %v2517 = vadd.f32 %v2516, %v2277
        %v2518 = vadd.f32 %v2517, %v2329
        %v2519 = vadd.f32 %v2518, %v2381
        %v2520 = vadd.f32 %v2519, %v2433
        %v2521 = vadd.f32 %v2520, %v2485
        %v2522 = vsel %vm572, %v2040, 0.0
        %v2523 = vsel %vm572, %v2092, 0.0
        %v2524 = vadd.f32 %v2522, %v2523
        %v2525 = vsel %vm572, %v2144, 0.0
        %v2526 = vadd.f32 %v2524, %v2525
        %v2527 = vsel %vm572, %v2196, 0.0
        %v2528 = vadd.f32 %v2526, %v2527
        %v2529 = vsel %vm572, %v2248, 0.0
        %v2530 = vadd.f32 %v2528, %v2529
        %v2531 = vsel %vm572, %v2300, 0.0
        %v2532 = vadd.f32 %v2530, %v2531
        %v2533 = vsel %vm572, %v2352, 0.0
        %v2534 = vadd.f32 %v2532, %v2533
        %v2535 = vsel %vm572, %v2404, 0.0
        %v2536 = vadd.f32 %v2534, %v2535
        %v2537 = vsel %vm572, %v2456, 0.0
        %v2538 = vadd.f32 %v2536, %v2537
        %v2539 = vsel %vm572, %v2508, 0.0
        %v2540 = vadd.f32 %v2538, %v2539
        %v2541 = vadd.f32 %v2020, %v2072
        %v2542 = vadd.f32 %v2541, %v2124
        %v2543 = vadd.f32 %v2542, %v2176
        %v2544 = vadd.f32 %v2543, %v2228
        %v2545 = vadd.f32 %v2544, %v2280
        %v2546 = vadd.f32 %v2545, %v2332
        %v2547 = vadd.f32 %v2546, %v2384
        %v2548 = vadd.f32 %v2547, %v2436
        %v2549 = vadd.f32 %v2548, %v2488
        %v2550 = vsel %vm572, %v2043, 0.0
        %v2551 = vsel %vm572, %v2095, 0.0
        %v2552 = vadd.f32 %v2550, %v2551
        %v2553 = vsel %vm572, %v2147, 0.0
        %v2554 = vadd.f32 %v2552, %v2553
        %v2555 = vsel %vm572, %v2199, 0.0
        %v2556 = vadd.f32 %v2554, %v2555
        %v2557 = vsel %vm572, %v2251, 0.0
        %v2558 = vadd.f32 %v2556, %v2557
        %v2559 = vsel %vm572, %v2303, 0.0
        %v2560 = vadd.f32 %v2558, %v2559
        %v2561 = vsel %vm572, %v2355, 0.0
        %v2562 = vadd.f32 %v2560, %v2561
        %v2563 = vsel %vm572, %v2407, 0.0
        %v2564 = vadd.f32 %v2562, %v2563
        %v2565 = vsel %vm572, %v2459, 0.0
        %v2566 = vadd.f32 %v2564, %v2565
        %v2567 = vsel %vm572, %v2511, 0.0
        %v2568 = vadd.f32 %v2566, %v2567
        %v2569 = vld [vmem:[%s490] sm:$0xff]
        %v2570 = vld [vmem:[%s490 + $0x8] sm:$0xff]
        %v2571 = vld [vmem:[%s490 + $0x10] sm:$0xff]
        %v2572 = vld [vmem:[%s490 + $0x18] sm:$0xff]
        %v2573 = vld [vmem:[%s490 + $0x20] sm:$0xff]
        %v2574 = vld [vmem:[%s490 + $0x28] sm:$0xff]
        %v2575 = vld [vmem:[%s490 + $0x30] sm:$0xff]
        %v2576 = vld [vmem:[%s490 + $0x38] sm:$0xff]
        %v2577 = vld [vmem:[%s490 + $0x40] sm:$0xff]
        %v2578 = vld [vmem:[%s490 + $0x48] sm:$0xff]
        %v2579 = vld [vmem:[%s490 + $0x50] sm:$0xff]
        %v2580 = vld [vmem:[%s490 + $0x58] sm:$0xff]
        %v2581 = vld [vmem:[%s490 + $0x60] sm:$0xff]
        %v2582 = vld [vmem:[%s490 + $0x68] sm:$0xff]
        %v2583 = vld [vmem:[%s490 + $0x70] sm:$0xff]
        %v2584 = vld [vmem:[%s490 + $0x78] sm:$0xff]
        %v2585 = vld [vmem:[%s490 + $0x80] sm:$0xff]
        %v2586 = vld [vmem:[%s490 + $0x88] sm:$0xff]
        %v2587 = vld [vmem:[%s490 + $0x90] sm:$0xff]
        %v2588 = vld [vmem:[%s490 + $0x98] sm:$0xff]
        %v2589 = vld [vmem:[%s490 + $0xa0] sm:$0xff]
        %v2590 = vld [vmem:[%s490 + $0xa8] sm:$0xff]
        %v2591 = vld [vmem:[%s490 + $0xb0] sm:$0xff]
        %v2592 = vld [vmem:[%s490 + $0xb8] sm:$0xff]
        %v2593 = vld [vmem:[%s490 + $0xc0] sm:$0xff]
        %v2594 = vld [vmem:[%s490 + $0xc8] sm:$0xff]
        %v2595 = vld [vmem:[%s490 + $0xd0] sm:$0xff]
        %v2596 = vld [vmem:[%s490 + $0xd8] sm:$0xff]
        %v2597 = vld [vmem:[%s490 + $0xe0] sm:$0xff]
        %v2598 = vld [vmem:[%s490 + $0xe8] sm:$0xff]
        %v2599 = vld [vmem:[%s490 + $0xf0] sm:$0xff]
        %v2600 = vld [vmem:[%s490 + $0xf8] sm:$0xff]
        %v2601 = vld [vmem:[%s490 + $0x100] sm:$0xff]
        %v2602 = vld [vmem:[%s490 + $0x108] sm:$0xff]
        %v2603 = vld [vmem:[%s490 + $0x110] sm:$0xff]
        %v2604 = vld [vmem:[%s490 + $0x118] sm:$0xff]
        %v2605 = vld [vmem:[%s490 + $0x120] sm:$0x3f]
        %v2606 = vld [vmem:[%s490 + $0x128] sm:$0x3f]
        %v2607 = vperm.slane %v527, 3
        %v2608 = vperm.slane %v528, 3
        %v2610 = vsel %vm572, %v2540, 0
        %v2613 = vsel %vm572, %v2568, 0
        %v2616 = vsel %vm579, %v2605, 0
        %v2619 = vsel %vm579, %v2606, 0
        %2621 = vmatpush.msra.mxu0 %v2599
        %2622 = vmatpush.msra.mxu0 %v2597
        %2623 = vmatpush.msra.mxu0 %v2595
        %2624 = vmatpush.msra.mxu0 %v2593
        %2625 = vmatpush.msra.mxu0 %v2591
        %2626 = vmatpush.msra.mxu0 %v2589
        %2627 = vmatpush.msra.mxu0 %v2587
        %2628 = vmatpush.msra.mxu0 %v2585
        %2629 = vmatpush.msra.mxu0 %v2583
        %2630 = vmatpush.msra.mxu0 %v2581
        %2631 = vmatpush.msra.mxu0 %v2579
        %2632 = vmatpush.msra.mxu0 %v2577
        %2633 = vmatpush.msra.mxu0 %v2575
        %2634 = vmatpush.msra.mxu0 %v2573
        %2635 = vmatpush.msra.mxu0 %v2571
        %2636 = vmatpush.msra.mxu0 %v2569
        %2637 = vmatmul.f32.gmra.mxu0 %v2521
        %v2638 = vpop.f32.mrf.mxu0
        %v2639 = vadd.f32 %v2607, %v2638
        %2640 = vmatmul.f32.gmra.mxu0 %v2549
        %v2641 = vpop.f32.mrf.mxu0
        %v2642 = vadd.f32 %v2607, %v2641
        %2643 = vdwg.mxu0
        %2644 = vmatpush.msra.mxu0 0.0
        %2645 = vmatpush.msra.mxu0 0.0
        %2646 = vmatpush.msra.mxu0 0.0
        %2647 = vmatpush.msra.mxu0 0.0
        %2648 = vmatpush.msra.mxu0 0.0
        %2649 = vmatpush.msra.mxu0 0.0
        %2650 = vmatpush.msra.mxu0 0.0
        %2651 = vmatpush.msra.mxu0 0.0
        %2652 = vmatpush.msra.mxu0 0.0
        %2653 = vmatpush.msra.mxu0 0.0
        %2654 = vmatpush.msra.mxu0 0.0
        %2655 = vmatpush.msra.mxu0 0.0
        %2656 = vmatpush.msra.mxu0 0.0
        %2657 = vmatpush.msra.mxu0 %v2616
        %2658 = vmatpush.msra.mxu0 %v2603
        %2659 = vmatpush.msra.mxu0 %v2601
        %2660 = vmatmul.f32.gmra.mxu0 %v2610
        %v2661 = vpop.f32.mrf.mxu0
        %v2662 = vadd.f32 %v2639, %v2661
        %2663 = vmatmul.f32.gmra.mxu0 %v2613
        %v2664 = vpop.f32.mrf.mxu0
        %v2665 = vadd.f32 %v2642, %v2664
        %2666 = vdwg.mxu0
        %2667 = vmatpush.msra.mxu0 %v2600
        %2668 = vmatpush.msra.mxu0 %v2598
        %2669 = vmatpush.msra.mxu0 %v2596
        %2670 = vmatpush.msra.mxu0 %v2594
        %2671 = vmatpush.msra.mxu0 %v2592
        %2672 = vmatpush.msra.mxu0 %v2590
        %2673 = vmatpush.msra.mxu0 %v2588
        %2674 = vmatpush.msra.mxu0 %v2586
        %2675 = vmatpush.msra.mxu0 %v2584
        %2676 = vmatpush.msra.mxu0 %v2582
        %2677 = vmatpush.msra.mxu0 %v2580
        %2678 = vmatpush.msra.mxu0 %v2578
        %2679 = vmatpush.msra.mxu0 %v2576
        %2680 = vmatpush.msra.mxu0 %v2574
        %2681 = vmatpush.msra.mxu0 %v2572
        %2682 = vmatpush.msra.mxu0 %v2570
        %2683 = vmatmul.f32.gmra.mxu0 %v2521
        %v2684 = vpop.f32.mrf.mxu0
        %v2685 = vadd.f32 %v2608, %v2684
        %2686 = vmatmul.f32.gmra.mxu0 %v2549
        %v2687 = vpop.f32.mrf.mxu0
        %v2688 = vadd.f32 %v2608, %v2687
        %2689 = vdwg.mxu0
        %2690 = vmatpush.msra.mxu0 0.0
        %2691 = vmatpush.msra.mxu0 0.0
        %2692 = vmatpush.msra.mxu0 0.0
        %2693 = vmatpush.msra.mxu0 0.0
        %2694 = vmatpush.msra.mxu0 0.0
        %2695 = vmatpush.msra.mxu0 0.0
        %2696 = vmatpush.msra.mxu0 0.0
        %2697 = vmatpush.msra.mxu0 0.0
        %2698 = vmatpush.msra.mxu0 0.0
        %2699 = vmatpush.msra.mxu0 0.0
        %2700 = vmatpush.msra.mxu0 0.0
        %2701 = vmatpush.msra.mxu0 0.0
        %2702 = vmatpush.msra.mxu0 0.0
        %2703 = vmatpush.msra.mxu0 %v2619
        %2704 = vmatpush.msra.mxu0 %v2604
        %2705 = vmatpush.msra.mxu0 %v2602
        %2706 = vmatmul.f32.gmra.mxu0 %v2610
        %v2707 = vpop.f32.mrf.mxu0
        %v2708 = vadd.f32 %v2685, %v2707
        %2709 = vmatmul.f32.gmra.mxu0 %v2613
        %v2710 = vpop.f32.mrf.mxu0
        %v2711 = vadd.f32 %v2688, %v2710
        %2712 = vdwg.mxu0
        %v2713 = vadd.f32 %v523, %v2662
        %v2714 = vadd.f32 %v524, %v2708
        %v2715 = vadd.f32 %v525, %v2665
        %v2716 = vadd.f32 %v526, %v2711
        %v2717 = vsel %vm572, %v2714, 0.0
        %v2718 = vadd.f32 %v2713, %v2717
        %2719 = vadd.xlane.f32.xlu0 %v2718
        %v2720 = vpop.xlane.xlu0 %2719
        %v2721 = vsel %vm572, %v2716, 0.0
        %v2722 = vadd.f32 %v2715, %v2721
        %2723 = vadd.xlane.f32.xlu0 %v2722
        %v2724 = vpop.xlane.xlu0 %2723
        %v2725 = vrcp.pop 150.0
        %v2726 = vmul.f32 150.0, %v2725
        %v2727 = vsub.f32 1.0, %v2726
        %v2728 = vmul.f32 %v2725, %v2727
        %v2729 = vadd.f32 %v2725, %v2728
        %vm2730 = vweird.f32 %v2725
        %v2731 = vsel %vm2730, %v2725, %v2729
        %v2732 = vmul.f32 %v2720, %v2731
        %v2733 = vmul.f32 %v2724, %v2731
        %v2734 = vsub.f32 %v2713, %v2732
        %v2735 = vsub.f32 %v2714, %v2732
        %v2736 = vsub.f32 %v2715, %v2733
        %v2737 = vsub.f32 %v2716, %v2733
        %v2738 = vmul.f32 %v2734, %v2734
        %v2739 = vmul.f32 %v2735, %v2735
        %v2740 = vmul.f32 %v2736, %v2736
        %v2741 = vmul.f32 %v2737, %v2737
        %v2742 = vsel %vm572, %v2739, 0.0
        %v2743 = vadd.f32 %v2738, %v2742
        %2744 = vadd.xlane.f32.xlu0 %v2743
        %v2745 = vpop.xlane.xlu0 %2744
        %v2746 = vsel %vm572, %v2741, 0.0
        %v2747 = vadd.f32 %v2740, %v2746
        %2748 = vadd.xlane.f32.xlu0 %v2747
        %v2749 = vpop.xlane.xlu0 %2748
        %v2750 = vmul.f32 %v2745, %v2731
        %v2751 = vmul.f32 %v2749, %v2731
        %v2752 = vadd.f32 %v2750, 1e-05
        %v2753 = vadd.f32 %v2751, 1e-05
        %v2754 = vrsqrt.pop %v2752
        %v2755 = vmul.f32 %v2754, %v2752
        %v2756 = vmul.f32 %v2755, %v2754
        %v2757 = vmul.f32 0.5, %v2756
        %v2758 = vsub.f32 1.5, %v2757
        %v2759 = vmul.f32 %v2754, %v2758
        %vm2760 = vweird.f32 %v2752
        %vm2761 = vweird.f32 %v2754
        %vm2762 = vmor %vm2760, %vm2761
        %v2763 = vsel %vm2762, %v2754, %v2759
        %v2764 = vrsqrt.pop %v2753
        %v2765 = vmul.f32 %v2764, %v2753
        %v2766 = vmul.f32 %v2765, %v2764
        %v2767 = vmul.f32 0.5, %v2766
        %v2768 = vsub.f32 1.5, %v2767
        %v2769 = vmul.f32 %v2764, %v2768
        %vm2770 = vweird.f32 %v2753
        %vm2771 = vweird.f32 %v2764
        %vm2772 = vmor %vm2770, %vm2771
        %v2773 = vsel %vm2772, %v2764, %v2769
        %v2774 = vmul.f32 %v2734, %v2763
        %v2775 = vmul.f32 %v2735, %v2763
        %v2776 = vmul.f32 %v2736, %v2773
        %v2777 = vmul.f32 %v2737, %v2773
        %v2778 = vperm.slane %v527, 5
        %v2779 = vperm.slane %v528, 5
        %v2780 = vmul.f32 %v2774, %v2778
        %v2781 = vmul.f32 %v2775, %v2779
        %v2782 = vmul.f32 %v2776, %v2778
        %v2783 = vmul.f32 %v2777, %v2779
        %v2784 = vperm.slane %v527, 6
        %v2785 = vperm.slane %v528, 6
        %v2786 = vadd.f32 %v2780, %v2784
        %v2787 = vadd.f32 %v2781, %v2785
        %v2788 = vadd.f32 %v2782, %v2784
        %v2789 = vadd.f32 %v2783, %v2785
        %v2790 = vld [vmem:[%s495] sm:$0xff]
        %v2791 = vld [vmem:[%s495 + $0x8] sm:$0xff]
        %v2792 = vld [vmem:[%s495 + $0x10] sm:$0xff]
        %v2793 = vld [vmem:[%s495 + $0x18] sm:$0xff]
        %v2794 = vld [vmem:[%s495 + $0x20] sm:$0xff]
        %v2795 = vld [vmem:[%s495 + $0x28] sm:$0xff]
        %v2796 = vld [vmem:[%s495 + $0x30] sm:$0xff]
        %v2797 = vld [vmem:[%s495 + $0x38] sm:$0xff]
        %v2798 = vld [vmem:[%s495 + $0x40] sm:$0xff]
        %v2799 = vld [vmem:[%s495 + $0x48] sm:$0xff]
        %v2800 = vld [vmem:[%s495 + $0x50] sm:$0xff]
        %v2801 = vld [vmem:[%s495 + $0x58] sm:$0xff]
        %v2802 = vld [vmem:[%s495 + $0x60] sm:$0xff]
        %v2803 = vld [vmem:[%s495 + $0x68] sm:$0xff]
        %v2804 = vld [vmem:[%s495 + $0x70] sm:$0xff]
        %v2805 = vld [vmem:[%s495 + $0x78] sm:$0xff]
        %v2806 = vld [vmem:[%s495 + $0x80] sm:$0xff]
        %v2807 = vld [vmem:[%s495 + $0x88] sm:$0xff]
        %v2808 = vld [vmem:[%s495 + $0x90] sm:$0xff]
        %v2809 = vld [vmem:[%s495 + $0x98] sm:$0xff]
        %v2810 = vld [vmem:[%s495 + $0xa0] sm:$0xff]
        %v2811 = vld [vmem:[%s495 + $0xa8] sm:$0xff]
        %v2812 = vld [vmem:[%s495 + $0xb0] sm:$0xff]
        %v2813 = vld [vmem:[%s495 + $0xb8] sm:$0xff]
        %v2814 = vld [vmem:[%s495 + $0xc0] sm:$0xff]
        %v2815 = vld [vmem:[%s495 + $0xc8] sm:$0xff]
        %v2816 = vld [vmem:[%s495 + $0xd0] sm:$0xff]
        %v2817 = vld [vmem:[%s495 + $0xd8] sm:$0xff]
        %v2818 = vld [vmem:[%s495 + $0xe0] sm:$0xff]
        %v2819 = vld [vmem:[%s495 + $0xe8] sm:$0xff]
        %v2820 = vld [vmem:[%s495 + $0xf0] sm:$0xff]
        %v2821 = vld [vmem:[%s495 + $0xf8] sm:$0xff]
        %v2822 = vld [vmem:[%s495 + $0x100] sm:$0xff]
        %v2823 = vld [vmem:[%s495 + $0x108] sm:$0xff]
        %v2824 = vld [vmem:[%s495 + $0x110] sm:$0xff]
        %v2825 = vld [vmem:[%s495 + $0x118] sm:$0xff]
        %v2826 = vld [vmem:[%s495 + $0x120] sm:$0xff]
        %v2827 = vld [vmem:[%s495 + $0x128] sm:$0xff]
        %v2828 = vld [vmem:[%s495 + $0x130] sm:$0xff]
        %v2829 = vld [vmem:[%s495 + $0x138] sm:$0xff]
        %v2830 = vld [vmem:[%s495 + $0x140] sm:$0xff]
        %v2831 = vld [vmem:[%s495 + $0x148] sm:$0xff]
        %v2832 = vld [vmem:[%s495 + $0x150] sm:$0xff]
        %v2833 = vld [vmem:[%s495 + $0x158] sm:$0xff]
        %v2834 = vld [vmem:[%s495 + $0x160] sm:$0xff]
        %v2835 = vld [vmem:[%s495 + $0x168] sm:$0xff]
        %v2836 = vld [vmem:[%s495 + $0x170] sm:$0xff]
        %v2837 = vld [vmem:[%s495 + $0x178] sm:$0xff]
        %v2838 = vld [vmem:[%s495 + $0x180] sm:$0xff]
        %v2839 = vld [vmem:[%s495 + $0x188] sm:$0xff]
        %v2840 = vld [vmem:[%s495 + $0x190] sm:$0xff]
        %v2841 = vld [vmem:[%s495 + $0x198] sm:$0xff]
        %v2842 = vld [vmem:[%s495 + $0x1a0] sm:$0xff]
        %v2843 = vld [vmem:[%s495 + $0x1a8] sm:$0xff]
        %v2844 = vld [vmem:[%s495 + $0x1b0] sm:$0xff]
        %v2845 = vld [vmem:[%s495 + $0x1b8] sm:$0xff]
        %v2846 = vld [vmem:[%s495 + $0x1c0] sm:$0xff]
        %v2847 = vld [vmem:[%s495 + $0x1c8] sm:$0xff]
        %v2848 = vld [vmem:[%s495 + $0x1d0] sm:$0xff]
        %v2849 = vld [vmem:[%s495 + $0x1d8] sm:$0xff]
        %v2850 = vld [vmem:[%s495 + $0x1e0] sm:$0xff]
        %v2851 = vld [vmem:[%s495 + $0x1e8] sm:$0xff]
        %v2852 = vld [vmem:[%s495 + $0x1f0] sm:$0xff]
        %v2853 = vld [vmem:[%s495 + $0x1f8] sm:$0xff]
        %v2854 = vld [vmem:[%s495 + $0x200] sm:$0xff]
        %v2855 = vld [vmem:[%s495 + $0x208] sm:$0xff]
        %v2856 = vld [vmem:[%s495 + $0x210] sm:$0xff]
        %v2857 = vld [vmem:[%s495 + $0x218] sm:$0xff]
        %v2858 = vld [vmem:[%s495 + $0x220] sm:$0xff]
        %v2859 = vld [vmem:[%s495 + $0x228] sm:$0xff]
        %v2860 = vld [vmem:[%s495 + $0x230] sm:$0xff]
        %v2861 = vld [vmem:[%s495 + $0x238] sm:$0xff]
        %v2862 = vld [vmem:[%s495 + $0x240] sm:$0xff]
        %v2863 = vld [vmem:[%s495 + $0x248] sm:$0xff]
        %v2864 = vld [vmem:[%s495 + $0x250] sm:$0xff]
        %v2865 = vld [vmem:[%s495 + $0x258] sm:$0xff]
        %v2866 = vld [vmem:[%s495 + $0x260] sm:$0xff]
        %v2867 = vld [vmem:[%s495 + $0x268] sm:$0xff]
        %v2868 = vld [vmem:[%s495 + $0x270] sm:$0xff]
        %v2869 = vld [vmem:[%s495 + $0x278] sm:$0xff]
        %v2870 = vld [vmem:[%s495 + $0x280] sm:$0xff]
        %v2871 = vld [vmem:[%s495 + $0x288] sm:$0xff]
        %v2872 = vld [vmem:[%s495 + $0x290] sm:$0xff]
        %v2873 = vld [vmem:[%s495 + $0x298] sm:$0xff]
        %v2874 = vld [vmem:[%s495 + $0x2a0] sm:$0xff]
        %v2875 = vld [vmem:[%s495 + $0x2a8] sm:$0xff]
        %v2876 = vld [vmem:[%s495 + $0x2b0] sm:$0xff]
        %v2877 = vld [vmem:[%s495 + $0x2b8] sm:$0xff]
        %v2878 = vld [vmem:[%s495 + $0x2c0] sm:$0xff]
        %v2879 = vld [vmem:[%s495 + $0x2c8] sm:$0xff]
        %v2880 = vld [vmem:[%s495 + $0x2d0] sm:$0xff]
        %v2881 = vld [vmem:[%s495 + $0x2d8] sm:$0xff]
        %v2882 = vld [vmem:[%s495 + $0x2e0] sm:$0xff]
        %v2883 = vld [vmem:[%s495 + $0x2e8] sm:$0xff]
        %v2884 = vld [vmem:[%s495 + $0x2f0] sm:$0xff]
        %v2885 = vld [vmem:[%s495 + $0x2f8] sm:$0xff]
        %v2886 = vld [vmem:[%s495 + $0x300] sm:$0xff]
        %v2887 = vld [vmem:[%s495 + $0x308] sm:$0xff]
        %v2888 = vld [vmem:[%s495 + $0x310] sm:$0xff]
        %v2889 = vld [vmem:[%s495 + $0x318] sm:$0xff]
        %v2890 = vld [vmem:[%s495 + $0x320] sm:$0xff]
        %v2891 = vld [vmem:[%s495 + $0x328] sm:$0xff]
        %v2892 = vld [vmem:[%s495 + $0x330] sm:$0xff]
        %v2893 = vld [vmem:[%s495 + $0x338] sm:$0xff]
        %v2894 = vld [vmem:[%s495 + $0x340] sm:$0xff]
        %v2895 = vld [vmem:[%s495 + $0x348] sm:$0xff]
        %v2896 = vld [vmem:[%s495 + $0x350] sm:$0xff]
        %v2897 = vld [vmem:[%s495 + $0x358] sm:$0xff]
        %v2898 = vld [vmem:[%s495 + $0x360] sm:$0xff]
        %v2899 = vld [vmem:[%s495 + $0x368] sm:$0xff]
        %v2900 = vld [vmem:[%s495 + $0x370] sm:$0xff]
        %v2901 = vld [vmem:[%s495 + $0x378] sm:$0xff]
        %v2902 = vld [vmem:[%s495 + $0x380] sm:$0xff]
        %v2903 = vld [vmem:[%s495 + $0x388] sm:$0xff]
        %v2904 = vld [vmem:[%s495 + $0x390] sm:$0xff]
        %v2905 = vld [vmem:[%s495 + $0x398] sm:$0xff]
        %v2906 = vld [vmem:[%s495 + $0x3a0] sm:$0xff]
        %v2907 = vld [vmem:[%s495 + $0x3a8] sm:$0xff]
        %v2908 = vld [vmem:[%s495 + $0x3b0] sm:$0xff]
        %v2909 = vld [vmem:[%s495 + $0x3b8] sm:$0xff]
        %v2910 = vld [vmem:[%s495 + $0x3c0] sm:$0xff]
        %v2911 = vld [vmem:[%s495 + $0x3c8] sm:$0xff]
        %v2912 = vld [vmem:[%s495 + $0x3d0] sm:$0xff]
        %v2913 = vld [vmem:[%s495 + $0x3d8] sm:$0xff]
        %v2914 = vld [vmem:[%s495 + $0x3e0] sm:$0xff]
        %v2915 = vld [vmem:[%s495 + $0x3e8] sm:$0xff]
        %v2916 = vld [vmem:[%s495 + $0x3f0] sm:$0xff]
        %v2917 = vld [vmem:[%s495 + $0x3f8] sm:$0xff]
        %v2918 = vld [vmem:[%s495 + $0x400] sm:$0xff]
        %v2919 = vld [vmem:[%s495 + $0x408] sm:$0xff]
        %v2920 = vld [vmem:[%s495 + $0x410] sm:$0xff]
        %v2921 = vld [vmem:[%s495 + $0x418] sm:$0xff]
        %v2922 = vld [vmem:[%s495 + $0x420] sm:$0xff]
        %v2923 = vld [vmem:[%s495 + $0x428] sm:$0xff]
        %v2924 = vld [vmem:[%s495 + $0x430] sm:$0xff]
        %v2925 = vld [vmem:[%s495 + $0x438] sm:$0xff]
        %v2926 = vld [vmem:[%s495 + $0x440] sm:$0xff]
        %v2927 = vld [vmem:[%s495 + $0x448] sm:$0xff]
        %v2928 = vld [vmem:[%s495 + $0x450] sm:$0xff]
        %v2929 = vld [vmem:[%s495 + $0x458] sm:$0xff]
        %v2930 = vld [vmem:[%s495 + $0x460] sm:$0xff]
        %v2931 = vld [vmem:[%s495 + $0x468] sm:$0xff]
        %v2932 = vld [vmem:[%s495 + $0x470] sm:$0xff]
        %v2933 = vld [vmem:[%s495 + $0x478] sm:$0xff]
        %v2934 = vld [vmem:[%s495 + $0x480] sm:$0x3f]
        %v2935 = vld [vmem:[%s495 + $0x488] sm:$0x3f]
        %v2936 = vld [vmem:[%s495 + $0x490] sm:$0x3f]
        %v2937 = vld [vmem:[%s495 + $0x498] sm:$0x3f]
        %v2938 = vld [vmem:[%s495 + $0x4a0] sm:$0x3f]
        %v2939 = vld [vmem:[%s495 + $0x4a8] sm:$0x3f]
        %v2940 = vld [vmem:[%s495 + $0x4b0] sm:$0x3f]
        %v2941 = vld [vmem:[%s495 + $0x4b8] sm:$0x3f]
        %v2943 = vperm.slane %v531, 0
        %v2944 = vperm.slane %v531, 1
        %v2945 = vperm.slane %v531, 2
        %v2946 = vperm.slane %v531, 3
        %v2947 = vperm.slane %v531, 4
        %v2948 = vperm.slane %v531, 5
        %v2949 = vperm.slane %v531, 6
        %v2950 = vperm.slane %v531, 7
        %v2960 = vsel %vm572, %v2787, 0
        %v2963 = vsel %vm572, %v2789, 0
        %v2966 = vsel %vm579, %v2934, 0
        %v2969 = vsel %vm579, %v2935, 0
        %v2972 = vsel %vm579, %v2936, 0
        %v2975 = vsel %vm579, %v2937, 0
        %v2978 = vsel %vm579, %v2938, 0
        %v2981 = vsel %vm579, %v2939, 0
        %v2984 = vsel %vm579, %v2940, 0
        %v2987 = vsel %vm579, %v2941, 0
        %2989 = vmatpush.msra.mxu0 %v2910
        %2990 = vmatpush.msra.mxu0 %v2902
        %2991 = vmatpush.msra.mxu0 %v2894
        %2992 = vmatpush.msra.mxu0 %v2886
        %2993 = vmatpush.msra.mxu0 %v2878
        %2994 = vmatpush.msra.mxu0 %v2870
        %2995 = vmatpush.msra.mxu0 %v2862
        %2996 = vmatpush.msra.mxu0 %v2854
        %2997 = vmatpush.msra.mxu0 %v2846
        %2998 = vmatpush.msra.mxu0 %v2838
        %2999 = vmatpush.msra.mxu0 %v2830
        %3000 = vmatpush.msra.mxu0 %v2822
        %3001 = vmatpush.msra.mxu0 %v2814
        %3002 = vmatpush.msra.mxu0 %v2806
        %3003 = vmatpush.msra.mxu0 %v2798
        %3004 = vmatpush.msra.mxu0 %v2790
        %3005 = vmatmul.f32.gmra.mxu0 %v2786
        %v3006 = vpop.f32.mrf.mxu0
        %v3007 = vadd.f32 %v2943, %v3006
        %3008 = vmatmul.f32.gmra.mxu0 %v2788
        %v3009 = vpop.f32.mrf.mxu0
        %v3010 = vadd.f32 %v2943, %v3009
        %3011 = vdwg.mxu0
        %3012 = vmatpush.msra.mxu0 0.0
        %3013 = vmatpush.msra.mxu0 0.0
        %3014 = vmatpush.msra.mxu0 0.0
        %3015 = vmatpush.msra.mxu0 0.0
        %3016 = vmatpush.msra.mxu0 0.0
        %3017 = vmatpush.msra.mxu0 0.0
        %3018 = vmatpush.msra.mxu0 0.0
        %3019 = vmatpush.msra.mxu0 0.0
        %3020 = vmatpush.msra.mxu0 0.0
        %3021 = vmatpush.msra.mxu0 0.0
        %3022 = vmatpush.msra.mxu0 0.0
        %3023 = vmatpush.msra.mxu0 0.0
        %3024 = vmatpush.msra.mxu0 0.0
        %3025 = vmatpush.msra.mxu0 %v2966
        %3026 = vmatpush.msra.mxu0 %v2926
        %3027 = vmatpush.msra.mxu0 %v2918
        %3028 = vmatmul.f32.gmra.mxu0 %v2960
        %v3029 = vpop.f32.mrf.mxu0
        %v3030 = vadd.f32 %v3007, %v3029
        %3031 = vmatmul.f32.gmra.mxu0 %v2963
        %v3032 = vpop.f32.mrf.mxu0
        %v3033 = vadd.f32 %v3010, %v3032
        %3034 = vdwg.mxu0
        %3035 = vmatpush.msra.mxu0 %v2911
        %3036 = vmatpush.msra.mxu0 %v2903
        %3037 = vmatpush.msra.mxu0 %v2895
        %3038 = vmatpush.msra.mxu0 %v2887
        %3039 = vmatpush.msra.mxu0 %v2879
        %3040 = vmatpush.msra.mxu0 %v2871
        %3041 = vmatpush.msra.mxu0 %v2863
        %3042 = vmatpush.msra.mxu0 %v2855
        %3043 = vmatpush.msra.mxu0 %v2847
        %3044 = vmatpush.msra.mxu0 %v2839
        %3045 = vmatpush.msra.mxu0 %v2831
        %3046 = vmatpush.msra.mxu0 %v2823
        %3047 = vmatpush.msra.mxu0 %v2815
        %3048 = vmatpush.msra.mxu0 %v2807
        %3049 = vmatpush.msra.mxu0 %v2799
        %3050 = vmatpush.msra.mxu0 %v2791
        %3051 = vmatmul.f32.gmra.mxu0 %v2786
        %v3052 = vpop.f32.mrf.mxu0
        %v3053 = vadd.f32 %v2944, %v3052
        %3054 = vmatmul.f32.gmra.mxu0 %v2788
        %v3055 = vpop.f32.mrf.mxu0
        %v3056 = vadd.f32 %v2944, %v3055
        %3057 = vdwg.mxu0
        %3058 = vmatpush.msra.mxu0 0.0
        %3059 = vmatpush.msra.mxu0 0.0
        %3060 = vmatpush.msra.mxu0 0.0
        %3061 = vmatpush.msra.mxu0 0.0
        %3062 = vmatpush.msra.mxu0 0.0
        %3063 = vmatpush.msra.mxu0 0.0
        %3064 = vmatpush.msra.mxu0 0.0
        %3065 = vmatpush.msra.mxu0 0.0
        %3066 = vmatpush.msra.mxu0 0.0
        %3067 = vmatpush.msra.mxu0 0.0
        %3068 = vmatpush.msra.mxu0 0.0
        %3069 = vmatpush.msra.mxu0 0.0
        %3070 = vmatpush.msra.mxu0 0.0
        %3071 = vmatpush.msra.mxu0 %v2969
        %3072 = vmatpush.msra.mxu0 %v2927
        %3073 = vmatpush.msra.mxu0 %v2919
        %3074 = vmatmul.f32.gmra.mxu0 %v2960
        %v3075 = vpop.f32.mrf.mxu0
        %v3076 = vadd.f32 %v3053, %v3075
        %3077 = vmatmul.f32.gmra.mxu0 %v2963
        %v3078 = vpop.f32.mrf.mxu0
        %v3079 = vadd.f32 %v3056, %v3078
        %3080 = vdwg.mxu0
        %3081 = vmatpush.msra.mxu0 %v2912
        %3082 = vmatpush.msra.mxu0 %v2904
        %3083 = vmatpush.msra.mxu0 %v2896
        %3084 = vmatpush.msra.mxu0 %v2888
        %3085 = vmatpush.msra.mxu0 %v2880
        %3086 = vmatpush.msra.mxu0 %v2872
        %3087 = vmatpush.msra.mxu0 %v2864
        %3088 = vmatpush.msra.mxu0 %v2856
        %3089 = vmatpush.msra.mxu0 %v2848
        %3090 = vmatpush.msra.mxu0 %v2840
        %3091 = vmatpush.msra.mxu0 %v2832
        %3092 = vmatpush.msra.mxu0 %v2824
        %3093 = vmatpush.msra.mxu0 %v2816
        %3094 = vmatpush.msra.mxu0 %v2808
        %3095 = vmatpush.msra.mxu0 %v2800
        %3096 = vmatpush.msra.mxu0 %v2792
        %3097 = vmatmul.f32.gmra.mxu0 %v2786
        %v3098 = vpop.f32.mrf.mxu0
        %v3099 = vadd.f32 %v2945, %v3098
        %3100 = vmatmul.f32.gmra.mxu0 %v2788
        %v3101 = vpop.f32.mrf.mxu0
        %v3102 = vadd.f32 %v2945, %v3101
        %3103 = vdwg.mxu0
        %3104 = vmatpush.msra.mxu0 0.0
        %3105 = vmatpush.msra.mxu0 0.0
        %3106 = vmatpush.msra.mxu0 0.0
        %3107 = vmatpush.msra.mxu0 0.0
        %3108 = vmatpush.msra.mxu0 0.0
        %3109 = vmatpush.msra.mxu0 0.0
        %3110 = vmatpush.msra.mxu0 0.0
        %3111 = vmatpush.msra.mxu0 0.0
        %3112 = vmatpush.msra.mxu0 0.0
        %3113 = vmatpush.msra.mxu0 0.0
        %3114 = vmatpush.msra.mxu0 0.0
        %3115 = vmatpush.msra.mxu0 0.0
        %3116 = vmatpush.msra.mxu0 0.0
        %3117 = vmatpush.msra.mxu0 %v2972
        %3118 = vmatpush.msra.mxu0 %v2928
        %3119 = vmatpush.msra.mxu0 %v2920
        %3120 = vmatmul.f32.gmra.mxu0 %v2960
        %v3121 = vpop.f32.mrf.mxu0
        %v3122 = vadd.f32 %v3099, %v3121
        %3123 = vmatmul.f32.gmra.mxu0 %v2963
        %v3124 = vpop.f32.mrf.mxu0
        %v3125 = vadd.f32 %v3102, %v3124
        %3126 = vdwg.mxu0
        %3127 = vmatpush.msra.mxu0 %v2913
        %3128 = vmatpush.msra.mxu0 %v2905
        %3129 = vmatpush.msra.mxu0 %v2897
        %3130 = vmatpush.msra.mxu0 %v2889
        %3131 = vmatpush.msra.mxu0 %v2881
        %3132 = vmatpush.msra.mxu0 %v2873
        %3133 = vmatpush.msra.mxu0 %v2865
        %3134 = vmatpush.msra.mxu0 %v2857
        %3135 = vmatpush.msra.mxu0 %v2849
        %3136 = vmatpush.msra.mxu0 %v2841
        %3137 = vmatpush.msra.mxu0 %v2833
        %3138 = vmatpush.msra.mxu0 %v2825
        %3139 = vmatpush.msra.mxu0 %v2817
        %3140 = vmatpush.msra.mxu0 %v2809
        %3141 = vmatpush.msra.mxu0 %v2801
        %3142 = vmatpush.msra.mxu0 %v2793
        %3143 = vmatmul.f32.gmra.mxu0 %v2786
        %v3144 = vpop.f32.mrf.mxu0
        %v3145 = vadd.f32 %v2946, %v3144
        %3146 = vmatmul.f32.gmra.mxu0 %v2788
        %v3147 = vpop.f32.mrf.mxu0
        %v3148 = vadd.f32 %v2946, %v3147
        %3149 = vdwg.mxu0
        %3150 = vmatpush.msra.mxu0 0.0
        %3151 = vmatpush.msra.mxu0 0.0
        %3152 = vmatpush.msra.mxu0 0.0
        %3153 = vmatpush.msra.mxu0 0.0
        %3154 = vmatpush.msra.mxu0 0.0
        %3155 = vmatpush.msra.mxu0 0.0
        %3156 = vmatpush.msra.mxu0 0.0
        %3157 = vmatpush.msra.mxu0 0.0
        %3158 = vmatpush.msra.mxu0 0.0
        %3159 = vmatpush.msra.mxu0 0.0
        %3160 = vmatpush.msra.mxu0 0.0
        %3161 = vmatpush.msra.mxu0 0.0
        %3162 = vmatpush.msra.mxu0 0.0
        %3163 = vmatpush.msra.mxu0 %v2975
        %3164 = vmatpush.msra.mxu0 %v2929
        %3165 = vmatpush.msra.mxu0 %v2921
        %3166 = vmatmul.f32.gmra.mxu0 %v2960
        %v3167 = vpop.f32.mrf.mxu0
        %v3168 = vadd.f32 %v3145, %v3167
        %3169 = vmatmul.f32.gmra.mxu0 %v2963
        %v3170 = vpop.f32.mrf.mxu0
        %v3171 = vadd.f32 %v3148, %v3170
        %3172 = vdwg.mxu0
        %3173 = vmatpush.msra.mxu0 %v2914
        %3174 = vmatpush.msra.mxu0 %v2906
        %3175 = vmatpush.msra.mxu0 %v2898
        %3176 = vmatpush.msra.mxu0 %v2890
        %3177 = vmatpush.msra.mxu0 %v2882
        %3178 = vmatpush.msra.mxu0 %v2874
        %3179 = vmatpush.msra.mxu0 %v2866
        %3180 = vmatpush.msra.mxu0 %v2858
        %3181 = vmatpush.msra.mxu0 %v2850
        %3182 = vmatpush.msra.mxu0 %v2842
        %3183 = vmatpush.msra.mxu0 %v2834
        %3184 = vmatpush.msra.mxu0 %v2826
        %3185 = vmatpush.msra.mxu0 %v2818
        %3186 = vmatpush.msra.mxu0 %v2810
        %3187 = vmatpush.msra.mxu0 %v2802
        %3188 = vmatpush.msra.mxu0 %v2794
        %3189 = vmatmul.f32.gmra.mxu0 %v2786
        %v3190 = vpop.f32.mrf.mxu0
        %v3191 = vadd.f32 %v2947, %v3190
        %3192 = vmatmul.f32.gmra.mxu0 %v2788
        %v3193 = vpop.f32.mrf.mxu0
        %v3194 = vadd.f32 %v2947, %v3193
        %3195 = vdwg.mxu0
        %3196 = vmatpush.msra.mxu0 0.0
        %3197 = vmatpush.msra.mxu0 0.0
        %3198 = vmatpush.msra.mxu0 0.0
        %3199 = vmatpush.msra.mxu0 0.0
        %3200 = vmatpush.msra.mxu0 0.0
        %3201 = vmatpush.msra.mxu0 0.0
        %3202 = vmatpush.msra.mxu0 0.0
        %3203 = vmatpush.msra.mxu0 0.0
        %3204 = vmatpush.msra.mxu0 0.0
        %3205 = vmatpush.msra.mxu0 0.0
        %3206 = vmatpush.msra.mxu0 0.0
        %3207 = vmatpush.msra.mxu0 0.0
        %3208 = vmatpush.msra.mxu0 0.0
        %3209 = vmatpush.msra.mxu0 %v2978
        %3210 = vmatpush.msra.mxu0 %v2930
        %3211 = vmatpush.msra.mxu0 %v2922
        %3212 = vmatmul.f32.gmra.mxu0 %v2960
        %v3213 = vpop.f32.mrf.mxu0
        %v3214 = vadd.f32 %v3191, %v3213
        %3215 = vmatmul.f32.gmra.mxu0 %v2963
        %v3216 = vpop.f32.mrf.mxu0
        %v3217 = vadd.f32 %v3194, %v3216
        %3218 = vdwg.mxu0
        %3219 = vmatpush.msra.mxu0 %v2915
        %3220 = vmatpush.msra.mxu0 %v2907
        %3221 = vmatpush.msra.mxu0 %v2899
        %3222 = vmatpush.msra.mxu0 %v2891
        %3223 = vmatpush.msra.mxu0 %v2883
        %3224 = vmatpush.msra.mxu0 %v2875
        %3225 = vmatpush.msra.mxu0 %v2867
        %3226 = vmatpush.msra.mxu0 %v2859
        %3227 = vmatpush.msra.mxu0 %v2851
        %3228 = vmatpush.msra.mxu0 %v2843
        %3229 = vmatpush.msra.mxu0 %v2835
        %3230 = vmatpush.msra.mxu0 %v2827
        %3231 = vmatpush.msra.mxu0 %v2819
        %3232 = vmatpush.msra.mxu0 %v2811
        %3233 = vmatpush.msra.mxu0 %v2803
        %3234 = vmatpush.msra.mxu0 %v2795
        %3235 = vmatmul.f32.gmra.mxu0 %v2786
        %v3236 = vpop.f32.mrf.mxu0
        %v3237 = vadd.f32 %v2948, %v3236
        %3238 = vmatmul.f32.gmra.mxu0 %v2788
        %v3239 = vpop.f32.mrf.mxu0
        %v3240 = vadd.f32 %v2948, %v3239
        %3241 = vdwg.mxu0
        %3242 = vmatpush.msra.mxu0 0.0
        %3243 = vmatpush.msra.mxu0 0.0
        %3244 = vmatpush.msra.mxu0 0.0
        %3245 = vmatpush.msra.mxu0 0.0
        %3246 = vmatpush.msra.mxu0 0.0
        %3247 = vmatpush.msra.mxu0 0.0
        %3248 = vmatpush.msra.mxu0 0.0
        %3249 = vmatpush.msra.mxu0 0.0
        %3250 = vmatpush.msra.mxu0 0.0
        %3251 = vmatpush.msra.mxu0 0.0
        %3252 = vmatpush.msra.mxu0 0.0
        %3253 = vmatpush.msra.mxu0 0.0
        %3254 = vmatpush.msra.mxu0 0.0
        %3255 = vmatpush.msra.mxu0 %v2981
        %3256 = vmatpush.msra.mxu0 %v2931
        %3257 = vmatpush.msra.mxu0 %v2923
        %3258 = vmatmul.f32.gmra.mxu0 %v2960
        %v3259 = vpop.f32.mrf.mxu0
        %v3260 = vadd.f32 %v3237, %v3259
        %3261 = vmatmul.f32.gmra.mxu0 %v2963
        %v3262 = vpop.f32.mrf.mxu0
        %v3263 = vadd.f32 %v3240, %v3262
        %3264 = vdwg.mxu0
        %3265 = vmatpush.msra.mxu0 %v2916
        %3266 = vmatpush.msra.mxu0 %v2908
        %3267 = vmatpush.msra.mxu0 %v2900
        %3268 = vmatpush.msra.mxu0 %v2892
        %3269 = vmatpush.msra.mxu0 %v2884
        %3270 = vmatpush.msra.mxu0 %v2876
        %3271 = vmatpush.msra.mxu0 %v2868
        %3272 = vmatpush.msra.mxu0 %v2860
        %3273 = vmatpush.msra.mxu0 %v2852
        %3274 = vmatpush.msra.mxu0 %v2844
        %3275 = vmatpush.msra.mxu0 %v2836
        %3276 = vmatpush.msra.mxu0 %v2828
        %3277 = vmatpush.msra.mxu0 %v2820
        %3278 = vmatpush.msra.mxu0 %v2812
        %3279 = vmatpush.msra.mxu0 %v2804
        %3280 = vmatpush.msra.mxu0 %v2796
        %3281 = vmatmul.f32.gmra.mxu0 %v2786
        %v3282 = vpop.f32.mrf.mxu0
        %v3283 = vadd.f32 %v2949, %v3282
        %3284 = vmatmul.f32.gmra.mxu0 %v2788
        %v3285 = vpop.f32.mrf.mxu0
        %v3286 = vadd.f32 %v2949, %v3285
        %3287 = vdwg.mxu0
        %3288 = vmatpush.msra.mxu0 0.0
        %3289 = vmatpush.msra.mxu0 0.0
        %3290 = vmatpush.msra.mxu0 0.0
        %3291 = vmatpush.msra.mxu0 0.0
        %3292 = vmatpush.msra.mxu0 0.0
        %3293 = vmatpush.msra.mxu0 0.0
        %3294 = vmatpush.msra.mxu0 0.0
        %3295 = vmatpush.msra.mxu0 0.0
        %3296 = vmatpush.msra.mxu0 0.0
        %3297 = vmatpush.msra.mxu0 0.0
        %3298 = vmatpush.msra.mxu0 0.0
        %3299 = vmatpush.msra.mxu0 0.0
        %3300 = vmatpush.msra.mxu0 0.0
        %3301 = vmatpush.msra.mxu0 %v2984
        %3302 = vmatpush.msra.mxu0 %v2932
        %3303 = vmatpush.msra.mxu0 %v2924
        %3304 = vmatmul.f32.gmra.mxu0 %v2960
        %v3305 = vpop.f32.mrf.mxu0
        %v3306 = vadd.f32 %v3283, %v3305
        %3307 = vmatmul.f32.gmra.mxu0 %v2963
        %v3308 = vpop.f32.mrf.mxu0
        %v3309 = vadd.f32 %v3286, %v3308
        %3310 = vdwg.mxu0
        %3311 = vmatpush.msra.mxu0 %v2917
        %3312 = vmatpush.msra.mxu0 %v2909
        %3313 = vmatpush.msra.mxu0 %v2901
        %3314 = vmatpush.msra.mxu0 %v2893
        %3315 = vmatpush.msra.mxu0 %v2885
        %3316 = vmatpush.msra.mxu0 %v2877
        %3317 = vmatpush.msra.mxu0 %v2869
        %3318 = vmatpush.msra.mxu0 %v2861
        %3319 = vmatpush.msra.mxu0 %v2853
        %3320 = vmatpush.msra.mxu0 %v2845
        %3321 = vmatpush.msra.mxu0 %v2837
        %3322 = vmatpush.msra.mxu0 %v2829
        %3323 = vmatpush.msra.mxu0 %v2821
        %3324 = vmatpush.msra.mxu0 %v2813
        %3325 = vmatpush.msra.mxu0 %v2805
        %3326 = vmatpush.msra.mxu0 %v2797
        %3327 = vmatmul.f32.gmra.mxu0 %v2786
        %v3328 = vpop.f32.mrf.mxu0
        %v3329 = vadd.f32 %v2950, %v3328
        %3330 = vmatmul.f32.gmra.mxu0 %v2788
        %v3331 = vpop.f32.mrf.mxu0
        %v3332 = vadd.f32 %v2950, %v3331
        %3333 = vdwg.mxu0
        %3334 = vmatpush.msra.mxu0 0.0
        %3335 = vmatpush.msra.mxu0 0.0
        %3336 = vmatpush.msra.mxu0 0.0
        %3337 = vmatpush.msra.mxu0 0.0
        %3338 = vmatpush.msra.mxu0 0.0
        %3339 = vmatpush.msra.mxu0 0.0
        %3340 = vmatpush.msra.mxu0 0.0
        %3341 = vmatpush.msra.mxu0 0.0
        %3342 = vmatpush.msra.mxu0 0.0
        %3343 = vmatpush.msra.mxu0 0.0
        %3344 = vmatpush.msra.mxu0 0.0
        %3345 = vmatpush.msra.mxu0 0.0
        %3346 = vmatpush.msra.mxu0 0.0
        %3347 = vmatpush.msra.mxu0 %v2987
        %3348 = vmatpush.msra.mxu0 %v2933
        %3349 = vmatpush.msra.mxu0 %v2925
        %3350 = vmatmul.f32.gmra.mxu0 %v2960
        %v3351 = vpop.f32.mrf.mxu0
        %v3352 = vadd.f32 %v3329, %v3351
        %3353 = vmatmul.f32.gmra.mxu0 %v2963
        %v3354 = vpop.f32.mrf.mxu0
        %v3355 = vadd.f32 %v3332, %v3354
        %3356 = vdwg.mxu0
        %v3357 = vmul.f32 %v3030, 0.5
        %v3358 = vmul.f32 %v3076, 0.5
        %v3359 = vmul.f32 %v3122, 0.5
        %v3360 = vmul.f32 %v3168, 0.5
        %v3361 = vmul.f32 %v3214, 0.5
        %v3362 = vmul.f32 %v3260, 0.5
        %v3363 = vmul.f32 %v3306, 0.5
        %v3364 = vmul.f32 %v3352, 0.5
        %v3365 = vmul.f32 %v3033, 0.5
        %v3366 = vmul.f32 %v3079, 0.5
        %v3367 = vmul.f32 %v3125, 0.5
        %v3368 = vmul.f32 %v3171, 0.5
        %v3369 = vmul.f32 %v3217, 0.5
        %v3370 = vmul.f32 %v3263, 0.5
        %v3371 = vmul.f32 %v3309, 0.5
        %v3372 = vmul.f32 %v3355, 0.5
        %v3373 = vmul.f32 %v3030, 0.70710677
        %v3374 = vmul.f32 %v3076, 0.70710677
        %v3375 = vmul.f32 %v3122, 0.70710677
        %v3376 = vmul.f32 %v3168, 0.70710677
        %v3377 = vmul.f32 %v3214, 0.70710677
        %v3378 = vmul.f32 %v3260, 0.70710677
        %v3379 = vmul.f32 %v3306, 0.70710677
        %v3380 = vmul.f32 %v3352, 0.70710677
        %v3381 = vmul.f32 %v3033, 0.70710677
        %v3382 = vmul.f32 %v3079, 0.70710677
        %v3383 = vmul.f32 %v3125, 0.70710677
        %v3384 = vmul.f32 %v3171, 0.70710677
        %v3385 = vmul.f32 %v3217, 0.70710677
        %v3386 = vmul.f32 %v3263, 0.70710677
        %v3387 = vmul.f32 %v3309, 0.70710677
        %v3388 = vmul.f32 %v3355, 0.70710677
        %v3389 = vand.u32 2147483647, %v3373
        %v3390 = vand.u32 2147483647, %v3374
        %v3391 = vand.u32 2147483647, %v3375
        %v3392 = vand.u32 2147483647, %v3376
        %v3393 = vand.u32 2147483647, %v3377
        %v3394 = vand.u32 2147483647, %v3378
        %v3395 = vand.u32 2147483647, %v3379
        %v3396 = vand.u32 2147483647, %v3380
        %v3397 = vand.u32 2147483647, %v3381
        %v3398 = vand.u32 2147483647, %v3382
        %v3399 = vand.u32 2147483647, %v3383
        %v3400 = vand.u32 2147483647, %v3384
        %v3401 = vand.u32 2147483647, %v3385
        %v3402 = vand.u32 2147483647, %v3386
        %v3403 = vand.u32 2147483647, %v3387
        %v3404 = vand.u32 2147483647, %v3388
        %v3405 = vmul.f32 %v3389, 0.5
        %v3406 = vmul.f32 %v3390, 0.5
        %v3407 = vmul.f32 %v3391, 0.5
        %v3408 = vmul.f32 %v3392, 0.5
        %v3409 = vmul.f32 %v3393, 0.5
        %v3410 = vmul.f32 %v3394, 0.5
        %v3411 = vmul.f32 %v3395, 0.5
        %v3412 = vmul.f32 %v3396, 0.5
        %v3413 = vmul.f32 %v3397, 0.5
        %v3414 = vmul.f32 %v3398, 0.5
        %v3415 = vmul.f32 %v3399, 0.5
        %v3416 = vmul.f32 %v3400, 0.5
        %v3417 = vmul.f32 %v3401, 0.5
        %v3418 = vmul.f32 %v3402, 0.5
        %v3419 = vmul.f32 %v3403, 0.5
        %v3420 = vmul.f32 %v3404, 0.5
        %v3421 = vadd.f32 %v3405, 1.0
        %v3422 = vadd.f32 %v3406, 1.0
        %v3423 = vadd.f32 %v3407, 1.0
        %v3424 = vadd.f32 %v3408, 1.0
        %v3425 = vadd.f32 %v3409, 1.0
        %v3426 = vadd.f32 %v3410, 1.0
        %v3427 = vadd.f32 %v3411, 1.0
        %v3428 = vadd.f32 %v3412, 1.0
        %v3429 = vadd.f32 %v3413, 1.0
        %v3430 = vadd.f32 %v3414, 1.0
        %v3431 = vadd.f32 %v3415, 1.0
        %v3432 = vadd.f32 %v3416, 1.0
        %v3433 = vadd.f32 %v3417, 1.0
        %v3434 = vadd.f32 %v3418, 1.0
        %v3435 = vadd.f32 %v3419, 1.0
        %v3436 = vadd.f32 %v3420, 1.0
        %v3437 = vrcp.pop %v3421
        %v3438 = vmul.f32 %v3421, %v3437
        %v3439 = vsub.f32 1.0, %v3438
        %v3440 = vmul.f32 %v3437, %v3439
        %v3441 = vadd.f32 %v3437, %v3440
        %vm3442 = vweird.f32 %v3421
        %vm3443 = vweird.f32 %v3437
        %vm3444 = vmor %vm3442, %vm3443
        %v3445 = vsel %vm3444, %v3437, %v3441
        %v3446 = vand.u32 2147483647, %v3421
        %vm3447 = vcmp.eq.f32.partialorder %v3446, 8.507059e+37
        %v3448 = vand.u32 %v3421, 2147483648
        %v3449 = vor.u32 1.1754944e-38, %v3448
        %v3450 = vsel %vm3447, %v3449, %v3445
        %v3451 = vmul.f32 1.0, %v3450
        %v3452 = vrcp.pop %v3422
        %v3453 = vmul.f32 %v3422, %v3452
        %v3454 = vsub.f32 1.0, %v3453
        %v3455 = vmul.f32 %v3452, %v3454
        %v3456 = vadd.f32 %v3452, %v3455
        %vm3457 = vweird.f32 %v3422
        %vm3458 = vweird.f32 %v3452
        %vm3459 = vmor %vm3457, %vm3458
        %v3460 = vsel %vm3459, %v3452, %v3456
        %v3461 = vand.u32 2147483647, %v3422
        %vm3462 = vcmp.eq.f32.partialorder %v3461, 8.507059e+37
        %v3463 = vand.u32 %v3422, 2147483648
        %v3464 = vor.u32 1.1754944e-38, %v3463
        %v3465 = vsel %vm3462, %v3464, %v3460
        %v3466 = vmul.f32 1.0, %v3465
        %v3467 = vrcp.pop %v3423
        %v3468 = vmul.f32 %v3423, %v3467
        %v3469 = vsub.f32 1.0, %v3468
        %v3470 = vmul.f32 %v3467, %v3469
        %v3471 = vadd.f32 %v3467, %v3470
        %vm3472 = vweird.f32 %v3423
        %vm3473 = vweird.f32 %v3467
        %vm3474 = vmor %vm3472, %vm3473
        %v3475 = vsel %vm3474, %v3467, %v3471
        %v3476 = vand.u32 2147483647, %v3423
        %vm3477 = vcmp.eq.f32.partialorder %v3476, 8.507059e+37
        %v3478 = vand.u32 %v3423, 2147483648
        %v3479 = vor.u32 1.1754944e-38, %v3478
        %v3480 = vsel %vm3477, %v3479, %v3475
        %v3481 = vmul.f32 1.0, %v3480
        %v3482 = vrcp.pop %v3424
        %v3483 = vmul.f32 %v3424, %v3482
        %v3484 = vsub.f32 1.0, %v3483
        %v3485 = vmul.f32 %v3482, %v3484
        %v3486 = vadd.f32 %v3482, %v3485
        %vm3487 = vweird.f32 %v3424
        %vm3488 = vweird.f32 %v3482
        %vm3489 = vmor %vm3487, %vm3488
        %v3490 = vsel %vm3489, %v3482, %v3486
        %v3491 = vand.u32 2147483647, %v3424
        %vm3492 = vcmp.eq.f32.partialorder %v3491, 8.507059e+37
        %v3493 = vand.u32 %v3424, 2147483648
        %v3494 = vor.u32 1.1754944e-38, %v3493
        %v3495 = vsel %vm3492, %v3494, %v3490
        %v3496 = vmul.f32 1.0, %v3495
        %v3497 = vrcp.pop %v3425
        %v3498 = vmul.f32 %v3425, %v3497
        %v3499 = vsub.f32 1.0, %v3498
        %v3500 = vmul.f32 %v3497, %v3499
        %v3501 = vadd.f32 %v3497, %v3500
        %vm3502 = vweird.f32 %v3425
        %vm3503 = vweird.f32 %v3497
        %vm3504 = vmor %vm3502, %vm3503
        %v3505 = vsel %vm3504, %v3497, %v3501
        %v3506 = vand.u32 2147483647, %v3425
        %vm3507 = vcmp.eq.f32.partialorder %v3506, 8.507059e+37
        %v3508 = vand.u32 %v3425, 2147483648
        %v3509 = vor.u32 1.1754944e-38, %v3508
        %v3510 = vsel %vm3507, %v3509, %v3505
        %v3511 = vmul.f32 1.0, %v3510
        %v3512 = vrcp.pop %v3426
        %v3513 = vmul.f32 %v3426, %v3512
        %v3514 = vsub.f32 1.0, %v3513
        %v3515 = vmul.f32 %v3512, %v3514
        %v3516 = vadd.f32 %v3512, %v3515
        %vm3517 = vweird.f32 %v3426
        %vm3518 = vweird.f32 %v3512
        %vm3519 = vmor %vm3517, %vm3518
        %v3520 = vsel %vm3519, %v3512, %v3516
        %v3521 = vand.u32 2147483647, %v3426
        %vm3522 = vcmp.eq.f32.partialorder %v3521, 8.507059e+37
        %v3523 = vand.u32 %v3426, 2147483648
        %v3524 = vor.u32 1.1754944e-38, %v3523
        %v3525 = vsel %vm3522, %v3524, %v3520
        %v3526 = vmul.f32 1.0, %v3525
        %v3527 = vrcp.pop %v3427
        %v3528 = vmul.f32 %v3427, %v3527
        %v3529 = vsub.f32 1.0, %v3528
        %v3530 = vmul.f32 %v3527, %v3529
        %v3531 = vadd.f32 %v3527, %v3530
        %vm3532 = vweird.f32 %v3427
        %vm3533 = vweird.f32 %v3527
        %vm3534 = vmor %vm3532, %vm3533
        %v3535 = vsel %vm3534, %v3527, %v3531
        %v3536 = vand.u32 2147483647, %v3427
        %vm3537 = vcmp.eq.f32.partialorder %v3536, 8.507059e+37
        %v3538 = vand.u32 %v3427, 2147483648
        %v3539 = vor.u32 1.1754944e-38, %v3538
        %v3540 = vsel %vm3537, %v3539, %v3535
        %v3541 = vmul.f32 1.0, %v3540
        %v3542 = vrcp.pop %v3428
        %v3543 = vmul.f32 %v3428, %v3542
        %v3544 = vsub.f32 1.0, %v3543
        %v3545 = vmul.f32 %v3542, %v3544
        %v3546 = vadd.f32 %v3542, %v3545
        %vm3547 = vweird.f32 %v3428
        %vm3548 = vweird.f32 %v3542
        %vm3549 = vmor %vm3547, %vm3548
        %v3550 = vsel %vm3549, %v3542, %v3546
        %v3551 = vand.u32 2147483647, %v3428
        %vm3552 = vcmp.eq.f32.partialorder %v3551, 8.507059e+37
        %v3553 = vand.u32 %v3428, 2147483648
        %v3554 = vor.u32 1.1754944e-38, %v3553
        %v3555 = vsel %vm3552, %v3554, %v3550
        %v3556 = vmul.f32 1.0, %v3555
        %v3557 = vrcp.pop %v3429
        %v3558 = vmul.f32 %v3429, %v3557
        %v3559 = vsub.f32 1.0, %v3558
        %v3560 = vmul.f32 %v3557, %v3559
        %v3561 = vadd.f32 %v3557, %v3560
        %vm3562 = vweird.f32 %v3429
        %vm3563 = vweird.f32 %v3557
        %vm3564 = vmor %vm3562, %vm3563
        %v3565 = vsel %vm3564, %v3557, %v3561
        %v3566 = vand.u32 2147483647, %v3429
        %vm3567 = vcmp.eq.f32.partialorder %v3566, 8.507059e+37
        %v3568 = vand.u32 %v3429, 2147483648
        %v3569 = vor.u32 1.1754944e-38, %v3568
        %v3570 = vsel %vm3567, %v3569, %v3565
        %v3571 = vmul.f32 1.0, %v3570
        %v3572 = vrcp.pop %v3430
        %v3573 = vmul.f32 %v3430, %v3572
        %v3574 = vsub.f32 1.0, %v3573
        %v3575 = vmul.f32 %v3572, %v3574
        %v3576 = vadd.f32 %v3572, %v3575
        %vm3577 = vweird.f32 %v3430
        %vm3578 = vweird.f32 %v3572
        %vm3579 = vmor %vm3577, %vm3578
        %v3580 = vsel %vm3579, %v3572, %v3576
        %v3581 = vand.u32 2147483647, %v3430
        %vm3582 = vcmp.eq.f32.partialorder %v3581, 8.507059e+37
        %v3583 = vand.u32 %v3430, 2147483648
        %v3584 = vor.u32 1.1754944e-38, %v3583
        %v3585 = vsel %vm3582, %v3584, %v3580
        %v3586 = vmul.f32 1.0, %v3585
        %v3587 = vrcp.pop %v3431
        %v3588 = vmul.f32 %v3431, %v3587
        %v3589 = vsub.f32 1.0, %v3588
        %v3590 = vmul.f32 %v3587, %v3589
        %v3591 = vadd.f32 %v3587, %v3590
        %vm3592 = vweird.f32 %v3431
        %vm3593 = vweird.f32 %v3587
        %vm3594 = vmor %vm3592, %vm3593
        %v3595 = vsel %vm3594, %v3587, %v3591
        %v3596 = vand.u32 2147483647, %v3431
        %vm3597 = vcmp.eq.f32.partialorder %v3596, 8.507059e+37
        %v3598 = vand.u32 %v3431, 2147483648
        %v3599 = vor.u32 1.1754944e-38, %v3598
        %v3600 = vsel %vm3597, %v3599, %v3595
        %v3601 = vmul.f32 1.0, %v3600
        %v3602 = vrcp.pop %v3432
        %v3603 = vmul.f32 %v3432, %v3602
        %v3604 = vsub.f32 1.0, %v3603
        %v3605 = vmul.f32 %v3602, %v3604
        %v3606 = vadd.f32 %v3602, %v3605
        %vm3607 = vweird.f32 %v3432
        %vm3608 = vweird.f32 %v3602
        %vm3609 = vmor %vm3607, %vm3608
        %v3610 = vsel %vm3609, %v3602, %v3606
        %v3611 = vand.u32 2147483647, %v3432
        %vm3612 = vcmp.eq.f32.partialorder %v3611, 8.507059e+37
        %v3613 = vand.u32 %v3432, 2147483648
        %v3614 = vor.u32 1.1754944e-38, %v3613
        %v3615 = vsel %vm3612, %v3614, %v3610
        %v3616 = vmul.f32 1.0, %v3615
        %v3617 = vrcp.pop %v3433
        %v3618 = vmul.f32 %v3433, %v3617
        %v3619 = vsub.f32 1.0, %v3618
        %v3620 = vmul.f32 %v3617, %v3619
        %v3621 = vadd.f32 %v3617, %v3620
        %vm3622 = vweird.f32 %v3433
        %vm3623 = vweird.f32 %v3617
        %vm3624 = vmor %vm3622, %vm3623
        %v3625 = vsel %vm3624, %v3617, %v3621
        %v3626 = vand.u32 2147483647, %v3433
        %vm3627 = vcmp.eq.f32.partialorder %v3626, 8.507059e+37
        %v3628 = vand.u32 %v3433, 2147483648
        %v3629 = vor.u32 1.1754944e-38, %v3628
        %v3630 = vsel %vm3627, %v3629, %v3625
        %v3631 = vmul.f32 1.0, %v3630
        %v3632 = vrcp.pop %v3434
        %v3633 = vmul.f32 %v3434, %v3632
        %v3634 = vsub.f32 1.0, %v3633
        %v3635 = vmul.f32 %v3632, %v3634
        %v3636 = vadd.f32 %v3632, %v3635
        %vm3637 = vweird.f32 %v3434
        %vm3638 = vweird.f32 %v3632
        %vm3639 = vmor %vm3637, %vm3638
        %v3640 = vsel %vm3639, %v3632, %v3636
        %v3641 = vand.u32 2147483647, %v3434
        %vm3642 = vcmp.eq.f32.partialorder %v3641, 8.507059e+37
        %v3643 = vand.u32 %v3434, 2147483648
        %v3644 = vor.u32 1.1754944e-38, %v3643
        %v3645 = vsel %vm3642, %v3644, %v3640
        %v3646 = vmul.f32 1.0, %v3645
        %v3647 = vrcp.pop %v3435
        %v3648 = vmul.f32 %v3435, %v3647
        %v3649 = vsub.f32 1.0, %v3648
        %v3650 = vmul.f32 %v3647, %v3649
        %v3651 = vadd.f32 %v3647, %v3650
        %vm3652 = vweird.f32 %v3435
        %vm3653 = vweird.f32 %v3647
        %vm3654 = vmor %vm3652, %vm3653
        %v3655 = vsel %vm3654, %v3647, %v3651
        %v3656 = vand.u32 2147483647, %v3435
        %vm3657 = vcmp.eq.f32.partialorder %v3656, 8.507059e+37
        %v3658 = vand.u32 %v3435, 2147483648
        %v3659 = vor.u32 1.1754944e-38, %v3658
        %v3660 = vsel %vm3657, %v3659, %v3655
        %v3661 = vmul.f32 1.0, %v3660
        %v3662 = vrcp.pop %v3436
        %v3663 = vmul.f32 %v3436, %v3662
        %v3664 = vsub.f32 1.0, %v3663
        %v3665 = vmul.f32 %v3662, %v3664
        %v3666 = vadd.f32 %v3662, %v3665
        %vm3667 = vweird.f32 %v3436
        %vm3668 = vweird.f32 %v3662
        %vm3669 = vmor %vm3667, %vm3668
        %v3670 = vsel %vm3669, %v3662, %v3666
        %v3671 = vand.u32 2147483647, %v3436
        %vm3672 = vcmp.eq.f32.partialorder %v3671, 8.507059e+37
        %v3673 = vand.u32 %v3436, 2147483648
        %v3674 = vor.u32 1.1754944e-38, %v3673
        %v3675 = vsel %vm3672, %v3674, %v3670
        %v3676 = vmul.f32 1.0, %v3675
        %v3677 = vmul.f32 %v3451, 0.17087276
        %v3678 = vmul.f32 %v3466, 0.17087276
        %v3679 = vmul.f32 %v3481, 0.17087276
        %v3680 = vmul.f32 %v3496, 0.17087276
        %v3681 = vmul.f32 %v3511, 0.17087276
        %v3682 = vmul.f32 %v3526, 0.17087276
        %v3683 = vmul.f32 %v3541, 0.17087276
        %v3684 = vmul.f32 %v3556, 0.17087276
        %v3685 = vmul.f32 %v3571, 0.17087276
        %v3686 = vmul.f32 %v3586, 0.17087276
        %v3687 = vmul.f32 %v3601, 0.17087276
        %v3688 = vmul.f32 %v3616, 0.17087276
        %v3689 = vmul.f32 %v3631, 0.17087276
        %v3690 = vmul.f32 %v3646, 0.17087276
        %v3691 = vmul.f32 %v3661, 0.17087276
        %v3692 = vmul.f32 %v3676, 0.17087276
        %v3693 = vadd.f32 %v3677, -0.82215226
        %v3694 = vadd.f32 %v3678, -0.82215226
        %v3695 = vadd.f32 %v3679, -0.82215226
        %v3696 = vadd.f32 %v3680, -0.82215226
        %v3697 = vadd.f32 %v3681, -0.82215226
        %v3698 = vadd.f32 %v3682, -0.82215226
        %v3699 = vadd.f32 %v3683, -0.82215226
        %v3700 = vadd.f32 %v3684, -0.82215226
        %v3701 = vadd.f32 %v3685, -0.82215226
        %v3702 = vadd.f32 %v3686, -0.82215226
        %v3703 = vadd.f32 %v3687, -0.82215226
        %v3704 = vadd.f32 %v3688, -0.82215226
        %v3705 = vadd.f32 %v3689, -0.82215226
        %v3706 = vadd.f32 %v3690, -0.82215226
        %v3707 = vadd.f32 %v3691, -0.82215226
        %v3708 = vadd.f32 %v3692, -0.82215226
        %v3709 = vmul.f32 %v3451, %v3693
        %v3710 = vmul.f32 %v3466, %v3694
        %v3711 = vmul.f32 %v3481, %v3695
        %v3712 = vmul.f32 %v3496, %v3696
        %v3713 = vmul.f32 %v3511, %v3697
        %v3714 = vmul.f32 %v3526, %v3698
        %v3715 = vmul.f32 %v3541, %v3699
        %v3716 = vmul.f32 %v3556, %v3700
        %v3717 = vmul.f32 %v3571, %v3701
        %v3718 = vmul.f32 %v3586, %v3702
        %v3719 = vmul.f32 %v3601, %v3703
        %v3720 = vmul.f32 %v3616, %v3704
        %v3721 = vmul.f32 %v3631, %v3705
        %v3722 = vmul.f32 %v3646, %v3706
        %v3723 = vmul.f32 %v3661, %v3707
        %v3724 = vmul.f32 %v3676, %v3708
        %v3725 = vadd.f32 %v3709, 1.4885159
        %v3726 = vadd.f32 %v3710, 1.4885159
        %v3727 = vadd.f32 %v3711, 1.4885159
        %v3728 = vadd.f32 %v3712, 1.4885159
        %v3729 = vadd.f32 %v3713, 1.4885159
        %v3730 = vadd.f32 %v3714, 1.4885159
        %v3731 = vadd.f32 %v3715, 1.4885159
        %v3732 = vadd.f32 %v3716, 1.4885159
        %v3733 = vadd.f32 %v3717, 1.4885159
        %v3734 = vadd.f32 %v3718, 1.4885159
        %v3735 = vadd.f32 %v3719, 1.4885159
        %v3736 = vadd.f32 %v3720, 1.4885159
        %v3737 = vadd.f32 %v3721, 1.4885159
        %v3738 = vadd.f32 %v3722, 1.4885159
        %v3739 = vadd.f32 %v3723, 1.4885159
        %v3740 = vadd.f32 %v3724, 1.4885159
        %v3741 = vmul.f32 %v3451, %v3725
        %v3742 = vmul.f32 %v3466, %v3726
        %v3743 = vmul.f32 %v3481, %v3727
        %v3744 = vmul.f32 %v3496, %v3728
        %v3745 = vmul.f32 %v3511, %v3729
        %v3746 = vmul.f32 %v3526, %v3730
        %v3747 = vmul.f32 %v3541, %v3731
        %v3748 = vmul.f32 %v3556, %v3732
        %v3749 = vmul.f32 %v3571, %v3733
        %v3750 = vmul.f32 %v3586, %v3734
        %v3751 = vmul.f32 %v3601, %v3735
        %v3752 = vmul.f32 %v3616, %v3736
        %v3753 = vmul.f32 %v3631, %v3737
        %v3754 = vmul.f32 %v3646, %v3738
        %v3755 = vmul.f32 %v3661, %v3739
        %v3756 = vmul.f32 %v3676, %v3740
        %v3757 = vadd.f32 %v3741, -1.135204
        %v3758 = vadd.f32 %v3742, -1.135204
        %v3759 = vadd.f32 %v3743, -1.135204
        %v3760 = vadd.f32 %v3744, -1.135204
        %v3761 = vadd.f32 %v3745, -1.135204
        %v3762 = vadd.f32 %v3746, -1.135204
        %v3763 = vadd.f32 %v3747, -1.135204
        %v3764 = vadd.f32 %v3748, -1.135204
        %v3765 = vadd.f32 %v3749, -1.135204
        %v3766 = vadd.f32 %v3750, -1.135204
        %v3767 = vadd.f32 %v3751, -1.135204
        %v3768 = vadd.f32 %v3752, -1.135204
        %v3769 = vadd.f32 %v3753, -1.135204
        %v3770 = vadd.f32 %v3754, -1.135204
        %v3771 = vadd.f32 %v3755, -1.135204
        %v3772 = vadd.f32 %v3756, -1.135204
        %v3773 = vmul.f32 %v3451, %v3757
        %v3774 = vmul.f32 %v3466, %v3758
        %v3775 = vmul.f32 %v3481, %v3759
        %v3776 = vmul.f32 %v3496, %v3760
        %v3777 = vmul.f32 %v3511, %v3761
        %v3778 = vmul.f32 %v3526, %v3762
        %v3779 = vmul.f32 %v3541, %v3763
        %v3780 = vmul.f32 %v3556, %v3764
        %v3781 = vmul.f32 %v3571, %v3765
        %v3782 = vmul.f32 %v3586, %v3766
        %v3783 = vmul.f32 %v3601, %v3767
        %v3784 = vmul.f32 %v3616, %v3768
        %v3785 = vmul.f32 %v3631, %v3769
        %v3786 = vmul.f32 %v3646, %v3770
        %v3787 = vmul.f32 %v3661, %v3771
        %v3788 = vmul.f32 %v3676, %v3772
        %v3789 = vadd.f32 %v3773, 0.27886808
        %v3790 = vadd.f32 %v3774, 0.27886808
        %v3791 = vadd.f32 %v3775, 0.27886808
        %v3792 = vadd.f32 %v3776, 0.27886808
        %v3793 = vadd.f32 %v3777, 0.27886808
        %v3794 = vadd.f32 %v3778, 0.27886808
        %v3795 = vadd.f32 %v3779, 0.27886808
        %v3796 = vadd.f32 %v3780, 0.27886808
        %v3797 = vadd.f32 %v3781, 0.27886808
        %v3798 = vadd.f32 %v3782, 0.27886808
        %v3799 = vadd.f32 %v3783, 0.27886808
        %v3800 = vadd.f32 %v3784, 0.27886808
        %v3801 = vadd.f32 %v3785, 0.27886808
        %v3802 = vadd.f32 %v3786, 0.27886808
        %v3803 = vadd.f32 %v3787, 0.27886808
        %v3804 = vadd.f32 %v3788, 0.27886808
        %v3805 = vmul.f32 %v3451, %v3789
        %v3806 = vmul.f32 %v3466, %v3790
        %v3807 = vmul.f32 %v3481, %v3791
        %v3808 = vmul.f32 %v3496, %v3792
        %v3809 = vmul.f32 %v3511, %v3793
        %v3810 = vmul.f32 %v3526, %v3794
        %v3811 = vmul.f32 %v3541, %v3795
        %v3812 = vmul.f32 %v3556, %v3796
        %v3813 = vmul.f32 %v3571, %v3797
        %v3814 = vmul.f32 %v3586, %v3798
        %v3815 = vmul.f32 %v3601, %v3799
        %v3816 = vmul.f32 %v3616, %v3800
        %v3817 = vmul.f32 %v3631, %v3801
        %v3818 = vmul.f32 %v3646, %v3802
        %v3819 = vmul.f32 %v3661, %v3803
        %v3820 = vmul.f32 %v3676, %v3804
        %v3821 = vadd.f32 %v3805, -0.18628806
        %v3822 = vadd.f32 %v3806, -0.18628806
        %v3823 = vadd.f32 %v3807, -0.18628806
        %v3824 = vadd.f32 %v3808, -0.18628806
        %v3825 = vadd.f32 %v3809, -0.18628806
        %v3826 = vadd.f32 %v3810, -0.18628806
        %v3827 = vadd.f32 %v3811, -0.18628806
        %v3828 = vadd.f32 %v3812, -0.18628806
        %v3829 = vadd.f32 %v3813, -0.18628806
        %v3830 = vadd.f32 %v3814, -0.18628806
        %v3831 = vadd.f32 %v3815, -0.18628806
        %v3832 = vadd.f32 %v3816, -0.18628806
        %v3833 = vadd.f32 %v3817, -0.18628806
        %v3834 = vadd.f32 %v3818, -0.18628806
        %v3835 = vadd.f32 %v3819, -0.18628806
        %v3836 = vadd.f32 %v3820, -0.18628806
        %v3837 = vmul.f32 %v3451, %v3821
        %v3838 = vmul.f32 %v3466, %v3822
        %v3839 = vmul.f32 %v3481, %v3823
        %v3840 = vmul.f32 %v3496, %v3824
        %v3841 = vmul.f32 %v3511, %v3825
        %v3842 = vmul.f32 %v3526, %v3826
        %v3843 = vmul.f32 %v3541, %v3827
        %v3844 = vmul.f32 %v3556, %v3828
        %v3845 = vmul.f32 %v3571, %v3829
        %v3846 = vmul.f32 %v3586, %v3830
        %v3847 = vmul.f32 %v3601, %v3831
        %v3848 = vmul.f32 %v3616, %v3832
        %v3849 = vmul.f32 %v3631, %v3833
        %v3850 = vmul.f32 %v3646, %v3834
        %v3851 = vmul.f32 %v3661, %v3835
        %v3852 = vmul.f32 %v3676, %v3836
        %v3853 = vadd.f32 %v3837, 0.09678418
        %v3854 = vadd.f32 %v3838, 0.09678418
        %v3855 = vadd.f32 %v3839, 0.09678418
        %v3856 = vadd.f32 %v3840, 0.09678418
        %v3857 = vadd.f32 %v3841, 0.09678418
        %v3858 = vadd.f32 %v3842, 0.09678418
        %v3859 = vadd.f32 %v3843, 0.09678418
        %v3860 = vadd.f32 %v3844, 0.09678418
        %v3861 = vadd.f32 %v3845, 0.09678418
        %v3862 = vadd.f32 %v3846, 0.09678418
        %v3863 = vadd.f32 %v3847, 0.09678418
        %v3864 = vadd.f32 %v3848, 0.09678418
        %v3865 = vadd.f32 %v3849, 0.09678418
        %v3866 = vadd.f32 %v3850, 0.09678418
        %v3867 = vadd.f32 %v3851, 0.09678418
        %v3868 = vadd.f32 %v3852, 0.09678418
        %v3869 = vmul.f32 %v3451, %v3853
        %v3870 = vmul.f32 %v3466, %v3854
        %v3871 = vmul.f32 %v3481, %v3855
        %v3872 = vmul.f32 %v3496, %v3856
        %v3873 = vmul.f32 %v3511, %v3857
        %v3874 = vmul.f32 %v3526, %v3858
        %v3875 = vmul.f32 %v3541, %v3859
        %v3876 = vmul.f32 %v3556, %v3860
        %v3877 = vmul.f32 %v3571, %v3861
        %v3878 = vmul.f32 %v3586, %v3862
        %v3879 = vmul.f32 %v3601, %v3863
        %v3880 = vmul.f32 %v3616, %v3864
        %v3881 = vmul.f32 %v3631, %v3865
        %v3882 = vmul.f32 %v3646, %v3866
        %v3883 = vmul.f32 %v3661, %v3867
        %v3884 = vmul.f32 %v3676, %v3868
        %v3885 = vadd.f32 %v3869, 0.37409195
        %v3886 = vadd.f32 %v3870, 0.37409195
        %v3887 = vadd.f32 %v3871, 0.37409195
        %v3888 = vadd.f32 %v3872, 0.37409195
        %v3889 = vadd.f32 %v3873, 0.37409195
        %v3890 = vadd.f32 %v3874, 0.37409195
        %v3891 = vadd.f32 %v3875, 0.37409195
        %v3892 = vadd.f32 %v3876, 0.37409195
        %v3893 = vadd.f32 %v3877, 0.37409195
        %v3894 = vadd.f32 %v3878, 0.37409195
        %v3895 = vadd.f32 %v3879, 0.37409195
        %v3896 = vadd.f32 %v3880, 0.37409195
        %v3897 = vadd.f32 %v3881, 0.37409195
        %v3898 = vadd.f32 %v3882, 0.37409195
        %v3899 = vadd.f32 %v3883, 0.37409195
        %v3900 = vadd.f32 %v3884, 0.37409195
        %v3901 = vmul.f32 %v3451, %v3885
        %v3902 = vmul.f32 %v3466, %v3886
        %v3903 = vmul.f32 %v3481, %v3887
        %v3904 = vmul.f32 %v3496, %v3888
        %v3905 = vmul.f32 %v3511, %v3889
        %v3906 = vmul.f32 %v3526, %v3890
        %v3907 = vmul.f32 %v3541, %v3891
        %v3908 = vmul.f32 %v3556, %v3892
        %v3909 = vmul.f32 %v3571, %v3893
        %v3910 = vmul.f32 %v3586, %v3894
        %v3911 = vmul.f32 %v3601, %v3895
        %v3912 = vmul.f32 %v3616, %v3896
        %v3913 = vmul.f32 %v3631, %v3897
        %v3914 = vmul.f32 %v3646, %v3898
        %v3915 = vmul.f32 %v3661, %v3899
        %v3916 = vmul.f32 %v3676, %v3900
        %v3917 = vadd.f32 %v3901, 1.0000237
        %v3918 = vadd.f32 %v3902, 1.0000237
        %v3919 = vadd.f32 %v3903, 1.0000237
        %v3920 = vadd.f32 %v3904, 1.0000237
        %v3921 = vadd.f32 %v3905, 1.0000237
        %v3922 = vadd.f32 %v3906, 1.0000237
        %v3923 = vadd.f32 %v3907, 1.0000237
        %v3924 = vadd.f32 %v3908, 1.0000237
        %v3925 = vadd.f32 %v3909, 1.0000237
        %v3926 = vadd.f32 %v3910, 1.0000237
        %v3927 = vadd.f32 %v3911, 1.0000237
        %v3928 = vadd.f32 %v3912, 1.0000237
        %v3929 = vadd.f32 %v3913, 1.0000237
        %v3930 = vadd.f32 %v3914, 1.0000237
        %v3931 = vadd.f32 %v3915, 1.0000237
        %v3932 = vadd.f32 %v3916, 1.0000237
        %v3933 = vmul.f32 %v3451, %v3917
        %v3934 = vmul.f32 %v3466, %v3918
        %v3935 = vmul.f32 %v3481, %v3919
        %v3936 = vmul.f32 %v3496, %v3920
        %v3937 = vmul.f32 %v3511, %v3921
        %v3938 = vmul.f32 %v3526, %v3922
        %v3939 = vmul.f32 %v3541, %v3923
        %v3940 = vmul.f32 %v3556, %v3924
        %v3941 = vmul.f32 %v3571, %v3925
        %v3942 = vmul.f32 %v3586, %v3926
        %v3943 = vmul.f32 %v3601, %v3927
        %v3944 = vmul.f32 %v3616, %v3928
        %v3945 = vmul.f32 %v3631, %v3929
        %v3946 = vmul.f32 %v3646, %v3930
        %v3947 = vmul.f32 %v3661, %v3931
        %v3948 = vmul.f32 %v3676, %v3932
        %v3949 = vadd.f32 %v3933, -1.2655122
        %v3950 = vadd.f32 %v3934, -1.2655122
        %v3951 = vadd.f32 %v3935, -1.2655122
        %v3952 = vadd.f32 %v3936, -1.2655122
        %v3953 = vadd.f32 %v3937, -1.2655122
        %v3954 = vadd.f32 %v3938, -1.2655122
        %v3955 = vadd.f32 %v3939, -1.2655122
        %v3956 = vadd.f32 %v3940, -1.2655122
        %v3957 = vadd.f32 %v3941, -1.2655122
        %v3958 = vadd.f32 %v3942, -1.2655122
        %v3959 = vadd.f32 %v3943, -1.2655122
        %v3960 = vadd.f32 %v3944, -1.2655122
        %v3961 = vadd.f32 %v3945, -1.2655122
        %v3962 = vadd.f32 %v3946, -1.2655122
        %v3963 = vadd.f32 %v3947, -1.2655122
        %v3964 = vadd.f32 %v3948, -1.2655122
        %v3965 = vsub.f32 0.0, %v3389
        %v3966 = vsub.f32 0.0, %v3390
        %v3967 = vsub.f32 0.0, %v3391
        %v3968 = vsub.f32 0.0, %v3392
        %v3969 = vsub.f32 0.0, %v3393
        %v3970 = vsub.f32 0.0, %v3394
        %v3971 = vsub.f32 0.0, %v3395
        %v3972 = vsub.f32 0.0, %v3396
        %v3973 = vsub.f32 0.0, %v3397
        %v3974 = vsub.f32 0.0, %v3398
        %v3975 = vsub.f32 0.0, %v3399
        %v3976 = vsub.f32 0.0, %v3400
        %v3977 = vsub.f32 0.0, %v3401
        %v3978 = vsub.f32 0.0, %v3402
        %v3979 = vsub.f32 0.0, %v3403
        %v3980 = vsub.f32 0.0, %v3404
        %v3981 = vmul.f32 %v3965, %v3389
        %v3982 = vmul.f32 %v3966, %v3390
        %v3983 = vmul.f32 %v3967, %v3391
        %v3984 = vmul.f32 %v3968, %v3392
        %v3985 = vmul.f32 %v3969, %v3393
        %v3986 = vmul.f32 %v3970, %v3394
        %v3987 = vmul.f32 %v3971, %v3395
        %v3988 = vmul.f32 %v3972, %v3396
        %v3989 = vmul.f32 %v3973, %v3397
        %v3990 = vmul.f32 %v3974, %v3398
        %v3991 = vmul.f32 %v3975, %v3399
        %v3992 = vmul.f32 %v3976, %v3400
        %v3993 = vmul.f32 %v3977, %v3401
        %v3994 = vmul.f32 %v3978, %v3402
        %v3995 = vmul.f32 %v3979, %v3403
        %v3996 = vmul.f32 %v3980, %v3404
        %v3997 = vadd.f32 %v3981, %v3949
        %v3998 = vadd.f32 %v3982, %v3950
        %v3999 = vadd.f32 %v3983, %v3951
        %v4000 = vadd.f32 %v3984, %v3952
        %v4001 = vadd.f32 %v3985, %v3953
        %v4002 = vadd.f32 %v3986, %v3954
        %v4003 = vadd.f32 %v3987, %v3955
        %v4004 = vadd.f32 %v3988, %v3956
        %v4005 = vadd.f32 %v3989, %v3957
        %v4006 = vadd.f32 %v3990, %v3958
        %v4007 = vadd.f32 %v3991, %v3959
        %v4008 = vadd.f32 %v3992, %v3960
        %v4009 = vadd.f32 %v3993, %v3961
        %v4010 = vadd.f32 %v3994, %v3962
        %v4011 = vadd.f32 %v3995, %v3963
        %v4012 = vadd.f32 %v3996, %v3964
        %v4013 = vmul.f32 %v3997, 1.442695
        %v4014 = vpow.pop %v4013
        %v4015 = vmul.f32 %v3998, 1.442695
        %v4016 = vpow.pop %v4015
        %v4017 = vmul.f32 %v3999, 1.442695
        %v4018 = vpow.pop %v4017
        %v4019 = vmul.f32 %v4000, 1.442695
        %v4020 = vpow.pop %v4019
        %v4021 = vmul.f32 %v4001, 1.442695
        %v4022 = vpow.pop %v4021
        %v4023 = vmul.f32 %v4002, 1.442695
        %v4024 = vpow.pop %v4023
        %v4025 = vmul.f32 %v4003, 1.442695
        %v4026 = vpow.pop %v4025
        %v4027 = vmul.f32 %v4004, 1.442695
        %v4028 = vpow.pop %v4027
        %v4029 = vmul.f32 %v4005, 1.442695
        %v4030 = vpow.pop %v4029
        %v4031 = vmul.f32 %v4006, 1.442695
        %v4032 = vpow.pop %v4031
        %v4033 = vmul.f32 %v4007, 1.442695
        %v4034 = vpow.pop %v4033
        %v4035 = vmul.f32 %v4008, 1.442695
        %v4036 = vpow.pop %v4035
        %v4037 = vmul.f32 %v4009, 1.442695
        %v4038 = vpow.pop %v4037
        %v4039 = vmul.f32 %v4010, 1.442695
        %v4040 = vpow.pop %v4039
        %v4041 = vmul.f32 %v4011, 1.442695
        %v4042 = vpow.pop %v4041
        %v4043 = vmul.f32 %v4012, 1.442695
        %v4044 = vpow.pop %v4043
        %v4045 = vmul.f32 %v3451, %v4014
        %v4046 = vmul.f32 %v3466, %v4016
        %v4047 = vmul.f32 %v3481, %v4018
        %v4048 = vmul.f32 %v3496, %v4020
        %v4049 = vmul.f32 %v3511, %v4022
        %v4050 = vmul.f32 %v3526, %v4024
        %v4051 = vmul.f32 %v3541, %v4026
        %v4052 = vmul.f32 %v3556, %v4028
        %v4053 = vmul.f32 %v3571, %v4030
        %v4054 = vmul.f32 %v3586, %v4032
        %v4055 = vmul.f32 %v3601, %v4034
        %v4056 = vmul.f32 %v3616, %v4036
        %v4057 = vmul.f32 %v3631, %v4038
        %v4058 = vmul.f32 %v3646, %v4040
        %v4059 = vmul.f32 %v3661, %v4042
        %v4060 = vmul.f32 %v3676, %v4044
        %v4061 = vsub.f32 1.0, %v4045
        %v4062 = vsub.f32 1.0, %v4046
        %v4063 = vsub.f32 1.0, %v4047
        %v4064 = vsub.f32 1.0, %v4048
        %v4065 = vsub.f32 1.0, %v4049
        %v4066 = vsub.f32 1.0, %v4050
        %v4067 = vsub.f32 1.0, %v4051
        %v4068 = vsub.f32 1.0, %v4052
        %v4069 = vsub.f32 1.0, %v4053
        %v4070 = vsub.f32 1.0, %v4054
        %v4071 = vsub.f32 1.0, %v4055
        %v4072 = vsub.f32 1.0, %v4056
        %v4073 = vsub.f32 1.0, %v4057
        %v4074 = vsub.f32 1.0, %v4058
        %v4075 = vsub.f32 1.0, %v4059
        %v4076 = vsub.f32 1.0, %v4060
        %vm4077 = vcmp.ge.f32.partialorder %v3373, 0.0
        %vm4078 = vcmp.ge.f32.partialorder %v3374, 0.0
        %vm4079 = vcmp.ge.f32.partialorder %v3375, 0.0
        %vm4080 = vcmp.ge.f32.partialorder %v3376, 0.0
        %vm4081 = vcmp.ge.f32.partialorder %v3377, 0.0
        %vm4082 = vcmp.ge.f32.partialorder %v3378, 0.0
        %vm4083 = vcmp.ge.f32.partialorder %v3379, 0.0
        %vm4084 = vcmp.ge.f32.partialorder %v3380, 0.0
        %vm4085 = vcmp.ge.f32.partialorder %v3381, 0.0
        %vm4086 = vcmp.ge.f32.partialorder %v3382, 0.0
        %vm4087 = vcmp.ge.f32.partialorder %v3383, 0.0
        %vm4088 = vcmp.ge.f32.partialorder %v3384, 0.0
        %vm4089 = vcmp.ge.f32.partialorder %v3385, 0.0
        %vm4090 = vcmp.ge.f32.partialorder %v3386, 0.0
        %vm4091 = vcmp.ge.f32.partialorder %v3387, 0.0
        %vm4092 = vcmp.ge.f32.partialorder %v3388, 0.0
        %v4093 = vsub.f32 0.0, %v4061
        %v4094 = vsub.f32 0.0, %v4062
        %v4095 = vsub.f32 0.0, %v4063
        %v4096 = vsub.f32 0.0, %v4064
        %v4097 = vsub.f32 0.0, %v4065
        %v4098 = vsub.f32 0.0, %v4066
        %v4099 = vsub.f32 0.0, %v4067
        %v4100 = vsub.f32 0.0, %v4068
        %v4101 = vsub.f32 0.0, %v4069
        %v4102 = vsub.f32 0.0, %v4070
        %v4103 = vsub.f32 0.0, %v4071
        %v4104 = vsub.f32 0.0, %v4072
        %v4105 = vsub.f32 0.0, %v4073
        %v4106 = vsub.f32 0.0, %v4074
        %v4107 = vsub.f32 0.0, %v4075
        %v4108 = vsub.f32 0.0, %v4076
        %v4109 = vsel %vm4077, %v4061, %v4093
        %v4110 = vsel %vm4078, %v4062, %v4094
        %v4111 = vsel %vm4079, %v4063, %v4095
        %v4112 = vsel %vm4080, %v4064, %v4096
        %v4113 = vsel %vm4081, %v4065, %v4097
        %v4114 = vsel %vm4082, %v4066, %v4098
        %v4115 = vsel %vm4083, %v4067, %v4099
        %v4116 = vsel %vm4084, %v4068, %v4100
        %v4117 = vsel %vm4085, %v4069, %v4101
        %v4118 = vsel %vm4086, %v4070, %v4102
        %v4119 = vsel %vm4087, %v4071, %v4103
        %v4120 = vsel %vm4088, %v4072, %v4104
        %v4121 = vsel %vm4089, %v4073, %v4105
        %v4122 = vsel %vm4090, %v4074, %v4106
        %v4123 = vsel %vm4091, %v4075, %v4107
        %v4124 = vsel %vm4092, %v4076, %v4108
        %v4125 = vadd.f32 %v4109, 1.0
        %v4126 = vadd.f32 %v4110, 1.0
        %v4127 = vadd.f32 %v4111, 1.0
        %v4128 = vadd.f32 %v4112, 1.0
        %v4129 = vadd.f32 %v4113, 1.0
        %v4130 = vadd.f32 %v4114, 1.0
        %v4131 = vadd.f32 %v4115, 1.0
        %v4132 = vadd.f32 %v4116, 1.0
        %v4133 = vadd.f32 %v4117, 1.0
        %v4134 = vadd.f32 %v4118, 1.0
        %v4135 = vadd.f32 %v4119, 1.0
        %v4136 = vadd.f32 %v4120, 1.0
        %v4137 = vadd.f32 %v4121, 1.0
        %v4138 = vadd.f32 %v4122, 1.0
        %v4139 = vadd.f32 %v4123, 1.0
        %v4140 = vadd.f32 %v4124, 1.0
        %v4141 = vmul.f32 %v3357, %v4125
        %v4142 = vmul.f32 %v3358, %v4126
        %v4143 = vmul.f32 %v3359, %v4127
        %v4144 = vmul.f32 %v3360, %v4128
        %v4145 = vmul.f32 %v3361, %v4129
        %v4146 = vmul.f32 %v3362, %v4130
        %v4147 = vmul.f32 %v3363, %v4131
        %v4148 = vmul.f32 %v3364, %v4132
        %v4149 = vmul.f32 %v3365, %v4133
        %v4150 = vmul.f32 %v3366, %v4134
        %v4151 = vmul.f32 %v3367, %v4135
        %v4152 = vmul.f32 %v3368, %v4136
        %v4153 = vmul.f32 %v3369, %v4137
        %v4154 = vmul.f32 %v3370, %v4138
        %v4155 = vmul.f32 %v3371, %v4139
        %v4156 = vmul.f32 %v3372, %v4140
        %v4157 = vld [vmem:[%s500] sm:$0xff]
        %v4158 = vld [vmem:[%s500 + $0x8] sm:$0xff]
        %v4159 = vld [vmem:[%s500 + $0x10] sm:$0xff]
        %v4160 = vld [vmem:[%s500 + $0x18] sm:$0xff]
        %v4161 = vld [vmem:[%s500 + $0x20] sm:$0xff]
        %v4162 = vld [vmem:[%s500 + $0x28] sm:$0xff]
        %v4163 = vld [vmem:[%s500 + $0x30] sm:$0xff]
        %v4164 = vld [vmem:[%s500 + $0x38] sm:$0xff]
        %v4165 = vld [vmem:[%s500 + $0x40] sm:$0xff]
        %v4166 = vld [vmem:[%s500 + $0x48] sm:$0xff]
        %v4167 = vld [vmem:[%s500 + $0x50] sm:$0xff]
        %v4168 = vld [vmem:[%s500 + $0x58] sm:$0xff]
        %v4169 = vld [vmem:[%s500 + $0x60] sm:$0xff]
        %v4170 = vld [vmem:[%s500 + $0x68] sm:$0xff]
        %v4171 = vld [vmem:[%s500 + $0x70] sm:$0xff]
        %v4172 = vld [vmem:[%s500 + $0x78] sm:$0xff]
        %v4173 = vld [vmem:[%s500 + $0x80] sm:$0xff]
        %v4174 = vld [vmem:[%s500 + $0x88] sm:$0xff]
        %v4175 = vld [vmem:[%s500 + $0x90] sm:$0xff]
        %v4176 = vld [vmem:[%s500 + $0x98] sm:$0xff]
        %v4177 = vld [vmem:[%s500 + $0xa0] sm:$0xff]
        %v4178 = vld [vmem:[%s500 + $0xa8] sm:$0xff]
        %v4179 = vld [vmem:[%s500 + $0xb0] sm:$0xff]
        %v4180 = vld [vmem:[%s500 + $0xb8] sm:$0xff]
        %v4181 = vld [vmem:[%s500 + $0xc0] sm:$0xff]
        %v4182 = vld [vmem:[%s500 + $0xc8] sm:$0xff]
        %v4183 = vld [vmem:[%s500 + $0xd0] sm:$0xff]
        %v4184 = vld [vmem:[%s500 + $0xd8] sm:$0xff]
        %v4185 = vld [vmem:[%s500 + $0xe0] sm:$0xff]
        %v4186 = vld [vmem:[%s500 + $0xe8] sm:$0xff]
        %v4187 = vld [vmem:[%s500 + $0xf0] sm:$0xff]
        %v4188 = vld [vmem:[%s500 + $0xf8] sm:$0xff]
        %v4189 = vld [vmem:[%s500 + $0x100] sm:$0xff]
        %v4190 = vld [vmem:[%s500 + $0x108] sm:$0xff]
        %v4191 = vld [vmem:[%s500 + $0x110] sm:$0xff]
        %v4192 = vld [vmem:[%s500 + $0x118] sm:$0xff]
        %v4193 = vld [vmem:[%s500 + $0x120] sm:$0xff]
        %v4194 = vld [vmem:[%s500 + $0x128] sm:$0xff]
        %v4195 = vld [vmem:[%s500 + $0x130] sm:$0xff]
        %v4196 = vld [vmem:[%s500 + $0x138] sm:$0xff]
        %v4197 = vld [vmem:[%s500 + $0x140] sm:$0xff]
        %v4198 = vld [vmem:[%s500 + $0x148] sm:$0xff]
        %v4199 = vld [vmem:[%s500 + $0x150] sm:$0xff]
        %v4200 = vld [vmem:[%s500 + $0x158] sm:$0xff]
        %v4201 = vld [vmem:[%s500 + $0x160] sm:$0xff]
        %v4202 = vld [vmem:[%s500 + $0x168] sm:$0xff]
        %v4203 = vld [vmem:[%s500 + $0x170] sm:$0xff]
        %v4204 = vld [vmem:[%s500 + $0x178] sm:$0xff]
        %v4205 = vld [vmem:[%s500 + $0x180] sm:$0xff]
        %v4206 = vld [vmem:[%s500 + $0x188] sm:$0xff]
        %v4207 = vld [vmem:[%s500 + $0x190] sm:$0xff]
        %v4208 = vld [vmem:[%s500 + $0x198] sm:$0xff]
        %v4209 = vld [vmem:[%s500 + $0x1a0] sm:$0xff]
        %v4210 = vld [vmem:[%s500 + $0x1a8] sm:$0xff]
        %v4211 = vld [vmem:[%s500 + $0x1b0] sm:$0xff]
        %v4212 = vld [vmem:[%s500 + $0x1b8] sm:$0xff]
        %v4213 = vld [vmem:[%s500 + $0x1c0] sm:$0xff]
        %v4214 = vld [vmem:[%s500 + $0x1c8] sm:$0xff]
        %v4215 = vld [vmem:[%s500 + $0x1d0] sm:$0xff]
        %v4216 = vld [vmem:[%s500 + $0x1d8] sm:$0xff]
        %v4217 = vld [vmem:[%s500 + $0x1e0] sm:$0xff]
        %v4218 = vld [vmem:[%s500 + $0x1e8] sm:$0xff]
        %v4219 = vld [vmem:[%s500 + $0x1f0] sm:$0xff]
        %v4220 = vld [vmem:[%s500 + $0x1f8] sm:$0xff]
        %v4221 = vld [vmem:[%s500 + $0x200] sm:$0xff]
        %v4222 = vld [vmem:[%s500 + $0x208] sm:$0xff]
        %v4223 = vld [vmem:[%s500 + $0x210] sm:$0xff]
        %v4224 = vld [vmem:[%s500 + $0x218] sm:$0xff]
        %v4225 = vld [vmem:[%s500 + $0x220] sm:$0xff]
        %v4226 = vld [vmem:[%s500 + $0x228] sm:$0xff]
        %v4227 = vld [vmem:[%s500 + $0x230] sm:$0xff]
        %v4228 = vld [vmem:[%s500 + $0x238] sm:$0xff]
        %v4229 = vld [vmem:[%s500 + $0x240] sm:$0xff]
        %v4230 = vld [vmem:[%s500 + $0x248] sm:$0xff]
        %v4231 = vld [vmem:[%s500 + $0x250] sm:$0xff]
        %v4232 = vld [vmem:[%s500 + $0x258] sm:$0xff]
        %v4233 = vld [vmem:[%s500 + $0x260] sm:$0xff]
        %v4234 = vld [vmem:[%s500 + $0x268] sm:$0xff]
        %v4235 = vld [vmem:[%s500 + $0x270] sm:$0xff]
        %v4236 = vld [vmem:[%s500 + $0x278] sm:$0xff]
        %v4237 = vld [vmem:[%s500 + $0x280] sm:$0xff]
        %v4238 = vld [vmem:[%s500 + $0x288] sm:$0xff]
        %v4239 = vld [vmem:[%s500 + $0x290] sm:$0xff]
        %v4240 = vld [vmem:[%s500 + $0x298] sm:$0xff]
        %v4241 = vld [vmem:[%s500 + $0x2a0] sm:$0xff]
        %v4242 = vld [vmem:[%s500 + $0x2a8] sm:$0xff]
        %v4243 = vld [vmem:[%s500 + $0x2b0] sm:$0xff]
        %v4244 = vld [vmem:[%s500 + $0x2b8] sm:$0xff]
        %v4245 = vld [vmem:[%s500 + $0x2c0] sm:$0xff]
        %v4246 = vld [vmem:[%s500 + $0x2c8] sm:$0xff]
        %v4247 = vld [vmem:[%s500 + $0x2d0] sm:$0xff]
        %v4248 = vld [vmem:[%s500 + $0x2d8] sm:$0xff]
        %v4249 = vld [vmem:[%s500 + $0x2e0] sm:$0xff]
        %v4250 = vld [vmem:[%s500 + $0x2e8] sm:$0xff]
        %v4251 = vld [vmem:[%s500 + $0x2f0] sm:$0xff]
        %v4252 = vld [vmem:[%s500 + $0x2f8] sm:$0xff]
        %v4253 = vld [vmem:[%s500 + $0x300] sm:$0xff]
        %v4254 = vld [vmem:[%s500 + $0x308] sm:$0xff]
        %v4255 = vld [vmem:[%s500 + $0x310] sm:$0xff]
        %v4256 = vld [vmem:[%s500 + $0x318] sm:$0xff]
        %v4257 = vld [vmem:[%s500 + $0x320] sm:$0xff]
        %v4258 = vld [vmem:[%s500 + $0x328] sm:$0xff]
        %v4259 = vld [vmem:[%s500 + $0x330] sm:$0xff]
        %v4260 = vld [vmem:[%s500 + $0x338] sm:$0xff]
        %v4261 = vld [vmem:[%s500 + $0x340] sm:$0xff]
        %v4262 = vld [vmem:[%s500 + $0x348] sm:$0xff]
        %v4263 = vld [vmem:[%s500 + $0x350] sm:$0xff]
        %v4264 = vld [vmem:[%s500 + $0x358] sm:$0xff]
        %v4265 = vld [vmem:[%s500 + $0x360] sm:$0xff]
        %v4266 = vld [vmem:[%s500 + $0x368] sm:$0xff]
        %v4267 = vld [vmem:[%s500 + $0x370] sm:$0xff]
        %v4268 = vld [vmem:[%s500 + $0x378] sm:$0xff]
        %v4269 = vld [vmem:[%s500 + $0x380] sm:$0xff]
        %v4270 = vld [vmem:[%s500 + $0x388] sm:$0xff]
        %v4271 = vld [vmem:[%s500 + $0x390] sm:$0xff]
        %v4272 = vld [vmem:[%s500 + $0x398] sm:$0xff]
        %v4273 = vld [vmem:[%s500 + $0x3a0] sm:$0xff]
        %v4274 = vld [vmem:[%s500 + $0x3a8] sm:$0xff]
        %v4275 = vld [vmem:[%s500 + $0x3b0] sm:$0xff]
        %v4276 = vld [vmem:[%s500 + $0x3b8] sm:$0xff]
        %v4277 = vld [vmem:[%s500 + $0x3c0] sm:$0xff]
        %v4278 = vld [vmem:[%s500 + $0x3c8] sm:$0xff]
        %v4279 = vld [vmem:[%s500 + $0x3d0] sm:$0xff]
        %v4280 = vld [vmem:[%s500 + $0x3d8] sm:$0xff]
        %v4281 = vld [vmem:[%s500 + $0x3e0] sm:$0xff]
        %v4282 = vld [vmem:[%s500 + $0x3e8] sm:$0xff]
        %v4283 = vld [vmem:[%s500 + $0x3f0] sm:$0xff]
        %v4284 = vld [vmem:[%s500 + $0x3f8] sm:$0xff]
        %v4285 = vld [vmem:[%s500 + $0x400] sm:$0xff]
        %v4286 = vld [vmem:[%s500 + $0x408] sm:$0xff]
        %v4287 = vld [vmem:[%s500 + $0x410] sm:$0xff]
        %v4288 = vld [vmem:[%s500 + $0x418] sm:$0xff]
        %v4289 = vld [vmem:[%s500 + $0x420] sm:$0xff]
        %v4290 = vld [vmem:[%s500 + $0x428] sm:$0xff]
        %v4291 = vld [vmem:[%s500 + $0x430] sm:$0xff]
        %v4292 = vld [vmem:[%s500 + $0x438] sm:$0xff]
        %v4293 = vld [vmem:[%s500 + $0x440] sm:$0xff]
        %v4294 = vld [vmem:[%s500 + $0x448] sm:$0xff]
        %v4295 = vld [vmem:[%s500 + $0x450] sm:$0xff]
        %v4296 = vld [vmem:[%s500 + $0x458] sm:$0xff]
        %v4297 = vld [vmem:[%s500 + $0x460] sm:$0xff]
        %v4298 = vld [vmem:[%s500 + $0x468] sm:$0xff]
        %v4299 = vld [vmem:[%s500 + $0x470] sm:$0xff]
        %v4300 = vld [vmem:[%s500 + $0x478] sm:$0xff]
        %v4301 = vld [vmem:[%s500 + $0x480] sm:$0xff]
        %v4302 = vld [vmem:[%s500 + $0x488] sm:$0xff]
        %v4303 = vld [vmem:[%s500 + $0x490] sm:$0xff]
        %v4304 = vld [vmem:[%s500 + $0x498] sm:$0xff]
        %v4305 = vld [vmem:[%s500 + $0x4a0] sm:$0xff]
        %v4306 = vld [vmem:[%s500 + $0x4a8] sm:$0xff]
        %v4307 = vld [vmem:[%s500 + $0x4b0] sm:$0xff]
        %v4308 = vld [vmem:[%s500 + $0x4b8] sm:$0xff]
        %v4309 = vld [vmem:[%s500 + $0x4c0] sm:$0xff]
        %v4310 = vld [vmem:[%s500 + $0x4c8] sm:$0xff]
        %v4311 = vld [vmem:[%s500 + $0x4d0] sm:$0xff]
        %v4312 = vld [vmem:[%s500 + $0x4d8] sm:$0xff]
        %v4313 = vld [vmem:[%s500 + $0x4e0] sm:$0xff]
        %v4314 = vld [vmem:[%s500 + $0x4e8] sm:$0xff]
        %v4315 = vld [vmem:[%s500 + $0x4f0] sm:$0xff]
        %v4316 = vld [vmem:[%s500 + $0x4f8] sm:$0xff]
        %v4317 = vld [vmem:[%s500 + $0x500] sm:$0xff]
        %v4318 = vld [vmem:[%s500 + $0x508] sm:$0xff]
        %v4319 = vld [vmem:[%s500 + $0x510] sm:$0xff]
        %v4320 = vld [vmem:[%s500 + $0x518] sm:$0xff]
        %v4321 = vld [vmem:[%s500 + $0x520] sm:$0xff]
        %v4322 = vld [vmem:[%s500 + $0x528] sm:$0xff]
        %v4323 = vld [vmem:[%s500 + $0x530] sm:$0xff]
        %v4324 = vld [vmem:[%s500 + $0x538] sm:$0xff]
        %v4325 = vld [vmem:[%s500 + $0x540] sm:$0xff]
        %v4326 = vld [vmem:[%s500 + $0x548] sm:$0xff]
        %v4327 = vld [vmem:[%s500 + $0x550] sm:$0xff]
        %v4328 = vld [vmem:[%s500 + $0x558] sm:$0xff]
        %v4329 = vld [vmem:[%s500 + $0x560] sm:$0xff]
        %v4330 = vld [vmem:[%s500 + $0x568] sm:$0xff]
        %v4331 = vld [vmem:[%s500 + $0x570] sm:$0xff]
        %v4332 = vld [vmem:[%s500 + $0x578] sm:$0xff]
        %v4333 = vld [vmem:[%s500 + $0x580] sm:$0xff]
        %v4334 = vld [vmem:[%s500 + $0x588] sm:$0xff]
        %v4335 = vld [vmem:[%s500 + $0x590] sm:$0xff]
        %v4336 = vld [vmem:[%s500 + $0x598] sm:$0xff]
        %v4337 = vld [vmem:[%s500 + $0x5a0] sm:$0xff]
        %v4338 = vld [vmem:[%s500 + $0x5a8] sm:$0xff]
        %v4339 = vld [vmem:[%s500 + $0x5b0] sm:$0xff]
        %v4340 = vld [vmem:[%s500 + $0x5b8] sm:$0xff]
        %v4341 = vld [vmem:[%s500 + $0x5c0] sm:$0xff]
        %v4342 = vld [vmem:[%s500 + $0x5c8] sm:$0xff]
        %v4343 = vld [vmem:[%s500 + $0x5d0] sm:$0xff]
        %v4344 = vld [vmem:[%s500 + $0x5d8] sm:$0xff]
        %v4345 = vld [vmem:[%s500 + $0x5e0] sm:$0xff]
        %v4346 = vld [vmem:[%s500 + $0x5e8] sm:$0xff]
        %v4347 = vld [vmem:[%s500 + $0x5f0] sm:$0xff]
        %v4348 = vld [vmem:[%s500 + $0x5f8] sm:$0xff]
        %v4349 = vld [vmem:[%s500 + $0x600] sm:$0xff]
        %v4350 = vld [vmem:[%s500 + $0x608] sm:$0xff]
        %v4351 = vld [vmem:[%s500 + $0x610] sm:$0xff]
        %v4352 = vld [vmem:[%s500 + $0x618] sm:$0xff]
        %v4353 = vld [vmem:[%s500 + $0x620] sm:$0xff]
        %v4354 = vld [vmem:[%s500 + $0x628] sm:$0xff]
        %v4355 = vld [vmem:[%s500 + $0x630] sm:$0xff]
        %v4356 = vld [vmem:[%s500 + $0x638] sm:$0xff]
        %v4357 = vld [vmem:[%s500 + $0x640] sm:$0xff]
        %v4358 = vld [vmem:[%s500 + $0x648] sm:$0xff]
        %v4359 = vld [vmem:[%s500 + $0x650] sm:$0xff]
        %v4360 = vld [vmem:[%s500 + $0x658] sm:$0xff]
        %v4361 = vld [vmem:[%s500 + $0x660] sm:$0xff]
        %v4362 = vld [vmem:[%s500 + $0x668] sm:$0xff]
        %v4363 = vld [vmem:[%s500 + $0x670] sm:$0xff]
        %v4364 = vld [vmem:[%s500 + $0x678] sm:$0xff]
        %v4365 = vld [vmem:[%s500 + $0x680] sm:$0xff]
        %v4366 = vld [vmem:[%s500 + $0x688] sm:$0xff]
        %v4367 = vld [vmem:[%s500 + $0x690] sm:$0xff]
        %v4368 = vld [vmem:[%s500 + $0x698] sm:$0xff]
        %v4369 = vld [vmem:[%s500 + $0x6a0] sm:$0xff]
        %v4370 = vld [vmem:[%s500 + $0x6a8] sm:$0xff]
        %v4371 = vld [vmem:[%s500 + $0x6b0] sm:$0xff]
        %v4372 = vld [vmem:[%s500 + $0x6b8] sm:$0xff]
        %v4373 = vld [vmem:[%s500 + $0x6c0] sm:$0xff]
        %v4374 = vld [vmem:[%s500 + $0x6c8] sm:$0xff]
        %v4375 = vld [vmem:[%s500 + $0x6d0] sm:$0xff]
        %v4376 = vld [vmem:[%s500 + $0x6d8] sm:$0xff]
        %v4377 = vld [vmem:[%s500 + $0x6e0] sm:$0xff]
        %v4378 = vld [vmem:[%s500 + $0x6e8] sm:$0xff]
        %v4379 = vld [vmem:[%s500 + $0x6f0] sm:$0xff]
        %v4380 = vld [vmem:[%s500 + $0x6f8] sm:$0xff]
        %v4381 = vld [vmem:[%s500 + $0x700] sm:$0xff]
        %v4382 = vld [vmem:[%s500 + $0x708] sm:$0xff]
        %v4383 = vld [vmem:[%s500 + $0x710] sm:$0xff]
        %v4384 = vld [vmem:[%s500 + $0x718] sm:$0xff]
        %v4385 = vld [vmem:[%s500 + $0x720] sm:$0xff]
        %v4386 = vld [vmem:[%s500 + $0x728] sm:$0xff]
        %v4387 = vld [vmem:[%s500 + $0x730] sm:$0xff]
        %v4388 = vld [vmem:[%s500 + $0x738] sm:$0xff]
        %v4389 = vld [vmem:[%s500 + $0x740] sm:$0xff]
        %v4390 = vld [vmem:[%s500 + $0x748] sm:$0xff]
        %v4391 = vld [vmem:[%s500 + $0x750] sm:$0xff]
        %v4392 = vld [vmem:[%s500 + $0x758] sm:$0xff]
        %v4393 = vld [vmem:[%s500 + $0x760] sm:$0xff]
        %v4394 = vld [vmem:[%s500 + $0x768] sm:$0xff]
        %v4395 = vld [vmem:[%s500 + $0x770] sm:$0xff]
        %v4396 = vld [vmem:[%s500 + $0x778] sm:$0xff]
        %v4397 = vld [vmem:[%s500 + $0x780] sm:$0xff]
        %v4398 = vld [vmem:[%s500 + $0x788] sm:$0xff]
        %v4399 = vld [vmem:[%s500 + $0x790] sm:$0xff]
        %v4400 = vld [vmem:[%s500 + $0x798] sm:$0xff]
        %v4401 = vld [vmem:[%s500 + $0x7a0] sm:$0xff]
        %v4402 = vld [vmem:[%s500 + $0x7a8] sm:$0xff]
        %v4403 = vld [vmem:[%s500 + $0x7b0] sm:$0xff]
        %v4404 = vld [vmem:[%s500 + $0x7b8] sm:$0xff]
        %v4405 = vld [vmem:[%s500 + $0x7c0] sm:$0xff]
        %v4406 = vld [vmem:[%s500 + $0x7c8] sm:$0xff]
        %v4407 = vld [vmem:[%s500 + $0x7d0] sm:$0xff]
        %v4408 = vld [vmem:[%s500 + $0x7d8] sm:$0xff]
        %v4409 = vld [vmem:[%s500 + $0x7e0] sm:$0xff]
        %v4410 = vld [vmem:[%s500 + $0x7e8] sm:$0xff]
        %v4411 = vld [vmem:[%s500 + $0x7f0] sm:$0xff]
        %v4412 = vld [vmem:[%s500 + $0x7f8] sm:$0xff]
        %v4413 = vperm.slane %v527, 4
        %v4414 = vperm.slane %v528, 4
        %4415 = vmatpush.msra.mxu0 %v4187
        %4416 = vmatpush.msra.mxu0 %v4185
        %4417 = vmatpush.msra.mxu0 %v4183
        %4418 = vmatpush.msra.mxu0 %v4181
        %4419 = vmatpush.msra.mxu0 %v4179
        %4420 = vmatpush.msra.mxu0 %v4177
        %4421 = vmatpush.msra.mxu0 %v4175
        %4422 = vmatpush.msra.mxu0 %v4173
        %4423 = vmatpush.msra.mxu0 %v4171
        %4424 = vmatpush.msra.mxu0 %v4169
        %4425 = vmatpush.msra.mxu0 %v4167
        %4426 = vmatpush.msra.mxu0 %v4165
        %4427 = vmatpush.msra.mxu0 %v4163
        %4428 = vmatpush.msra.mxu0 %v4161
        %4429 = vmatpush.msra.mxu0 %v4159
        %4430 = vmatpush.msra.mxu0 %v4157
        %4431 = vmatmul.f32.gmra.mxu0 %v4141
        %v4432 = vpop.f32.mrf.mxu0
        %v4433 = vadd.f32 %v4413, %v4432
        %4434 = vmatmul.f32.gmra.mxu0 %v4149
        %v4435 = vpop.f32.mrf.mxu0
        %v4436 = vadd.f32 %v4413, %v4435
        %4437 = vdwg.mxu0
        %4438 = vmatpush.msra.mxu0 %v4219
        %4439 = vmatpush.msra.mxu0 %v4217
        %4440 = vmatpush.msra.mxu0 %v4215
        %4441 = vmatpush.msra.mxu0 %v4213
        %4442 = vmatpush.msra.mxu0 %v4211
        %4443 = vmatpush.msra.mxu0 %v4209
        %4444 = vmatpush.msra.mxu0 %v4207
        %4445 = vmatpush.msra.mxu0 %v4205
        %4446 = vmatpush.msra.mxu0 %v4203
        %4447 = vmatpush.msra.mxu0 %v4201
        %4448 = vmatpush.msra.mxu0 %v4199
        %4449 = vmatpush.msra.mxu0 %v4197
        %4450 = vmatpush.msra.mxu0 %v4195
        %4451 = vmatpush.msra.mxu0 %v4193
        %4452 = vmatpush.msra.mxu0 %v4191
        %4453 = vmatpush.msra.mxu0 %v4189
        %4454 = vmatmul.f32.gmra.mxu0 %v4142
        %v4455 = vpop.f32.mrf.mxu0
        %v4456 = vadd.f32 %v4433, %v4455
        %4457 = vmatmul.f32.gmra.mxu0 %v4150
        %v4458 = vpop.f32.mrf.mxu0
        %v4459 = vadd.f32 %v4436, %v4458
        %4460 = vdwg.mxu0
        %4461 = vmatpush.msra.mxu0 %v4251
        %4462 = vmatpush.msra.mxu0 %v4249
        %4463 = vmatpush.msra.mxu0 %v4247
        %4464 = vmatpush.msra.mxu0 %v4245
        %4465 = vmatpush.msra.mxu0 %v4243
        %4466 = vmatpush.msra.mxu0 %v4241
        %4467 = vmatpush.msra.mxu0 %v4239
        %4468 = vmatpush.msra.mxu0 %v4237
        %4469 = vmatpush.msra.mxu0 %v4235
        %4470 = vmatpush.msra.mxu0 %v4233
        %4471 = vmatpush.msra.mxu0 %v4231
        %4472 = vmatpush.msra.mxu0 %v4229
        %4473 = vmatpush.msra.mxu0 %v4227
        %4474 = vmatpush.msra.mxu0 %v4225
        %4475 = vmatpush.msra.mxu0 %v4223
        %4476 = vmatpush.msra.mxu0 %v4221
        %4477 = vmatmul.f32.gmra.mxu0 %v4143
        %v4478 = vpop.f32.mrf.mxu0
        %v4479 = vadd.f32 %v4456, %v4478
        %4480 = vmatmul.f32.gmra.mxu0 %v4151
        %v4481 = vpop.f32.mrf.mxu0
        %v4482 = vadd.f32 %v4459, %v4481
        %4483 = vdwg.mxu0
        %4484 = vmatpush.msra.mxu0 %v4283
        %4485 = vmatpush.msra.mxu0 %v4281
        %4486 = vmatpush.msra.mxu0 %v4279
        %4487 = vmatpush.msra.mxu0 %v4277
        %4488 = vmatpush.msra.mxu0 %v4275
        %4489 = vmatpush.msra.mxu0 %v4273
        %4490 = vmatpush.msra.mxu0 %v4271
        %4491 = vmatpush.msra.mxu0 %v4269
        %4492 = vmatpush.msra.mxu0 %v4267
        %4493 = vmatpush.msra.mxu0 %v4265
        %4494 = vmatpush.msra.mxu0 %v4263
        %4495 = vmatpush.msra.mxu0 %v4261
        %4496 = vmatpush.msra.mxu0 %v4259
        %4497 = vmatpush.msra.mxu0 %v4257
        %4498 = vmatpush.msra.mxu0 %v4255
        %4499 = vmatpush.msra.mxu0 %v4253
        %4500 = vmatmul.f32.gmra.mxu0 %v4144
        %v4501 = vpop.f32.mrf.mxu0
        %v4502 = vadd.f32 %v4479, %v4501
        %4503 = vmatmul.f32.gmra.mxu0 %v4152
        %v4504 = vpop.f32.mrf.mxu0
        %v4505 = vadd.f32 %v4482, %v4504
        %4506 = vdwg.mxu0
        %4507 = vmatpush.msra.mxu0 %v4315
        %4508 = vmatpush.msra.mxu0 %v4313
        %4509 = vmatpush.msra.mxu0 %v4311
        %4510 = vmatpush.msra.mxu0 %v4309
        %4511 = vmatpush.msra.mxu0 %v4307
        %4512 = vmatpush.msra.mxu0 %v4305
        %4513 = vmatpush.msra.mxu0 %v4303
        %4514 = vmatpush.msra.mxu0 %v4301
        %4515 = vmatpush.msra.mxu0 %v4299
        %4516 = vmatpush.msra.mxu0 %v4297
        %4517 = vmatpush.msra.mxu0 %v4295
        %4518 = vmatpush.msra.mxu0 %v4293
        %4519 = vmatpush.msra.mxu0 %v4291
        %4520 = vmatpush.msra.mxu0 %v4289
        %4521 = vmatpush.msra.mxu0 %v4287
        %4522 = vmatpush.msra.mxu0 %v4285
        %4523 = vmatmul.f32.gmra.mxu0 %v4145
        %v4524 = vpop.f32.mrf.mxu0
        %v4525 = vadd.f32 %v4502, %v4524
        %4526 = vmatmul.f32.gmra.mxu0 %v4153
        %v4527 = vpop.f32.mrf.mxu0
        %v4528 = vadd.f32 %v4505, %v4527
        %4529 = vdwg.mxu0
        %4530 = vmatpush.msra.mxu0 %v4347
        %4531 = vmatpush.msra.mxu0 %v4345
        %4532 = vmatpush.msra.mxu0 %v4343
        %4533 = vmatpush.msra.mxu0 %v4341
        %4534 = vmatpush.msra.mxu0 %v4339
        %4535 = vmatpush.msra.mxu0 %v4337
        %4536 = vmatpush.msra.mxu0 %v4335
        %4537 = vmatpush.msra.mxu0 %v4333
        %4538 = vmatpush.msra.mxu0 %v4331
        %4539 = vmatpush.msra.mxu0 %v4329
        %4540 = vmatpush.msra.mxu0 %v4327
        %4541 = vmatpush.msra.mxu0 %v4325
        %4542 = vmatpush.msra.mxu0 %v4323
        %4543 = vmatpush.msra.mxu0 %v4321
        %4544 = vmatpush.msra.mxu0 %v4319
        %4545 = vmatpush.msra.mxu0 %v4317
        %4546 = vmatmul.f32.gmra.mxu0 %v4146
        %v4547 = vpop.f32.mrf.mxu0
        %v4548 = vadd.f32 %v4525, %v4547
        %4549 = vmatmul.f32.gmra.mxu0 %v4154
        %v4550 = vpop.f32.mrf.mxu0
        %v4551 = vadd.f32 %v4528, %v4550
        %4552 = vdwg.mxu0
        %4553 = vmatpush.msra.mxu0 %v4379
        %4554 = vmatpush.msra.mxu0 %v4377
        %4555 = vmatpush.msra.mxu0 %v4375
        %4556 = vmatpush.msra.mxu0 %v4373
        %4557 = vmatpush.msra.mxu0 %v4371
        %4558 = vmatpush.msra.mxu0 %v4369
        %4559 = vmatpush.msra.mxu0 %v4367
        %4560 = vmatpush.msra.mxu0 %v4365
        %4561 = vmatpush.msra.mxu0 %v4363
        %4562 = vmatpush.msra.mxu0 %v4361
        %4563 = vmatpush.msra.mxu0 %v4359
        %4564 = vmatpush.msra.mxu0 %v4357
        %4565 = vmatpush.msra.mxu0 %v4355
        %4566 = vmatpush.msra.mxu0 %v4353
        %4567 = vmatpush.msra.mxu0 %v4351
        %4568 = vmatpush.msra.mxu0 %v4349
        %4569 = vmatmul.f32.gmra.mxu0 %v4147
        %v4570 = vpop.f32.mrf.mxu0
        %v4571 = vadd.f32 %v4548, %v4570
        %4572 = vmatmul.f32.gmra.mxu0 %v4155
        %v4573 = vpop.f32.mrf.mxu0
        %v4574 = vadd.f32 %v4551, %v4573
        %4575 = vdwg.mxu0
        %4576 = vmatpush.msra.mxu0 %v4411
        %4577 = vmatpush.msra.mxu0 %v4409
        %4578 = vmatpush.msra.mxu0 %v4407
        %4579 = vmatpush.msra.mxu0 %v4405
        %4580 = vmatpush.msra.mxu0 %v4403
        %4581 = vmatpush.msra.mxu0 %v4401
        %4582 = vmatpush.msra.mxu0 %v4399
        %4583 = vmatpush.msra.mxu0 %v4397
        %4584 = vmatpush.msra.mxu0 %v4395
        %4585 = vmatpush.msra.mxu0 %v4393
        %4586 = vmatpush.msra.mxu0 %v4391
        %4587 = vmatpush.msra.mxu0 %v4389
        %4588 = vmatpush.msra.mxu0 %v4387
        %4589 = vmatpush.msra.mxu0 %v4385
        %4590 = vmatpush.msra.mxu0 %v4383
        %4591 = vmatpush.msra.mxu0 %v4381
        %4592 = vmatmul.f32.gmra.mxu0 %v4148
        %v4593 = vpop.f32.mrf.mxu0
        %v4594 = vadd.f32 %v4571, %v4593
        %4595 = vmatmul.f32.gmra.mxu0 %v4156
        %v4596 = vpop.f32.mrf.mxu0
        %v4597 = vadd.f32 %v4574, %v4596
        %4598 = vdwg.mxu0
        %4599 = vmatpush.msra.mxu0 %v4188
        %4600 = vmatpush.msra.mxu0 %v4186
        %4601 = vmatpush.msra.mxu0 %v4184
        %4602 = vmatpush.msra.mxu0 %v4182
        %4603 = vmatpush.msra.mxu0 %v4180
        %4604 = vmatpush.msra.mxu0 %v4178
        %4605 = vmatpush.msra.mxu0 %v4176
        %4606 = vmatpush.msra.mxu0 %v4174
        %4607 = vmatpush.msra.mxu0 %v4172
        %4608 = vmatpush.msra.mxu0 %v4170
        %4609 = vmatpush.msra.mxu0 %v4168
        %4610 = vmatpush.msra.mxu0 %v4166
        %4611 = vmatpush.msra.mxu0 %v4164
        %4612 = vmatpush.msra.mxu0 %v4162
        %4613 = vmatpush.msra.mxu0 %v4160
        %4614 = vmatpush.msra.mxu0 %v4158
        %4615 = vmatmul.f32.gmra.mxu0 %v4141
        %v4616 = vpop.f32.mrf.mxu0
        %v4617 = vadd.f32 %v4414, %v4616
        %4618 = vmatmul.f32.gmra.mxu0 %v4149
        %v4619 = vpop.f32.mrf.mxu0
        %v4620 = vadd.f32 %v4414, %v4619
        %4621 = vdwg.mxu0
        %4622 = vmatpush.msra.mxu0 %v4220
        %4623 = vmatpush.msra.mxu0 %v4218
        %4624 = vmatpush.msra.mxu0 %v4216
        %4625 = vmatpush.msra.mxu0 %v4214
        %4626 = vmatpush.msra.mxu0 %v4212
        %4627 = vmatpush.msra.mxu0 %v4210
        %4628 = vmatpush.msra.mxu0 %v4208
        %4629 = vmatpush.msra.mxu0 %v4206
        %4630 = vmatpush.msra.mxu0 %v4204
        %4631 = vmatpush.msra.mxu0 %v4202
        %4632 = vmatpush.msra.mxu0 %v4200
        %4633 = vmatpush.msra.mxu0 %v4198
        %4634 = vmatpush.msra.mxu0 %v4196
        %4635 = vmatpush.msra.mxu0 %v4194
        %4636 = vmatpush.msra.mxu0 %v4192
        %4637 = vmatpush.msra.mxu0 %v4190
        %4638 = vmatmul.f32.gmra.mxu0 %v4142
        %v4639 = vpop.f32.mrf.mxu0
        %v4640 = vadd.f32 %v4617, %v4639
        %4641 = vmatmul.f32.gmra.mxu0 %v4150
        %v4642 = vpop.f32.mrf.mxu0
        %v4643 = vadd.f32 %v4620, %v4642
        %4644 = vdwg.mxu0
        %4645 = vmatpush.msra.mxu0 %v4252
        %4646 = vmatpush.msra.mxu0 %v4250
        %4647 = vmatpush.msra.mxu0 %v4248
        %4648 = vmatpush.msra.mxu0 %v4246
        %4649 = vmatpush.msra.mxu0 %v4244
        %4650 = vmatpush.msra.mxu0 %v4242
        %4651 = vmatpush.msra.mxu0 %v4240
        %4652 = vmatpush.msra.mxu0 %v4238
        %4653 = vmatpush.msra.mxu0 %v4236
        %4654 = vmatpush.msra.mxu0 %v4234
        %4655 = vmatpush.msra.mxu0 %v4232
        %4656 = vmatpush.msra.mxu0 %v4230
        %4657 = vmatpush.msra.mxu0 %v4228
        %4658 = vmatpush.msra.mxu0 %v4226
        %4659 = vmatpush.msra.mxu0 %v4224
        %4660 = vmatpush.msra.mxu0 %v4222
        %4661 = vmatmul.f32.gmra.mxu0 %v4143
        %v4662 = vpop.f32.mrf.mxu0
        %v4663 = vadd.f32 %v4640, %v4662
        %4664 = vmatmul.f32.gmra.mxu0 %v4151
        %v4665 = vpop.f32.mrf.mxu0
        %v4666 = vadd.f32 %v4643, %v4665
        %4667 = vdwg.mxu0
        %4668 = vmatpush.msra.mxu0 %v4284
        %4669 = vmatpush.msra.mxu0 %v4282
        %4670 = vmatpush.msra.mxu0 %v4280
        %4671 = vmatpush.msra.mxu0 %v4278
        %4672 = vmatpush.msra.mxu0 %v4276
        %4673 = vmatpush.msra.mxu0 %v4274
        %4674 = vmatpush.msra.mxu0 %v4272
        %4675 = vmatpush.msra.mxu0 %v4270
        %4676 = vmatpush.msra.mxu0 %v4268
        %4677 = vmatpush.msra.mxu0 %v4266
        %4678 = vmatpush.msra.mxu0 %v4264
        %4679 = vmatpush.msra.mxu0 %v4262
        %4680 = vmatpush.msra.mxu0 %v4260
        %4681 = vmatpush.msra.mxu0 %v4258
        %4682 = vmatpush.msra.mxu0 %v4256
        %4683 = vmatpush.msra.mxu0 %v4254
        %4684 = vmatmul.f32.gmra.mxu0 %v4144
        %v4685 = vpop.f32.mrf.mxu0
        %v4686 = vadd.f32 %v4663, %v4685
        %4687 = vmatmul.f32.gmra.mxu0 %v4152
        %v4688 = vpop.f32.mrf.mxu0
        %v4689 = vadd.f32 %v4666, %v4688
        %4690 = vdwg.mxu0
        %4691 = vmatpush.msra.mxu0 %v4316
        %4692 = vmatpush.msra.mxu0 %v4314
        %4693 = vmatpush.msra.mxu0 %v4312
        %4694 = vmatpush.msra.mxu0 %v4310
        %4695 = vmatpush.msra.mxu0 %v4308
        %4696 = vmatpush.msra.mxu0 %v4306
        %4697 = vmatpush.msra.mxu0 %v4304
        %4698 = vmatpush.msra.mxu0 %v4302
        %4699 = vmatpush.msra.mxu0 %v4300
        %4700 = vmatpush.msra.mxu0 %v4298
        %4701 = vmatpush.msra.mxu0 %v4296
        %4702 = vmatpush.msra.mxu0 %v4294
        %4703 = vmatpush.msra.mxu0 %v4292
        %4704 = vmatpush.msra.mxu0 %v4290
        %4705 = vmatpush.msra.mxu0 %v4288
        %4706 = vmatpush.msra.mxu0 %v4286
        %4707 = vmatmul.f32.gmra.mxu0 %v4145
        %v4708 = vpop.f32.mrf.mxu0
        %v4709 = vadd.f32 %v4686, %v4708
        %4710 = vmatmul.f32.gmra.mxu0 %v4153
        %v4711 = vpop.f32.mrf.mxu0
        %v4712 = vadd.f32 %v4689, %v4711
        %4713 = vdwg.mxu0
        %4714 = vmatpush.msra.mxu0 %v4348
        %4715 = vmatpush.msra.mxu0 %v4346
        %4716 = vmatpush.msra.mxu0 %v4344
        %4717 = vmatpush.msra.mxu0 %v4342
        %4718 = vmatpush.msra.mxu0 %v4340
        %4719 = vmatpush.msra.mxu0 %v4338
        %4720 = vmatpush.msra.mxu0 %v4336
        %4721 = vmatpush.msra.mxu0 %v4334
        %4722 = vmatpush.msra.mxu0 %v4332
        %4723 = vmatpush.msra.mxu0 %v4330
        %4724 = vmatpush.msra.mxu0 %v4328
        %4725 = vmatpush.msra.mxu0 %v4326
        %4726 = vmatpush.msra.mxu0 %v4324
        %4727 = vmatpush.msra.mxu0 %v4322
        %4728 = vmatpush.msra.mxu0 %v4320
        %4729 = vmatpush.msra.mxu0 %v4318
        %4730 = vmatmul.f32.gmra.mxu0 %v4146
        %v4731 = vpop.f32.mrf.mxu0
        %v4732 = vadd.f32 %v4709, %v4731
        %4733 = vmatmul.f32.gmra.mxu0 %v4154
        %v4734 = vpop.f32.mrf.mxu0
        %v4735 = vadd.f32 %v4712, %v4734
        %4736 = vdwg.mxu0
        %4737 = vmatpush.msra.mxu0 %v4380
        %4738 = vmatpush.msra.mxu0 %v4378
        %4739 = vmatpush.msra.mxu0 %v4376
        %4740 = vmatpush.msra.mxu0 %v4374
        %4741 = vmatpush.msra.mxu0 %v4372
        %4742 = vmatpush.msra.mxu0 %v4370
        %4743 = vmatpush.msra.mxu0 %v4368
        %4744 = vmatpush.msra.mxu0 %v4366
        %4745 = vmatpush.msra.mxu0 %v4364
        %4746 = vmatpush.msra.mxu0 %v4362
        %4747 = vmatpush.msra.mxu0 %v4360
        %4748 = vmatpush.msra.mxu0 %v4358
        %4749 = vmatpush.msra.mxu0 %v4356
        %4750 = vmatpush.msra.mxu0 %v4354
        %4751 = vmatpush.msra.mxu0 %v4352
        %4752 = vmatpush.msra.mxu0 %v4350
        %4753 = vmatmul.f32.gmra.mxu0 %v4147
        %v4754 = vpop.f32.mrf.mxu0
        %v4755 = vadd.f32 %v4732, %v4754
        %4756 = vmatmul.f32.gmra.mxu0 %v4155
        %v4757 = vpop.f32.mrf.mxu0
        %v4758 = vadd.f32 %v4735, %v4757
        %4759 = vdwg.mxu0
        %4760 = vmatpush.msra.mxu0 %v4412
        %4761 = vmatpush.msra.mxu0 %v4410
        %4762 = vmatpush.msra.mxu0 %v4408
        %4763 = vmatpush.msra.mxu0 %v4406
        %4764 = vmatpush.msra.mxu0 %v4404
        %4765 = vmatpush.msra.mxu0 %v4402
        %4766 = vmatpush.msra.mxu0 %v4400
        %4767 = vmatpush.msra.mxu0 %v4398
        %4768 = vmatpush.msra.mxu0 %v4396
        %4769 = vmatpush.msra.mxu0 %v4394
        %4770 = vmatpush.msra.mxu0 %v4392
        %4771 = vmatpush.msra.mxu0 %v4390
        %4772 = vmatpush.msra.mxu0 %v4388
        %4773 = vmatpush.msra.mxu0 %v4386
        %4774 = vmatpush.msra.mxu0 %v4384
        %4775 = vmatpush.msra.mxu0 %v4382
        %4776 = vmatmul.f32.gmra.mxu0 %v4148
        %v4777 = vpop.f32.mrf.mxu0
        %v4778 = vadd.f32 %v4755, %v4777
        %4779 = vmatmul.f32.gmra.mxu0 %v4156
        %v4780 = vpop.f32.mrf.mxu0
        %v4781 = vadd.f32 %v4758, %v4780
        %4782 = vdwg.mxu0
        %v4783 = vadd.f32 %v2786, %v4594
        %v4784 = vadd.f32 %v2787, %v4778
        %v4785 = vadd.f32 %v2788, %v4597
        %v4786 = vadd.f32 %v2789, %v4781
        %v4787 = vsel %vm572, %v4784, 0.0
        %v4788 = vadd.f32 %v4783, %v4787
        %4789 = vadd.xlane.f32.xlu0 %v4788
        %v4790 = vpop.xlane.xlu0 %4789
        %v4791 = vsel %vm572, %v4786, 0.0
        %v4792 = vadd.f32 %v4785, %v4791
        %4793 = vadd.xlane.f32.xlu0 %v4792
        %v4794 = vpop.xlane.xlu0 %4793
        %v4795 = vmul.f32 %v4790, %v2731
        %v4796 = vmul.f32 %v4794, %v2731
        %v4797 = vsub.f32 %v4783, %v4795
        %v4798 = vsub.f32 %v4784, %v4795
        %v4799 = vsub.f32 %v4785, %v4796
        %v4800 = vsub.f32 %v4786, %v4796
        %v4801 = vmul.f32 %v4797, %v4797
        %v4802 = vmul.f32 %v4798, %v4798
        %v4803 = vmul.f32 %v4799, %v4799
        %v4804 = vmul.f32 %v4800, %v4800
        %v4805 = vsel %vm572, %v4802, 0.0
        %v4806 = vadd.f32 %v4801, %v4805
        %4807 = vadd.xlane.f32.xlu0 %v4806
        %v4808 = vpop.xlane.xlu0 %4807
        %v4809 = vsel %vm572, %v4804, 0.0
        %v4810 = vadd.f32 %v4803, %v4809
        %4811 = vadd.xlane.f32.xlu0 %v4810
        %v4812 = vpop.xlane.xlu0 %4811
        %v4813 = vmul.f32 %v4808, %v2731
        %v4814 = vmul.f32 %v4812, %v2731
        %v4815 = vadd.f32 %v4813, 1e-05
        %v4816 = vadd.f32 %v4814, 1e-05
        %v4817 = vrsqrt.pop %v4815
        %v4818 = vmul.f32 %v4817, %v4815
        %v4819 = vmul.f32 %v4818, %v4817
        %v4820 = vmul.f32 0.5, %v4819
        %v4821 = vsub.f32 1.5, %v4820
        %v4822 = vmul.f32 %v4817, %v4821
        %vm4823 = vweird.f32 %v4815
        %vm4824 = vweird.f32 %v4817
        %vm4825 = vmor %vm4823, %vm4824
        %v4826 = vsel %vm4825, %v4817, %v4822
        %v4827 = vrsqrt.pop %v4816
        %v4828 = vmul.f32 %v4827, %v4816
        %v4829 = vmul.f32 %v4828, %v4827
        %v4830 = vmul.f32 0.5, %v4829
        %v4831 = vsub.f32 1.5, %v4830
        %v4832 = vmul.f32 %v4827, %v4831
        %vm4833 = vweird.f32 %v4816
        %vm4834 = vweird.f32 %v4827
        %vm4835 = vmor %vm4833, %vm4834
        %v4836 = vsel %vm4835, %v4827, %v4832
        %v4837 = vmul.f32 %v4797, %v4826
        %v4838 = vmul.f32 %v4798, %v4826
        %v4839 = vmul.f32 %v4799, %v4836
        %v4840 = vmul.f32 %v4800, %v4836
        %v4841 = vperm.slane %v527, 7
        %v4842 = vperm.slane %v528, 7
        %v4843 = vmul.f32 %v4837, %v4841
        %v4844 = vmul.f32 %v4838, %v4842
        %v4845 = vmul.f32 %v4839, %v4841
        %v4846 = vmul.f32 %v4840, %v4842
        %v4847 = vperm.slane %v529, 0
        %v4848 = vperm.slane %v530, 0
        %v4849 = vadd.f32 %v4843, %v4847
        %v4850 = vadd.f32 %v4844, %v4848
        %v4851 = vadd.f32 %v4845, %v4847
        %v4852 = vadd.f32 %v4846, %v4848
        %4853 = vst [vmem:[#allocation2] sm:$0xff] %v4849
        %4854 = vst.msk [vmem:[#allocation2 + $0x8] sm:$0xff] %vm572, %v4850
        %4855 = vst [vmem:[#allocation2 + $0x10] sm:$0xff] %v4851
        %4856 = vst.msk [vmem:[#allocation2 + $0x18] sm:$0xff] %vm572, %v4852
        // Predicated region
        $region69: #{tpu_custom_call.1} parent=63 // pred_check
          %p4857 = pneg %p307
        $region70: #{tpu_custom_call.1} parent=63 // pred_check_branch
          %4859 = sbr.rel (%p4857) target = $region72
        $region71: #{tpu_custom_call.1} parent=63 // pred_region
          %4861 = vsyncadd [#allocation3], 0
          %s4862 = sshll.u32 [#allocation2], 4
          %s4863 = int_to_ptr.vmem [resolvable:$true] %s4862
          %s4864 = sshll.u32 %s11, 4
          %s4865 = int_to_ptr.hbm [resolvable:$true] %s4864
          %4870 = dma.vmem_to_hbm [thread:$0]  %s4863, 512, %s4865, [#allocation3], 256, 256, 16
        $region72: #{tpu_custom_call.1} parent=63 // pred_fallthru
          _
        // Predicated region
        $region73: #{tpu_custom_call.1} parent=63 // pred_check
          %p4871 = pneg %p307
        $region74: #{tpu_custom_call.1} parent=63 // pred_check_branch
          %4873 = sbr.rel (%p4871) target = $region76
        $region75: #{tpu_custom_call.1} parent=63 // pred_region
          %4875 = dma.done [#allocation3], 512
        $region76: #{tpu_custom_call.1} parent=63 // pred_fallthru
          _
      $region64: #{tpu_custom_call.1} parent=5 // pred_fallthru
        _
      %p4876 = scmp.le.s32.totalorder 2, %s18
      // Predicated region
      $region77: #{tpu_custom_call.1} parent=5 // pred_check
        %p4877 = pneg %p4876
      $region78: #{tpu_custom_call.1} parent=5 // pred_check_branch
        %4879 = sbr.rel (%p4877) target = $region80
      $region79: #{tpu_custom_call.1} parent=5 // pred_region
        %s4880 = ssub.s32 %s18, 2
      $region80: #{tpu_custom_call.1} parent=5 // pred_fallthru
        _
    $region6: #{tpu_custom_call.1} parent=1 // loop_footer
      %s22 = sadd.s32 1, %s18
    $region7: #{tpu_custom_call.1} parent=1 // loop_footer_branch
      %17 = sbr.rel target = $region3
    $region8: #{tpu_custom_call.1} parent=1 // loop_exit
      _
    %4881 = vsyncpa [#allocation3], 1
    %s4882 = scalar_lea.sflag [#allocation3], 1
    %4883 = vsyncpa %s4882, 1

</llo_original>
